<compile_context>
chip_gen: v5e
topology: v5e:2x2
jax: 0.10.0
libtpu: 0.0.40
codegen_flags: <defaults>
</compile_context>

<pallas_src>
import functools
import math

import jax
import jax.numpy as jnp
from jax.experimental import pallas as pl
from jax.experimental.pallas import tpu as pltpu


# ----------------------------------------------------------------------------
# Rotary cos/sin buffers, exactly as in the PyTorch __init__
# ----------------------------------------------------------------------------
def make_axial_pos(h, w, dtype=jnp.float32):
    h_pos = jnp.linspace(-1.0, 1.0, h + 1, dtype=dtype)
    w_pos = jnp.linspace(-1.0, 1.0, w + 1, dtype=dtype)
    h_pos = (h_pos[:-1] + h_pos[1:]) / 2
    w_pos = (w_pos[:-1] + w_pos[1:]) / 2
    hh, ww = jnp.meshgrid(h_pos, w_pos, indexing="ij")
    return jnp.stack([hh, ww], axis=-1).reshape(h * w, 2)


def make_rotary_buffers(head_dim):
    log_min = math.log(math.pi)
    log_max = math.log(10 * math.pi)
    freqs = jnp.exp(jnp.linspace(log_min, log_max, head_dim // 8 + 1)[:-1])
    pos = make_axial_pos(32, 32)
    pos = jnp.concatenate([jnp.zeros((1, 2), jnp.float32), pos], axis=0)  # (1025, 2)
    theta_h = pos[:, 0:1] * freqs
    theta_w = pos[:, 1:2] * freqs
    theta = jnp.concatenate([theta_h, theta_w], axis=-1)  # (1025, head_dim // 4)
    return jnp.cos(theta), jnp.sin(theta)


# ----------------------------------------------------------------------------
# Kernel 1: LayerNorm + fused q/q_partner/k/k_partner/v projection + rotary,
# writing q/k/v directly in head-major (B, H, S, head_dim) layout.
# grid = (B, seq_tiles)
# ----------------------------------------------------------------------------
def _ln_qkv_rope_kernel(x_ref, gamma_ref, beta_ref, w_ref, cos_ref, sin_ref,
                        q_ref, k_ref, v_ref, *, n_heads, head_dim):
    x = x_ref[0]                                    # (ts, D) float32
    d_model = x.shape[-1]

    # LayerNorm (biased variance, eps=1e-5, affine) in fp32.
    mean = jnp.mean(x, axis=-1, keepdims=True)
    var = jnp.mean(jnp.square(x - mean), axis=-1, keepdims=True)
    h = (x - mean) * jax.lax.rsqrt(var + 1e-5) * gamma_ref[...] + beta_ref[...]
    hb = h.astype(jnp.bfloat16)                     # bf16 MXU operand

    # One fused GEMM: [q*scale | q_partner*scale | k | k_partner | v].
    # Rotate-half partners are produced by the permuted weight columns, so no
    # pltpu.roll / lane rotation is needed.  Slices below are at multiples of
    # d_model (>= 128 lanes for realistic D) -> lane-dense.
    big = jnp.dot(hb, w_ref[...], preferred_element_type=jnp.float32)  # (ts, 5D)

    cos = cos_ref[...].astype(jnp.float32)          # (ts, D), pass lanes cos=1
    sin = sin_ref[...].astype(jnp.float32)          # (ts, D), sign folded in, pass lanes 0

    q = (big[:, 0 * d_model:1 * d_model] * cos
         + big[:, 1 * d_model:2 * d_model] * sin).astype(jnp.bfloat16)
    k = (big[:, 2 * d_model:3 * d_model] * cos
         + big[:, 3 * d_model:4 * d_model] * sin).astype(jnp.bfloat16)
    v = big[:, 4 * d_model:5 * d_model].astype(jnp.bfloat16)

    # Head-major stores: static (compile-time) lane slices, once per seq tile.
    # This is the in-VMEM relayout that replaces the old wrapper-side XLA
    # transpose (no extra HBM round trip).
    for hh in range(n_heads):
        sl = slice(hh * head_dim, (hh + 1) * head_dim)
        q_ref[0, hh] = q[:, sl]
        k_ref[0, hh] = k[:, sl]
        v_ref[0, hh] = v[:, sl]


# ----------------------------------------------------------------------------
# Kernel 2: causal flash attention (online softmax) + folded out-projection
# grid = (B, q_tiles, heads, kv_tiles); heads/kv are reduction ("arbitrary")
# ----------------------------------------------------------------------------
def _flash_attn_outproj_kernel(q_ref, k_ref, v_ref, wo_ref, o_ref,
                               m_sc, l_sc, acc_sc, out_sc):
    qi = pl.program_id(1)
    h = pl.program_id(2)
    ki = pl.program_id(3)
    last_h = pl.num_programs(2) - 1
    last_k = pl.num_programs(3) - 1
    tq = q_ref.shape[2]
    tk = k_ref.shape[2]

    @pl.when(jnp.logical_and(h == 0, ki == 0))
    def _init_out():
        out_sc[...] = jnp.zeros_like(out_sc)

    @pl.when(ki == 0)
    def _init_head():
        m_sc[...] = jnp.full_like(m_sc, -jnp.inf)
        l_sc[...] = jnp.zeros_like(l_sc)
        acc_sc[...] = jnp.zeros_like(acc_sc)

    @pl.when(ki <= qi)  # causal: kv tiles strictly above the diagonal are skipped
    def _online_softmax_step():
        q = q_ref[0, 0]                             # (tq, hd) bf16, pre-scaled
        k = k_ref[0, 0]                             # (tk, hd) bf16
        s = jax.lax.dot_general(q, k, (((1,), (1,)), ((), ())),
                                preferred_element_type=jnp.float32)

        # Mask work only on the diagonal tile (scalar-gated); off-diagonal
        # tiles (ki < qi) are fully unmasked.  Requires tq == tk.
        def _mask_diag(sv):
            rr = jax.lax.broadcasted_iota(jnp.int32, (tq, tk), 0)
            cc = jax.lax.broadcasted_iota(jnp.int32, (tq, tk), 1)
            # -1e30 (not -inf) keeps the approx reciprocal of l safe; causality
            # guarantees at least one valid column per row here.
            return jnp.where(rr >= cc, sv, -1e30)

        s = jax.lax.cond(ki == qi, _mask_diag, lambda sv: sv, s)

        m_prev = m_sc[...]
        m_new = jnp.maximum(m_prev, jnp.max(s, axis=-1, keepdims=True))
        alpha = jnp.exp(m_prev - m_new)
        p = jnp.exp(s - m_new)
        l_sc[...] = alpha * l_sc[...] + jnp.sum(p, axis=-1, keepdims=True)
        acc_sc[...] = alpha * acc_sc[...] + jnp.dot(
            p.astype(jnp.bfloat16), v_ref[0, 0],
            preferred_element_type=jnp.float32)
        m_sc[...] = m_new

    @pl.when(ki == last_k)
    def _fold_head_into_output():
        # out_proj(concat_h o_h) == sum_h o_h @ W_out[h*hd:(h+1)*hd, :]
        # NOTE: these are shallow-K (K=head_dim) matmuls; a single deep K=D
        # matmul would need a (tq, D) concat scratch written at dynamic lane
        # offsets h*head_dim, which does not lower cleanly on TPU.
        o_h = (acc_sc[...] * pl.reciprocal(l_sc[...], approx=True)
               ).astype(jnp.bfloat16)
        out_sc[...] += jnp.dot(o_h, wo_ref[h], preferred_element_type=jnp.float32)

    @pl.when(jnp.logical_and(h == last_h, ki == last_k))
    def _store_output():
        o_ref[0] = out_sc[...]


# ----------------------------------------------------------------------------
# Wrapper-side layout plumbing (pure trace-time precompute)
# ----------------------------------------------------------------------------
def _make_partner_weight(w, n_heads, head_dim):
    """Columns of `w` permuted so that (ln_x @ w_partner)[:, j] is the
    rotate-half partner of (ln_x @ w)[:, j].  Per head the column regions are
    [x1 | x2 | pass_a | pass_b]; partners are [x2 | x1 | 0 | 0]."""
    d_in = w.shape[0]
    rd2 = head_dim // 4
    w4 = w.reshape(d_in, n_heads, 4, rd2)
    x1, x2 = w4[:, :, 0], w4[:, :, 1]
    zeros = jnp.zeros_like(x1)
    wp = jnp.stack([x2, x1, zeros, zeros], axis=2)
    return wp.reshape(d_in, n_heads * head_dim)


def _make_rope_maps(cos_t, sin_t, n_heads, head_dim):
    """(S, head_dim//4) cos/sin -> lane-dense (S, D) bf16 maps in the original
    head-interleaved column order.  Rotate-half sign folded into sin; the
    pass-through half of each head gets cos=1 / sin=0."""
    s_len, rd2 = cos_t.shape
    pass_w = head_dim - 2 * rd2
    ones = jnp.ones((s_len, pass_w), cos_t.dtype)
    zeros = jnp.zeros((s_len, pass_w), sin_t.dtype)
    cos_head = jnp.concatenate([cos_t, cos_t, ones], axis=-1)    # (S, hd)
    sin_head = jnp.concatenate([-sin_t, sin_t, zeros], axis=-1)  # (S, hd)
    cos_map = jnp.tile(cos_head, (1, n_heads))                   # (S, D)
    sin_map = jnp.tile(sin_head, (1, n_heads))
    return cos_map.astype(jnp.bfloat16), sin_map.astype(jnp.bfloat16)


def self_attention_forward(x, gamma, beta, wqkv, wout, cos_buf, sin_buf, *,
                           head_dim):
    B, S, D = x.shape
    H = D // head_dim
    hd = head_dim
    assert D == H * hd and hd % 8 == 0
    assert S <= cos_buf.shape[0]

    ts = min(S, 512)          # seq tile for the LN/projection kernel
    tq = tk = min(S, 128)     # q / kv tiles (tq must equal tk for diag masking)
    # TODO(synk): production S is 1025 (32*32 + class token); pad to a tile
    # multiple + mask the ragged rows instead of asserting divisibility.
    assert S % ts == 0 and S % tq == 0

    scale = 1.0 / math.sqrt(hd)

    # ---- weight prep: fuse [q*scale | q_partner*scale | k | k_partner | v] ----
    # TODO(synk): for very large D (v7x: 64 MiB VMEM), K-tile this (D, 5D)
    # weight with an extra "arbitrary" grid axis instead of loading it whole.
    wq, wk, wv = wqkv[:, :D], wqkv[:, D:2 * D], wqkv[:, 2 * D:]
    w_fused = jnp.concatenate(
        [wq * scale, _make_partner_weight(wq, H, hd) * scale,
         wk, _make_partner_weight(wk, H, hd), wv], axis=1).astype(jnp.bfloat16)
    wo_h = wout.reshape(H, hd, D).astype(jnp.bfloat16)   # per-head out-proj
    cos_map, sin_map = _make_rope_maps(cos_buf[:S], sin_buf[:S], H, hd)

    # ---- kernel 1: LayerNorm + fused projection + rotary, head-major out ----
    n_s = S // ts
    qkv_shape = jax.ShapeDtypeStruct((B, H, S, hd), jnp.bfloat16)
    hm_out_spec = pl.BlockSpec((1, H, ts, hd), lambda b, s: (b, 0, s, 0))

    q_hm, k_hm, v_hm = pl.pallas_call(
        functools.partial(_ln_qkv_rope_kernel, n_heads=H, head_dim=hd),
        grid=(B, n_s),
        in_specs=[
            pl.BlockSpec((1, ts, D), lambda b, s: (b, s, 0)),      # x
            pl.BlockSpec((1, D), lambda b, s: (0, 0)),             # gamma
            pl.BlockSpec((1, D), lambda b, s: (0, 0)),             # beta
            pl.BlockSpec((D, 5 * D), lambda b, s: (0, 0)),         # fused weight
            pl.BlockSpec((ts, D), lambda b, s: (s, 0)),            # cos map
            pl.BlockSpec((ts, D), lambda b, s: (s, 0)),            # sin map
        ],
        out_specs=[hm_out_spec, hm_out_spec, hm_out_spec],
        out_shape=[qkv_shape, qkv_shape, qkv_shape],
        compiler_params=pltpu.CompilerParams(
            dimension_semantics=("parallel", "parallel"),
            vmem_limit_bytes=32 * 1024 * 1024),
        cost_estimate=pl.CostEstimate(
            flops=2 * B * S * 5 * D * D,
            transcendentals=B * S,
            bytes_accessed=4 * B * S * D + 10 * D * D + 4 * S * D + 6 * B * S * D),
    )(x, gamma, beta, w_fused, cos_map, sin_map)

    # ---- kernel 2: causal flash attention + folded out-projection ----
    # K is kept as (B, H, S, hd) (NT contraction in the QK matmul); producing a
    # pre-transposed (B, H, hd, S) K would require an in-kernel transpose in
    # kernel 1 -- left as a follow-up.
    n_q, n_k = S // tq, S // tk
    out = pl.pallas_call(
        _flash_attn_outproj_kernel,
        grid=(B, n_q, H, n_k),
        in_specs=[
            pl.BlockSpec((1, 1, tq, hd), lambda b, qi, h, ki: (b, h, qi, 0)),
            # Clamp: causally skipped tiles repeat the block index -> no DMA.
            pl.BlockSpec((1, 1, tk, hd),
                         lambda b, qi, h, ki: (b, h, jnp.minimum(ki, qi), 0)),
            pl.BlockSpec((1, 1, tk, hd),
                         lambda b, qi, h, ki: (b, h, jnp.minimum(ki, qi), 0)),
            # out_proj weight resident in VMEM for the whole kernel (one DMA).
            pl.BlockSpec((H, hd, D), lambda b, qi, h, ki: (0, 0, 0)),
        ],
        out_specs=pl.BlockSpec((1, tq, D), lambda b, qi, h, ki: (b, qi, 0)),
        out_shape=jax.ShapeDtypeStruct((B, S, D), jnp.float32),
        scratch_shapes=[
            pltpu.VMEM((tq, 1), jnp.float32),         # running max m
            pltpu.VMEM((tq, 1), jnp.float32),         # running denom l
            pltpu.VMEM((tq, hd), jnp.float32),        # per-head accumulator
            pltpu.VMEM((tq, D), jnp.float32),         # out-projection accumulator
        ],
        compiler_params=pltpu.CompilerParams(
            # NOTE(v7x): for better megacore balance under causal skipping,
            # keep B (even) outermost; q-tile interleaving is a follow-up.
            dimension_semantics=("parallel", "parallel", "arbitrary", "arbitrary"),
            vmem_limit_bytes=32 * 1024 * 1024),
        cost_estimate=pl.CostEstimate(
            flops=2 * B * S * S * D + 2 * B * S * D * D,
            transcendentals=B * H * S * S // 2,
            bytes_accessed=2 * B * S * D * (n_q + 3) + 4 * B * S * D + 2 * D * D),
    )(q_hm, k_hm, v_hm, wo_h)
    return out


# ----------------------------------------------------------------------------
# Pure-JAX reference (mirrors the bf16-operand / fp32-accumulate dtype policy)
# ----------------------------------------------------------------------------
def self_attention_ref(x, gamma, beta, wqkv, wout, cos_buf, sin_buf, *, head_dim):
    B, S, D = x.shape
    H = D // head_dim
    rd2 = head_dim // 4
    mean = x.mean(-1, keepdims=True)
    var = ((x - mean) ** 2).mean(-1, keepdims=True)
    h = (x - mean) / jnp.sqrt(var + 1e-5) * gamma[0] + beta[0]
    hb = h.astype(jnp.bfloat16)
    qkv = jnp.dot(hb, wqkv.astype(jnp.bfloat16),
                  preferred_element_type=jnp.float32).reshape(B, S, 3, H, head_dim)
    cos = cos_buf[:S][None, :, None, :]
    sin = sin_buf[:S][None, :, None, :]

    def rot(t):
        t1, t2, rest = t[..., :rd2], t[..., rd2:2 * rd2], t[..., 2 * rd2:]
        return jnp.concatenate([t1 * cos - t2 * sin, t1 * sin + t2 * cos, rest],
                               axis=-1)

    q = rot(qkv[:, :, 0]).astype(jnp.bfloat16)
    k = rot(qkv[:, :, 1]).astype(jnp.bfloat16)
    v = qkv[:, :, 2].astype(jnp.bfloat16)
    s = jnp.einsum("bqhd,bkhd->bhqk", q, k,
                   preferred_element_type=jnp.float32) / math.sqrt(head_dim)
    mask = jnp.tril(jnp.ones((S, S), bool))
    s = jnp.where(mask[None, None], s, -jnp.inf)
    p = jax.nn.softmax(s, axis=-1)
    o = jnp.einsum("bhqk,bkhd->bqhd", p.astype(jnp.bfloat16), v,
                   preferred_element_type=jnp.float32)
    o = o.reshape(B, S, D).astype(jnp.bfloat16)
    return jnp.dot(o, wout.astype(jnp.bfloat16), preferred_element_type=jnp.float32)


# ----------------------------------------------------------------------------
if __name__ == "__main__":
    B, S, DIM, HEAD_DIM = 2, 64, 128, 32  # n_heads = 4

    key = jax.random.PRNGKey(0)
    kx, kqkv, ko = jax.random.split(key, 3)

    x = jax.random.normal(kx, (B, S, DIM), jnp.float32)

    # LayerNorm default init: weight=1, bias=0
    gamma = jnp.ones((1, DIM), jnp.float32)
    beta = jnp.zeros((1, DIM), jnp.float32)

    # qkv_proj: Linear(dim, 3*dim, bias=False); stored pre-transposed (in, out).
    wqkv = jax.random.normal(kqkv, (DIM, 3 * DIM), jnp.float32) / math.sqrt(DIM)
    # NOTE: the module zero-inits out_proj (zero_init); a deterministic random
    # init is used here so the numerical check is nontrivial.
    wout = jax.random.normal(ko, (DIM, DIM), jnp.float32) / math.sqrt(DIM)

    cos_buf, sin_buf = make_rotary_buffers(HEAD_DIM)  # (1025, head_dim // 4)

    fwd = jax.jit(functools.partial(self_attention_forward, head_dim=HEAD_DIM))
    out = jax.block_until_ready(fwd(x, gamma, beta, wqkv, wout, cos_buf, sin_buf))

    ref = self_attention_ref(x, gamma, beta, wqkv, wout, cos_buf, sin_buf,
                             head_dim=HEAD_DIM)
    err = float(jnp.max(jnp.abs(out - ref)))
    assert out.shape == (B, S, DIM)
    assert jnp.allclose(out, ref, atol=5e-2, rtol=5e-2), f"max abs err = {err}"
    print("KERNEL_OK")
</pallas_src>

<mosaic_0001>
module attributes {stable_mosaic.version = 11 : i64} {
  func.func @_ln_qkv_rope_kernel(%arg0: i32, %arg1: i32, %arg2: memref<1x64x128xf32, #tpu.memory_space<vmem>>, %arg3: memref<1x128xf32, #tpu.memory_space<vmem>>, %arg4: memref<1x128xf32, #tpu.memory_space<vmem>>, %arg5: memref<128x640xbf16, #tpu.memory_space<vmem>>, %arg6: memref<64x128xbf16, #tpu.memory_space<vmem>>, %arg7: memref<64x128xbf16, #tpu.memory_space<vmem>>, %arg8: memref<1x4x64x32xbf16, #tpu.memory_space<vmem>>, %arg9: memref<1x4x64x32xbf16, #tpu.memory_space<vmem>>, %arg10: memref<1x4x64x32xbf16, #tpu.memory_space<vmem>>) attributes {dimension_semantics = [#tpu.dimension_semantics<parallel>, #tpu.dimension_semantics<parallel>], iteration_bounds = array<i64: 2, 1>, scalar_prefetch = 0 : i64, scratch_operands = 0 : i64, tpu.core_type = #tpu.core_type<tc>, window_params = [{transform_indices = @transform_0, window_bounds = array<i64: 1, 64, 128>}, {pipeline_mode = #tpu.pipeline_mode<synchronous>, transform_indices = @transform_1, window_bounds = array<i64: 1, 128>}, {pipeline_mode = #tpu.pipeline_mode<synchronous>, transform_indices = @transform_2, window_bounds = array<i64: 1, 128>}, {pipeline_mode = #tpu.pipeline_mode<synchronous>, transform_indices = @transform_3, window_bounds = array<i64: 128, 640>}, {transform_indices = @transform_4, window_bounds = array<i64: 64, 128>}, {transform_indices = @transform_5, window_bounds = array<i64: 64, 128>}, {transform_indices = @transform_6, window_bounds = array<i64: 1, 4, 64, 32>}, {transform_indices = @transform_7, window_bounds = array<i64: 1, 4, 64, 32>}, {transform_indices = @transform_8, window_bounds = array<i64: 1, 4, 64, 32>}]} {
    %c0 = arith.constant 0 : index
    %c0_0 = arith.constant 0 : index
    %c0_1 = arith.constant 0 : index
    %0 = vector.load %arg2[%c0, %c0_0, %c0_1] : memref<1x64x128xf32, #tpu.memory_space<vmem>>, vector<1x64x128xf32>
    %1 = vector.shape_cast %0 : vector<1x64x128xf32> to vector<64x128xf32>
    %cst = arith.constant dense<0.000000e+00> : vector<64xf32>
    %2 = vector.multi_reduction <add>, %1, %cst [1] : vector<64x128xf32> to vector<64xf32>
    %3 = vector.shape_cast %2 : vector<64xf32> to vector<64x1xf32>
    %cst_2 = arith.constant 1.280000e+02 : f32
    %4 = vector.broadcast %cst_2 : f32 to vector<64x1xf32>
    %5 = arith.divf %3, %4 : vector<64x1xf32>
    %6 = vector.broadcast %5 : vector<64x1xf32> to vector<64x128xf32>
    %7 = arith.subf %1, %6 : vector<64x128xf32>
    %8 = arith.mulf %7, %7 : vector<64x128xf32>
    %cst_3 = arith.constant dense<0.000000e+00> : vector<64xf32>
    %9 = vector.multi_reduction <add>, %8, %cst_3 [1] : vector<64x128xf32> to vector<64xf32>
    %10 = vector.shape_cast %9 : vector<64xf32> to vector<64x1xf32>
    %cst_4 = arith.constant 1.280000e+02 : f32
    %11 = vector.broadcast %cst_4 : f32 to vector<64x1xf32>
    %12 = arith.divf %10, %11 : vector<64x1xf32>
    %13 = vector.broadcast %5 : vector<64x1xf32> to vector<64x128xf32>
    %14 = arith.subf %1, %13 : vector<64x128xf32>
    %cst_5 = arith.constant 9.99999974E-6 : f32
    %15 = vector.broadcast %cst_5 : f32 to vector<64x1xf32>
    %16 = arith.addf %12, %15 : vector<64x1xf32>
    %17 = math.rsqrt %16 : vector<64x1xf32>
    %18 = vector.broadcast %17 : vector<64x1xf32> to vector<64x128xf32>
    %19 = arith.mulf %14, %18 : vector<64x128xf32>
    %c0_6 = arith.constant 0 : index
    %c0_7 = arith.constant 0 : index
    %20 = vector.load %arg3[%c0_6, %c0_7] : memref<1x128xf32, #tpu.memory_space<vmem>>, vector<1x128xf32>
    %21 = vector.broadcast %20 : vector<1x128xf32> to vector<64x128xf32>
    %22 = arith.mulf %19, %21 : vector<64x128xf32>
    %c0_8 = arith.constant 0 : index
    %c0_9 = arith.constant 0 : index
    %23 = vector.load %arg4[%c0_8, %c0_9] : memref<1x128xf32, #tpu.memory_space<vmem>>, vector<1x128xf32>
    %24 = vector.broadcast %23 : vector<1x128xf32> to vector<64x128xf32>
    %25 = arith.addf %22, %24 : vector<64x128xf32>
    %26 = arith.truncf %25 : vector<64x128xf32> to vector<64x128xbf16>
    %c0_10 = arith.constant 0 : index
    %c0_11 = arith.constant 0 : index
    %27 = vector.load %arg5[%c0_10, %c0_11] : memref<128x640xbf16, #tpu.memory_space<vmem>>, vector<128x640xbf16>
    %cst_12 = arith.constant dense<0.000000e+00> : vector<64x640xf32>
    %28 = tpu.matmul %26, %27, %cst_12 {dimension_numbers = #tpu.dot_dimension_numbers<[1], [0], [0], [1], [0, 0, 1, 1], [], []>} : vector<64x128xbf16>, vector<128x640xbf16>, vector<64x640xf32> -> vector<64x640xf32>
    %c0_13 = arith.constant 0 : index
    %c0_14 = arith.constant 0 : index
    %29 = vector.load %arg6[%c0_13, %c0_14] : memref<64x128xbf16, #tpu.memory_space<vmem>>, vector<64x128xbf16>
    %30 = arith.extf %29 : vector<64x128xbf16> to vector<64x128xf32>
    %c0_15 = arith.constant 0 : index
    %c0_16 = arith.constant 0 : index
    %31 = vector.load %arg7[%c0_15, %c0_16] : memref<64x128xbf16, #tpu.memory_space<vmem>>, vector<64x128xbf16>
    %32 = arith.extf %31 : vector<64x128xbf16> to vector<64x128xf32>
    %33 = vector.extract_strided_slice %28 {offsets = [0, 0], sizes = [64, 128], strides = [1, 1]} : vector<64x640xf32> to vector<64x128xf32>
    %34 = arith.mulf %33, %30 : vector<64x128xf32>
    %35 = vector.extract_strided_slice %28 {offsets = [0, 128], sizes = [64, 128], strides = [1, 1]} : vector<64x640xf32> to vector<64x128xf32>
    %36 = arith.mulf %35, %32 : vector<64x128xf32>
    %37 = arith.addf %34, %36 : vector<64x128xf32>
    %38 = arith.truncf %37 : vector<64x128xf32> to vector<64x128xbf16>
    %39 = vector.extract_strided_slice %28 {offsets = [0, 256], sizes = [64, 128], strides = [1, 1]} : vector<64x640xf32> to vector<64x128xf32>
    %40 = arith.mulf %39, %30 : vector<64x128xf32>
    %41 = vector.extract_strided_slice %28 {offsets = [0, 384], sizes = [64, 128], strides = [1, 1]} : vector<64x640xf32> to vector<64x128xf32>
    %42 = arith.mulf %41, %32 : vector<64x128xf32>
    %43 = arith.addf %40, %42 : vector<64x128xf32>
    %44 = arith.truncf %43 : vector<64x128xf32> to vector<64x128xbf16>
    %45 = vector.extract_strided_slice %28 {offsets = [0, 512], sizes = [64, 128], strides = [1, 1]} : vector<64x640xf32> to vector<64x128xf32>
    %46 = arith.truncf %45 : vector<64x128xf32> to vector<64x128xbf16>
    %47 = vector.extract_strided_slice %38 {offsets = [0, 0], sizes = [64, 32], strides = [1, 1]} : vector<64x128xbf16> to vector<64x32xbf16>
    %c0_17 = arith.constant 0 : index
    %c0_18 = arith.constant 0 : index
    %c0_19 = arith.constant 0 : index
    %c0_20 = arith.constant 0 : index
    %48 = vector.load %arg8[%c0_17, %c0_18, %c0_19, %c0_20] : memref<1x4x64x32xbf16, #tpu.memory_space<vmem>>, vector<1x1x64x32xbf16>
    %49 = vector.shape_cast %48 : vector<1x1x64x32xbf16> to vector<64x32xbf16>
    %50 = vector.shape_cast %47 : vector<64x32xbf16> to vector<1x1x64x32xbf16>
    tpu.vector_store %arg8[%c0_17, %c0_18, %c0_19, %c0_20], %50 {strides = array<i32>} : memref<1x4x64x32xbf16, #tpu.memory_space<vmem>>, vector<1x1x64x32xbf16>,
    %51 = vector.extract_strided_slice %44 {offsets = [0, 0], sizes = [64, 32], strides = [1, 1]} : vector<64x128xbf16> to vector<64x32xbf16>
    %c0_21 = arith.constant 0 : index
    %c0_22 = arith.constant 0 : index
    %c0_23 = arith.constant 0 : index
    %c0_24 = arith.constant 0 : index
    %52 = vector.load %arg9[%c0_21, %c0_22, %c0_23, %c0_24] : memref<1x4x64x32xbf16, #tpu.memory_space<vmem>>, vector<1x1x64x32xbf16>
    %53 = vector.shape_cast %52 : vector<1x1x64x32xbf16> to vector<64x32xbf16>
    %54 = vector.shape_cast %51 : vector<64x32xbf16> to vector<1x1x64x32xbf16>
    tpu.vector_store %arg9[%c0_21, %c0_22, %c0_23, %c0_24], %54 {strides = array<i32>} : memref<1x4x64x32xbf16, #tpu.memory_space<vmem>>, vector<1x1x64x32xbf16>,
    %55 = vector.extract_strided_slice %46 {offsets = [0, 0], sizes = [64, 32], strides = [1, 1]} : vector<64x128xbf16> to vector<64x32xbf16>
    %c0_25 = arith.constant 0 : index
    %c0_26 = arith.constant 0 : index
    %c0_27 = arith.constant 0 : index
    %c0_28 = arith.constant 0 : index
    %56 = vector.load %arg10[%c0_25, %c0_26, %c0_27, %c0_28] : memref<1x4x64x32xbf16, #tpu.memory_space<vmem>>, vector<1x1x64x32xbf16>
    %57 = vector.shape_cast %56 : vector<1x1x64x32xbf16> to vector<64x32xbf16>
    %58 = vector.shape_cast %55 : vector<64x32xbf16> to vector<1x1x64x32xbf16>
    tpu.vector_store %arg10[%c0_25, %c0_26, %c0_27, %c0_28], %58 {strides = array<i32>} : memref<1x4x64x32xbf16, #tpu.memory_space<vmem>>, vector<1x1x64x32xbf16>,
    %59 = vector.extract_strided_slice %38 {offsets = [0, 32], sizes = [64, 32], strides = [1, 1]} : vector<64x128xbf16> to vector<64x32xbf16>
    %c0_29 = arith.constant 0 : index
    %c1 = arith.constant 1 : index
    %c0_30 = arith.constant 0 : index
    %c0_31 = arith.constant 0 : index
    %60 = vector.load %arg8[%c0_29, %c1, %c0_30, %c0_31] : memref<1x4x64x32xbf16, #tpu.memory_space<vmem>>, vector<1x1x64x32xbf16>
    %61 = vector.shape_cast %60 : vector<1x1x64x32xbf16> to vector<64x32xbf16>
    %62 = vector.shape_cast %59 : vector<64x32xbf16> to vector<1x1x64x32xbf16>
    tpu.vector_store %arg8[%c0_29, %c1, %c0_30, %c0_31], %62 {strides = array<i32>} : memref<1x4x64x32xbf16, #tpu.memory_space<vmem>>, vector<1x1x64x32xbf16>,
    %63 = vector.extract_strided_slice %44 {offsets = [0, 32], sizes = [64, 32], strides = [1, 1]} : vector<64x128xbf16> to vector<64x32xbf16>
    %c0_32 = arith.constant 0 : index
    %c1_33 = arith.constant 1 : index
    %c0_34 = arith.constant 0 : index
    %c0_35 = arith.constant 0 : index
    %64 = vector.load %arg9[%c0_32, %c1_33, %c0_34, %c0_35] : memref<1x4x64x32xbf16, #tpu.memory_space<vmem>>, vector<1x1x64x32xbf16>
    %65 = vector.shape_cast %64 : vector<1x1x64x32xbf16> to vector<64x32xbf16>
    %66 = vector.shape_cast %63 : vector<64x32xbf16> to vector<1x1x64x32xbf16>
    tpu.vector_store %arg9[%c0_32, %c1_33, %c0_34, %c0_35], %66 {strides = array<i32>} : memref<1x4x64x32xbf16, #tpu.memory_space<vmem>>, vector<1x1x64x32xbf16>,
    %67 = vector.extract_strided_slice %46 {offsets = [0, 32], sizes = [64, 32], strides = [1, 1]} : vector<64x128xbf16> to vector<64x32xbf16>
    %c0_36 = arith.constant 0 : index
    %c1_37 = arith.constant 1 : index
    %c0_38 = arith.constant 0 : index
    %c0_39 = arith.constant 0 : index
    %68 = vector.load %arg10[%c0_36, %c1_37, %c0_38, %c0_39] : memref<1x4x64x32xbf16, #tpu.memory_space<vmem>>, vector<1x1x64x32xbf16>
    %69 = vector.shape_cast %68 : vector<1x1x64x32xbf16> to vector<64x32xbf16>
    %70 = vector.shape_cast %67 : vector<64x32xbf16> to vector<1x1x64x32xbf16>
    tpu.vector_store %arg10[%c0_36, %c1_37, %c0_38, %c0_39], %70 {strides = array<i32>} : memref<1x4x64x32xbf16, #tpu.memory_space<vmem>>, vector<1x1x64x32xbf16>,
    %71 = vector.extract_strided_slice %38 {offsets = [0, 64], sizes = [64, 32], strides = [1, 1]} : vector<64x128xbf16> to vector<64x32xbf16>
    %c0_40 = arith.constant 0 : index
    %c2 = arith.constant 2 : index
    %c0_41 = arith.constant 0 : index
    %c0_42 = arith.constant 0 : index
    %72 = vector.load %arg8[%c0_40, %c2, %c0_41, %c0_42] : memref<1x4x64x32xbf16, #tpu.memory_space<vmem>>, vector<1x1x64x32xbf16>
    %73 = vector.shape_cast %72 : vector<1x1x64x32xbf16> to vector<64x32xbf16>
    %74 = vector.shape_cast %71 : vector<64x32xbf16> to vector<1x1x64x32xbf16>
    tpu.vector_store %arg8[%c0_40, %c2, %c0_41, %c0_42], %74 {strides = array<i32>} : memref<1x4x64x32xbf16, #tpu.memory_space<vmem>>, vector<1x1x64x32xbf16>,
    %75 = vector.extract_strided_slice %44 {offsets = [0, 64], sizes = [64, 32], strides = [1, 1]} : vector<64x128xbf16> to vector<64x32xbf16>
    %c0_43 = arith.constant 0 : index
    %c2_44 = arith.constant 2 : index
    %c0_45 = arith.constant 0 : index
    %c0_46 = arith.constant 0 : index
    %76 = vector.load %arg9[%c0_43, %c2_44, %c0_45, %c0_46] : memref<1x4x64x32xbf16, #tpu.memory_space<vmem>>, vector<1x1x64x32xbf16>
    %77 = vector.shape_cast %76 : vector<1x1x64x32xbf16> to vector<64x32xbf16>
    %78 = vector.shape_cast %75 : vector<64x32xbf16> to vector<1x1x64x32xbf16>
    tpu.vector_store %arg9[%c0_43, %c2_44, %c0_45, %c0_46], %78 {strides = array<i32>} : memref<1x4x64x32xbf16, #tpu.memory_space<vmem>>, vector<1x1x64x32xbf16>,
    %79 = vector.extract_strided_slice %46 {offsets = [0, 64], sizes = [64, 32], strides = [1, 1]} : vector<64x128xbf16> to vector<64x32xbf16>
    %c0_47 = arith.constant 0 : index
    %c2_48 = arith.constant 2 : index
    %c0_49 = arith.constant 0 : index
    %c0_50 = arith.constant 0 : index
    %80 = vector.load %arg10[%c0_47, %c2_48, %c0_49, %c0_50] : memref<1x4x64x32xbf16, #tpu.memory_space<vmem>>, vector<1x1x64x32xbf16>
    %81 = vector.shape_cast %80 : vector<1x1x64x32xbf16> to vector<64x32xbf16>
    %82 = vector.shape_cast %79 : vector<64x32xbf16> to vector<1x1x64x32xbf16>
    tpu.vector_store %arg10[%c0_47, %c2_48, %c0_49, %c0_50], %82 {strides = array<i32>} : memref<1x4x64x32xbf16, #tpu.memory_space<vmem>>, vector<1x1x64x32xbf16>,
    %83 = vector.extract_strided_slice %38 {offsets = [0, 96], sizes = [64, 32], strides = [1, 1]} : vector<64x128xbf16> to vector<64x32xbf16>
    %c0_51 = arith.constant 0 : index
    %c3 = arith.constant 3 : index
    %c0_52 = arith.constant 0 : index
    %c0_53 = arith.constant 0 : index
    %84 = vector.load %arg8[%c0_51, %c3, %c0_52, %c0_53] : memref<1x4x64x32xbf16, #tpu.memory_space<vmem>>, vector<1x1x64x32xbf16>
    %85 = vector.shape_cast %84 : vector<1x1x64x32xbf16> to vector<64x32xbf16>
    %86 = vector.shape_cast %83 : vector<64x32xbf16> to vector<1x1x64x32xbf16>
    tpu.vector_store %arg8[%c0_51, %c3, %c0_52, %c0_53], %86 {strides = array<i32>} : memref<1x4x64x32xbf16, #tpu.memory_space<vmem>>, vector<1x1x64x32xbf16>,
    %87 = vector.extract_strided_slice %44 {offsets = [0, 96], sizes = [64, 32], strides = [1, 1]} : vector<64x128xbf16> to vector<64x32xbf16>
    %c0_54 = arith.constant 0 : index
    %c3_55 = arith.constant 3 : index
    %c0_56 = arith.constant 0 : index
    %c0_57 = arith.constant 0 : index
    %88 = vector.load %arg9[%c0_54, %c3_55, %c0_56, %c0_57] : memref<1x4x64x32xbf16, #tpu.memory_space<vmem>>, vector<1x1x64x32xbf16>
    %89 = vector.shape_cast %88 : vector<1x1x64x32xbf16> to vector<64x32xbf16>
    %90 = vector.shape_cast %87 : vector<64x32xbf16> to vector<1x1x64x32xbf16>
    tpu.vector_store %arg9[%c0_54, %c3_55, %c0_56, %c0_57], %90 {strides = array<i32>} : memref<1x4x64x32xbf16, #tpu.memory_space<vmem>>, vector<1x1x64x32xbf16>,
    %91 = vector.extract_strided_slice %46 {offsets = [0, 96], sizes = [64, 32], strides = [1, 1]} : vector<64x128xbf16> to vector<64x32xbf16>
    %c0_58 = arith.constant 0 : index
    %c3_59 = arith.constant 3 : index
    %c0_60 = arith.constant 0 : index
    %c0_61 = arith.constant 0 : index
    %92 = vector.load %arg10[%c0_58, %c3_59, %c0_60, %c0_61] : memref<1x4x64x32xbf16, #tpu.memory_space<vmem>>, vector<1x1x64x32xbf16>
    %93 = vector.shape_cast %92 : vector<1x1x64x32xbf16> to vector<64x32xbf16>
    %94 = vector.shape_cast %91 : vector<64x32xbf16> to vector<1x1x64x32xbf16>
    tpu.vector_store %arg10[%c0_58, %c3_59, %c0_60, %c0_61], %94 {strides = array<i32>} : memref<1x4x64x32xbf16, #tpu.memory_space<vmem>>, vector<1x1x64x32xbf16>,
    return
  }
  func.func @transform_0(%arg0: i32, %arg1: i32) -> (i32, i32, i32) {
    %c0_i32 = arith.constant 0 : i32
    %c0_i32_0 = arith.constant 0 : i32
    return %arg0, %arg1, %c0_i32 : i32, i32, i32
  }
  func.func @transform_1(%arg0: i32, %arg1: i32) -> (i32, i32) {
    %c0_i32 = arith.constant 0 : i32
    %c0_i32_0 = arith.constant 0 : i32
    %c0_i32_1 = arith.constant 0 : i32
    return %c0_i32, %c0_i32_0 : i32, i32
  }
  func.func @transform_2(%arg0: i32, %arg1: i32) -> (i32, i32) {
    %c0_i32 = arith.constant 0 : i32
    %c0_i32_0 = arith.constant 0 : i32
    %c0_i32_1 = arith.constant 0 : i32
    return %c0_i32, %c0_i32_0 : i32, i32
  }
  func.func @transform_3(%arg0: i32, %arg1: i32) -> (i32, i32) {
    %c0_i32 = arith.constant 0 : i32
    %c0_i32_0 = arith.constant 0 : i32
    %c0_i32_1 = arith.constant 0 : i32
    return %c0_i32, %c0_i32_0 : i32, i32
  }
  func.func @transform_4(%arg0: i32, %arg1: i32) -> (i32, i32) {
    %c0_i32 = arith.constant 0 : i32
    %c0_i32_0 = arith.constant 0 : i32
    return %arg1, %c0_i32 : i32, i32
  }
  func.func @transform_5(%arg0: i32, %arg1: i32) -> (i32, i32) {
    %c0_i32 = arith.constant 0 : i32
    %c0_i32_0 = arith.constant 0 : i32
    return %arg1, %c0_i32 : i32, i32
  }
  func.func @transform_6(%arg0: i32, %arg1: i32) -> (i32, i32, i32, i32) {
    %c0_i32 = arith.constant 0 : i32
    %c0_i32_0 = arith.constant 0 : i32
    %c0_i32_1 = arith.constant 0 : i32
    return %arg0, %c0_i32, %arg1, %c0_i32_0 : i32, i32, i32, i32
  }
  func.func @transform_7(%arg0: i32, %arg1: i32) -> (i32, i32, i32, i32) {
    %c0_i32 = arith.constant 0 : i32
    %c0_i32_0 = arith.constant 0 : i32
    %c0_i32_1 = arith.constant 0 : i32
    return %arg0, %c0_i32, %arg1, %c0_i32_0 : i32, i32, i32, i32
  }
  func.func @transform_8(%arg0: i32, %arg1: i32) -> (i32, i32, i32, i32) {
    %c0_i32 = arith.constant 0 : i32
    %c0_i32_0 = arith.constant 0 : i32
    %c0_i32_1 = arith.constant 0 : i32
    return %arg0, %c0_i32, %arg1, %c0_i32_0 : i32, i32, i32, i32
  }
}

module attributes {stable_mosaic.version = 11 : i64} {
  func.func @_flash_attn_outproj_kernel(%arg0: i32, %arg1: i32, %arg2: i32, %arg3: i32, %arg4: memref<1x1x64x32xbf16, #tpu.memory_space<vmem>>, %arg5: memref<1x1x64x32xbf16, #tpu.memory_space<vmem>>, %arg6: memref<1x1x64x32xbf16, #tpu.memory_space<vmem>>, %arg7: memref<4x32x128xbf16, #tpu.memory_space<vmem>>, %arg8: memref<1x64x128xf32, #tpu.memory_space<vmem>>, %arg9: memref<64x1xf32, #tpu.memory_space<vmem>>, %arg10: memref<64x1xf32, #tpu.memory_space<vmem>>, %arg11: memref<64x32xf32, #tpu.memory_space<vmem>>, %arg12: memref<64x128xf32, #tpu.memory_space<vmem>>) attributes {dimension_semantics = [#tpu.dimension_semantics<parallel>, #tpu.dimension_semantics<parallel>, #tpu.dimension_semantics<arbitrary>, #tpu.dimension_semantics<arbitrary>], iteration_bounds = array<i64: 2, 1, 4, 1>, scalar_prefetch = 0 : i64, scratch_operands = 4 : i64, tpu.core_type = #tpu.core_type<tc>, window_params = [{transform_indices = @transform_0, window_bounds = array<i64: 1, 1, 64, 32>}, {transform_indices = @transform_1, window_bounds = array<i64: 1, 1, 64, 32>}, {transform_indices = @transform_2, window_bounds = array<i64: 1, 1, 64, 32>}, {pipeline_mode = #tpu.pipeline_mode<synchronous>, transform_indices = @transform_3, window_bounds = array<i64: 4, 32, 128>}, {transform_indices = @transform_4, window_bounds = array<i64: 1, 64, 128>}]} {
    %c0_i32 = arith.constant 0 : i32
    %0 = arith.cmpi eq, %arg2, %c0_i32 : i32
    %c0_i32_0 = arith.constant 0 : i32
    %1 = arith.cmpi eq, %arg3, %c0_i32_0 : i32
    %2 = arith.andi %0, %1 : i1
    %3 = arith.extui %2 : i1 to i32
    %c0_i32_1 = arith.constant 0 : i32
    %4 = arith.cmpi ne, %3, %c0_i32_1 : i32
    scf.if %4 {
      %cst = arith.constant 0.000000e+00 : f32
      %19 = vector.broadcast %cst : f32 to vector<64x128xf32>
      %c0 = arith.constant 0 : index
      %c0_9 = arith.constant 0 : index
      %20 = vector.load %arg12[%c0, %c0_9] : memref<64x128xf32, #tpu.memory_space<vmem>>, vector<64x128xf32>
      tpu.vector_store %arg12[%c0, %c0_9], %19 {strides = array<i32>} : memref<64x128xf32, #tpu.memory_space<vmem>>, vector<64x128xf32>,
    } else {
    }
    %c0_i32_2 = arith.constant 0 : i32
    %5 = arith.cmpi eq, %arg3, %c0_i32_2 : i32
    %6 = arith.extui %5 : i1 to i32
    %c0_i32_3 = arith.constant 0 : i32
    %7 = arith.cmpi ne, %6, %c0_i32_3 : i32
    scf.if %7 {
      %cst = arith.constant 0xFF800000 : f32
      %19 = vector.broadcast %cst : f32 to vector<64x1xf32>
      %c0 = arith.constant 0 : index
      %c0_9 = arith.constant 0 : index
      %20 = vector.load %arg9[%c0, %c0_9] : memref<64x1xf32, #tpu.memory_space<vmem>>, vector<64x1xf32>
      tpu.vector_store %arg9[%c0, %c0_9], %19 {strides = array<i32>} : memref<64x1xf32, #tpu.memory_space<vmem>>, vector<64x1xf32>,
      %cst_10 = arith.constant 0.000000e+00 : f32
      %21 = vector.broadcast %cst_10 : f32 to vector<64x1xf32>
      %c0_11 = arith.constant 0 : index
      %c0_12 = arith.constant 0 : index
      %22 = vector.load %arg10[%c0_11, %c0_12] : memref<64x1xf32, #tpu.memory_space<vmem>>, vector<64x1xf32>
      tpu.vector_store %arg10[%c0_11, %c0_12], %21 {strides = array<i32>} : memref<64x1xf32, #tpu.memory_space<vmem>>, vector<64x1xf32>,
      %cst_13 = arith.constant 0.000000e+00 : f32
      %23 = vector.broadcast %cst_13 : f32 to vector<64x32xf32>
      %c0_14 = arith.constant 0 : index
      %c0_15 = arith.constant 0 : index
      %24 = vector.load %arg11[%c0_14, %c0_15] : memref<64x32xf32, #tpu.memory_space<vmem>>, vector<64x32xf32>
      tpu.vector_store %arg11[%c0_14, %c0_15], %23 {strides = array<i32>} : memref<64x32xf32, #tpu.memory_space<vmem>>, vector<64x32xf32>,
    } else {
    }
    %8 = arith.cmpi sle, %arg3, %arg1 : i32
    %9 = arith.extui %8 : i1 to i32
    %c0_i32_4 = arith.constant 0 : i32
    %10 = arith.cmpi ne, %9, %c0_i32_4 : i32
    scf.if %10 {
      %c0 = arith.constant 0 : index
      %c0_9 = arith.constant 0 : index
      %c0_10 = arith.constant 0 : index
      %c0_11 = arith.constant 0 : index
      %19 = vector.load %arg4[%c0, %c0_9, %c0_10, %c0_11] : memref<1x1x64x32xbf16, #tpu.memory_space<vmem>>, vector<1x1x64x32xbf16>
      %20 = vector.shape_cast %19 : vector<1x1x64x32xbf16> to vector<64x32xbf16>
      %c0_12 = arith.constant 0 : index
      %c0_13 = arith.constant 0 : index
      %c0_14 = arith.constant 0 : index
      %c0_15 = arith.constant 0 : index
      %21 = vector.load %arg5[%c0_12, %c0_13, %c0_14, %c0_15] : memref<1x1x64x32xbf16, #tpu.memory_space<vmem>>, vector<1x1x64x32xbf16>
      %22 = vector.shape_cast %21 : vector<1x1x64x32xbf16> to vector<64x32xbf16>
      %cst = arith.constant dense<0.000000e+00> : vector<64x64xf32>
      %23 = tpu.matmul %20, %22, %cst {dimension_numbers = #tpu.dot_dimension_numbers<[1], [1], [0], [0], [0, 0, 1, 0], [], []>} : vector<64x32xbf16>, vector<64x32xbf16>, vector<64x64xf32> -> vector<64x64xf32>
      %24 = arith.cmpi eq, %arg3, %arg1 : i32
      %25 = arith.extui %24 : i1 to i32
      %c0_i32_16 = arith.constant 0 : i32
      %26 = arith.cmpi ne, %25, %c0_i32_16 : i32
      %27 = scf.if %26 -> (vector<64x64xf32>) {
        %53 = tpu.iota {dimensions = array<i32: 0>} : vector<64x64xi32>
        %54 = tpu.iota {dimensions = array<i32: 1>} : vector<64x64xi32>
        %55 = arith.cmpi sge, %53, %54 : vector<64x64xi32>
        %cst_36 = arith.constant -1.000000e+30 : f32
        %56 = vector.broadcast %cst_36 : f32 to vector<64x64xf32>
        %57 = arith.select %55, %23, %56 : vector<64x64xi1>, vector<64x64xf32>
        scf.yield %57 : vector<64x64xf32>
      } else {
        scf.yield %23 : vector<64x64xf32>
      }
      %c0_17 = arith.constant 0 : index
      %c0_18 = arith.constant 0 : index
      %28 = vector.load %arg9[%c0_17, %c0_18] : memref<64x1xf32, #tpu.memory_space<vmem>>, vector<64x1xf32>
      %cst_19 = arith.constant dense<0xFF800000> : vector<64xf32>
      %29 = vector.multi_reduction <maximumf>, %27, %cst_19 [1] : vector<64x64xf32> to vector<64xf32>
      %30 = vector.shape_cast %29 : vector<64xf32> to vector<64x1xf32>
      %31 = arith.maximumf %28, %30 : vector<64x1xf32>
      %32 = arith.subf %28, %31 : vector<64x1xf32>
      %33 = math.exp %32 : vector<64x1xf32>
      %34 = vector.broadcast %31 : vector<64x1xf32> to vector<64x64xf32>
      %35 = arith.subf %27, %34 : vector<64x64xf32>
      %36 = math.exp %35 : vector<64x64xf32>
      %c0_20 = arith.constant 0 : index
      %c0_21 = arith.constant 0 : index
      %37 = vector.load %arg10[%c0_20, %c0_21] : memref<64x1xf32, #tpu.memory_space<vmem>>, vector<64x1xf32>
      %38 = arith.mulf %33, %37 : vector<64x1xf32>
      %cst_22 = arith.constant dense<0.000000e+00> : vector<64xf32>
      %39 = vector.multi_reduction <add>, %36, %cst_22 [1] : vector<64x64xf32> to vector<64xf32>
      %40 = vector.shape_cast %39 : vector<64xf32> to vector<64x1xf32>
      %41 = arith.addf %38, %40 : vector<64x1xf32>
      %c0_23 = arith.constant 0 : index
      %c0_24 = arith.constant 0 : index
      %42 = vector.load %arg10[%c0_23, %c0_24] : memref<64x1xf32, #tpu.memory_space<vmem>>, vector<64x1xf32>
      tpu.vector_store %arg10[%c0_23, %c0_24], %41 {strides = array<i32>} : memref<64x1xf32, #tpu.memory_space<vmem>>, vector<64x1xf32>,
      %c0_25 = arith.constant 0 : index
      %c0_26 = arith.constant 0 : index
      %43 = vector.load %arg11[%c0_25, %c0_26] : memref<64x32xf32, #tpu.memory_space<vmem>>, vector<64x32xf32>
      %44 = vector.broadcast %33 : vector<64x1xf32> to vector<64x32xf32>
      %45 = arith.mulf %44, %43 : vector<64x32xf32>
      %46 = arith.truncf %36 : vector<64x64xf32> to vector<64x64xbf16>
      %c0_27 = arith.constant 0 : index
      %c0_28 = arith.constant 0 : index
      %c0_29 = arith.constant 0 : index
      %c0_30 = arith.constant 0 : index
      %47 = vector.load %arg6[%c0_27, %c0_28, %c0_29, %c0_30] : memref<1x1x64x32xbf16, #tpu.memory_space<vmem>>, vector<1x1x64x32xbf16>
      %48 = vector.shape_cast %47 : vector<1x1x64x32xbf16> to vector<64x32xbf16>
      %cst_31 = arith.constant dense<0.000000e+00> : vector<64x32xf32>
      %49 = tpu.matmul %46, %48, %cst_31 {dimension_numbers = #tpu.dot_dimension_numbers<[1], [0], [0], [1], [0, 0, 1, 1], [], []>} : vector<64x64xbf16>, vector<64x32xbf16>, vector<64x32xf32> -> vector<64x32xf32>
      %50 = arith.addf %45, %49 : vector<64x32xf32>
      %c0_32 = arith.constant 0 : index
      %c0_33 = arith.constant 0 : index
      %51 = vector.load %arg11[%c0_32, %c0_33] : memref<64x32xf32, #tpu.memory_space<vmem>>, vector<64x32xf32>
      tpu.vector_store %arg11[%c0_32, %c0_33], %50 {strides = array<i32>} : memref<64x32xf32, #tpu.memory_space<vmem>>, vector<64x32xf32>,
      %c0_34 = arith.constant 0 : index
      %c0_35 = arith.constant 0 : index
      %52 = vector.load %arg9[%c0_34, %c0_35] : memref<64x1xf32, #tpu.memory_space<vmem>>, vector<64x1xf32>
      tpu.vector_store %arg9[%c0_34, %c0_35], %31 {strides = array<i32>} : memref<64x1xf32, #tpu.memory_space<vmem>>, vector<64x1xf32>,
    } else {
    }
    %c0_i32_5 = arith.constant 0 : i32
    %11 = arith.cmpi eq, %arg3, %c0_i32_5 : i32
    %12 = arith.extui %11 : i1 to i32
    %c0_i32_6 = arith.constant 0 : i32
    %13 = arith.cmpi ne, %12, %c0_i32_6 : i32
    scf.if %13 {
      %c0 = arith.constant 0 : index
      %c0_9 = arith.constant 0 : index
      %19 = vector.load %arg11[%c0, %c0_9] : memref<64x32xf32, #tpu.memory_space<vmem>>, vector<64x32xf32>
      %c0_10 = arith.constant 0 : index
      %c0_11 = arith.constant 0 : index
      %20 = vector.load %arg10[%c0_10, %c0_11] : memref<64x1xf32, #tpu.memory_space<vmem>>, vector<64x1xf32>
      %21 = tpu.reciprocal %20 {approx = true} : vector<64x1xf32> -> vector<64x1xf32>
      %22 = vector.broadcast %21 : vector<64x1xf32> to vector<64x32xf32>
      %23 = arith.mulf %19, %22 : vector<64x32xf32>
      %24 = arith.truncf %23 : vector<64x32xf32> to vector<64x32xbf16>
      %c0_12 = arith.constant 0 : index
      %c0_13 = arith.constant 0 : index
      %25 = vector.load %arg12[%c0_12, %c0_13] : memref<64x128xf32, #tpu.memory_space<vmem>>, vector<64x128xf32>
      %26 = arith.index_cast %arg2 : i32 to index
      %c0_14 = arith.constant 0 : index
      %c0_15 = arith.constant 0 : index
      %27 = vector.load %arg7[%26, %c0_14, %c0_15] : memref<4x32x128xbf16, #tpu.memory_space<vmem>>, vector<1x32x128xbf16>
      %28 = vector.shape_cast %27 : vector<1x32x128xbf16> to vector<32x128xbf16>
      %cst = arith.constant dense<0.000000e+00> : vector<64x128xf32>
      %29 = tpu.matmul %24, %28, %cst {dimension_numbers = #tpu.dot_dimension_numbers<[1], [0], [0], [1], [0, 0, 1, 1], [], []>} : vector<64x32xbf16>, vector<32x128xbf16>, vector<64x128xf32> -> vector<64x128xf32>
      %30 = arith.addf %25, %29 : vector<64x128xf32>
      %c0_16 = arith.constant 0 : index
      %c0_17 = arith.constant 0 : index
      %31 = vector.load %arg12[%c0_16, %c0_17] : memref<64x128xf32, #tpu.memory_space<vmem>>, vector<64x128xf32>
      tpu.vector_store %arg12[%c0_16, %c0_17], %30 {strides = array<i32>} : memref<64x128xf32, #tpu.memory_space<vmem>>, vector<64x128xf32>,
    } else {
    }
    %c3_i32 = arith.constant 3 : i32
    %14 = arith.cmpi eq, %arg2, %c3_i32 : i32
    %c0_i32_7 = arith.constant 0 : i32
    %15 = arith.cmpi eq, %arg3, %c0_i32_7 : i32
    %16 = arith.andi %14, %15 : i1
    %17 = arith.extui %16 : i1 to i32
    %c0_i32_8 = arith.constant 0 : i32
    %18 = arith.cmpi ne, %17, %c0_i32_8 : i32
    scf.if %18 {
      %c0 = arith.constant 0 : index
      %c0_9 = arith.constant 0 : index
      %19 = vector.load %arg12[%c0, %c0_9] : memref<64x128xf32, #tpu.memory_space<vmem>>, vector<64x128xf32>
      %c0_10 = arith.constant 0 : index
      %c0_11 = arith.constant 0 : index
      %c0_12 = arith.constant 0 : index
      %20 = vector.load %arg8[%c0_10, %c0_11, %c0_12] : memref<1x64x128xf32, #tpu.memory_space<vmem>>, vector<1x64x128xf32>
      %21 = vector.shape_cast %20 : vector<1x64x128xf32> to vector<64x128xf32>
      %22 = vector.shape_cast %19 : vector<64x128xf32> to vector<1x64x128xf32>
      tpu.vector_store %arg8[%c0_10, %c0_11, %c0_12], %22 {strides = array<i32>} : memref<1x64x128xf32, #tpu.memory_space<vmem>>, vector<1x64x128xf32>,
    } else {
    }
    return
  }
  func.func @transform_0(%arg0: i32, %arg1: i32, %arg2: i32, %arg3: i32) -> (i32, i32, i32, i32) {
    %c0_i32 = arith.constant 0 : i32
    %c0_i32_0 = arith.constant 0 : i32
    return %arg0, %arg2, %arg1, %c0_i32 : i32, i32, i32, i32
  }
  func.func @transform_1(%arg0: i32, %arg1: i32, %arg2: i32, %arg3: i32) -> (i32, i32, i32, i32) {
    %0 = arith.minsi %arg3, %arg1 : i32
    %c0_i32 = arith.constant 0 : i32
    %c0_i32_0 = arith.constant 0 : i32
    return %arg0, %arg2, %0, %c0_i32 : i32, i32, i32, i32
  }
  func.func @transform_2(%arg0: i32, %arg1: i32, %arg2: i32, %arg3: i32) -> (i32, i32, i32, i32) {
    %0 = arith.minsi %arg3, %arg1 : i32
    %c0_i32 = arith.constant 0 : i32
    %c0_i32_0 = arith.constant 0 : i32
    return %arg0, %arg2, %0, %c0_i32 : i32, i32, i32, i32
  }
  func.func @transform_3(%arg0: i32, %arg1: i32, %arg2: i32, %arg3: i32) -> (i32, i32, i32) {
    %c0_i32 = arith.constant 0 : i32
    %c0_i32_0 = arith.constant 0 : i32
    %c0_i32_1 = arith.constant 0 : i32
    %c0_i32_2 = arith.constant 0 : i32
    return %c0_i32, %c0_i32_0, %c0_i32_1 : i32, i32, i32
  }
  func.func @transform_4(%arg0: i32, %arg1: i32, %arg2: i32, %arg3: i32) -> (i32, i32, i32) {
    %c0_i32 = arith.constant 0 : i32
    %c0_i32_0 = arith.constant 0 : i32
    return %arg0, %arg1, %c0_i32 : i32, i32, i32
  }
}

</mosaic_0001>

<llo_original>
// kernel: self_attention_forward.3
$region0: #{self_attention_forward.3}
  #allocation0 [shape = 'u32[]', space=smem, size = 0x4, offset = 0x4, fixed_abs, tag = 'smem constant byte address 0x4 - core index']
  #allocation1 [shape = 'u32[72,128]{1,0:T(1,128)}', space=vmem, size = 0x9000, scoped, tag = 'internal scratch']
  #allocation2 [shape = 'f32[64,1]{1,0:T(8,128)}', space=vmem, size = 0x8000, scoped, tag = 'scratch operand']
  #allocation3 [shape = 'f32[64,1]{1,0:T(8,128)}', space=vmem, size = 0x8000, scoped, tag = 'scratch operand']
  #allocation4 [shape = 'f32[64,32]{1,0:T(8,128)}', space=vmem, size = 0x8000, scoped, tag = 'scratch operand']
  #allocation5 [shape = 'f32[64,128]{1,0:T(8,128)}', space=vmem, size = 0x8000, scoped, tag = 'scratch operand']
  %s0 = inlined_call_operand.vmem [shape: bf16[2,4,64,32], index: 0, kind: input, shape index: {}]
  %s1 = inlined_call_operand.vmem [shape: bf16[2,4,64,32], index: 1, kind: input, shape index: {}]
  %s2 = inlined_call_operand.vmem [shape: bf16[2,4,64,32], index: 2, kind: input, shape index: {}]
  %s3 = inlined_call_operand.vmem [shape: bf16[4,32,128], index: 3, kind: input, shape index: {}]
  %s4 = inlined_call_operand.hbm [shape: f32[2,64,128], index: 4, kind: output, shape index: {}]
  %s5 = sld [smem:[#allocation0]]
  $region77: #{self_attention_forward.3} parent=0
    _
  %s7 = ssub.s32 1, %s5
  %s8 = scalar_select 0, %s7, %s5
  $region1: #{self_attention_forward.3} parent=0
    #allocation6 [shape = 'u8[65536]{0}', space=vmem, size = 0x10000, scoped, tag = 'output window, operand 0']
    #allocation7 [shape = 's32[2]{0}', space=sflag, size = 0x8, scoped, tag = 'scoped memory for self_attention_forward.3']
    %9 = vsyncpa [#allocation7], 0
    %s10 = scalar_lea.sflag [#allocation7], 1
    %11 = vsyncpa %s10, 0
    loop: start=0, step=1, limit=10
    $region2: #{self_attention_forward.3} parent=1 // loop_pre_header
      _
    $region3: #{self_attention_forward.3} parent=1 // loop_header
      %s13 = sphi 0, %s17
      %p14 = scmp.ge.s32.totalorder %s13, 10
      %s20 = sphi 0, %s46
      %s21 = sphi 0, %s42
      %s22 = sphi 0, %s38
      %s23 = sphi 0, %s34
      %s24 = sphi 0, %s20
      %s25 = sphi 0, %s21
      %s26 = sphi 0, %s22
      %s27 = sphi 0, %s23
      %s28 = sphi 0, %s24
      %s29 = sphi 0, %s25
      %s30 = sphi 0, %s26
      %s31 = sphi 0, %s27
      %s53 = sphi 0, %s55
      %s56 = sphi 0, %s53
      %s57 = sphi 0, %s56
      %s73 = sphi 0, %s57
      %s87 = sphi 0, %s89
      %s90 = sphi 0, %s87
      %s91 = sphi 0, %s90
      %s107 = sphi 0, %s91
      %s121 = sphi 0, %s123
      %s124 = sphi 0, %s121
      %s125 = sphi 0, %s124
      %s141 = sphi 0, %s125
      %s145 = sphi 0, %s145
      %s147 = sphi 0, %s145
      %s148 = sphi 0, %s147
      %s162 = sphi 0, %s148
      %s170 = sphi 0, %s172
      %s173 = sphi 0, %s170
      %s174 = sphi 0, %s173
      %s190 = sphi 0, %s174
    $region4: #{self_attention_forward.3} parent=1 // loop_header_branch
      %16 = sbr.rel (%p14) target = $region8
    $region5: #{self_attention_forward.3} parent=1 // loop_body
      %s18 = ssub.s32 %s13, 1
      %s19 = ssub.s32 %s13, 2
      %s32 = sadd.s32 1, %s23
      %p33 = scmp.ge.s32.totalorder %s32, 1
      %s34 = scalar_select %p33, 0, %s32
      %s35 = sadd.s32 1, %s22
      %s36 = scalar_select %p33, %s35, %s22
      %p37 = scmp.ge.s32.totalorder %s36, 4
      %s38 = scalar_select %p37, 0, %s36
      %s39 = sadd.s32 1, %s21
      %s40 = scalar_select %p37, %s39, %s21
      %p41 = scmp.ge.s32.totalorder %s40, 1
      %s42 = scalar_select %p41, 0, %s40
      %s43 = sadd.s32 1, %s20
      %s44 = scalar_select %p41, %s43, %s20
      %p45 = scmp.ge.s32.totalorder %s44, 2
      %s46 = scalar_select %p45, 0, %s44
      %s47 = ssub.s32 %s20, %s46
      %s48 = ssub.s32 %s22, %s38
      %s49 = sor.u32 %s47, %s48
      %s50 = ssub.s32 %s21, %s42
      %s51 = sor.u32 %s49, %s50
      %p52 = scmp.eq.s32.totalorder %s51, 0
      %s54 = sadd.s32 %s53, 1
      %s55 = scalar_select %p52, %s53, %s54
      %p58 = pneg %p52
      %p59 = scmp.eq.s32.totalorder %s13, 7
      %p60 = por %p58, %p59
      %p61 = scmp.ne.s32.totalorder %s53, %s56
      %p62 = scmp.eq.s32.totalorder %s13, 0
      %p63 = por %p61, %p62
      %p64 = scmp.ne.s32.totalorder %s53, %s56
      %p65 = scmp.eq.s32.totalorder %s18, 7
      %p66 = por %p64, %p65
      %p67 = scmp.ne.s32.totalorder %s56, %s57
      %p68 = scmp.eq.s32.totalorder %s18, 0
      %p69 = por %p67, %p68
      %p70 = scmp.ne.s32.totalorder %s56, %s57
      %p71 = scmp.eq.s32.totalorder %s19, 7
      %p72 = por %p70, %p71
      %p74 = scmp.ne.s32.totalorder %s57, %s73
      %p75 = scmp.eq.s32.totalorder %s19, 0
      %p76 = por %p74, %p75
      %p77 = scmp.lt.s32.totalorder %s23, %s21
      %s78 = scalar_select %p77, %s23, %s21
      %p79 = scmp.lt.s32.totalorder %s34, %s42
      %s80 = scalar_select %p79, %s34, %s42
      %s81 = ssub.s32 %s20, %s46
      %s82 = ssub.s32 %s22, %s38
      %s83 = sor.u32 %s81, %s82
      %s84 = ssub.s32 %s78, %s80
      %s85 = sor.u32 %s83, %s84
      %p86 = scmp.eq.s32.totalorder %s85, 0
      %s88 = sadd.s32 %s87, 1
      %s89 = scalar_select %p86, %s87, %s88
      %p92 = pneg %p86
      %p93 = scmp.eq.s32.totalorder %s13, 7
      %p94 = por %p92, %p93
      %p95 = scmp.ne.s32.totalorder %s87, %s90
      %p96 = scmp.eq.s32.totalorder %s13, 0
      %p97 = por %p95, %p96
      %p98 = scmp.ne.s32.totalorder %s87, %s90
      %p99 = scmp.eq.s32.totalorder %s18, 7
      %p100 = por %p98, %p99
      %p101 = scmp.ne.s32.totalorder %s90, %s91
      %p102 = scmp.eq.s32.totalorder %s18, 0
      %p103 = por %p101, %p102
      %p104 = scmp.ne.s32.totalorder %s90, %s91
      %p105 = scmp.eq.s32.totalorder %s19, 7
      %p106 = por %p104, %p105
      %p108 = scmp.ne.s32.totalorder %s91, %s107
      %p109 = scmp.eq.s32.totalorder %s19, 0
      %p110 = por %p108, %p109
      %p111 = scmp.lt.s32.totalorder %s23, %s21
      %s112 = scalar_select %p111, %s23, %s21
      %p113 = scmp.lt.s32.totalorder %s34, %s42
      %s114 = scalar_select %p113, %s34, %s42
      %s115 = ssub.s32 %s20, %s46
      %s116 = ssub.s32 %s22, %s38
      %s117 = sor.u32 %s115, %s116
      %s118 = ssub.s32 %s112, %s114
      %s119 = sor.u32 %s117, %s118
      %p120 = scmp.eq.s32.totalorder %s119, 0
      %s122 = sadd.s32 %s121, 1
      %s123 = scalar_select %p120, %s121, %s122
      %p126 = pneg %p120
      %p127 = scmp.eq.s32.totalorder %s13, 7
      %p128 = por %p126, %p127
      %p129 = scmp.ne.s32.totalorder %s121, %s124
      %p130 = scmp.eq.s32.totalorder %s13, 0
      %p131 = por %p129, %p130
      %p132 = scmp.ne.s32.totalorder %s121, %s124
      %p133 = scmp.eq.s32.totalorder %s18, 7
      %p134 = por %p132, %p133
      %p135 = scmp.ne.s32.totalorder %s124, %s125
      %p136 = scmp.eq.s32.totalorder %s18, 0
      %p137 = por %p135, %p136
      %p138 = scmp.ne.s32.totalorder %s124, %s125
      %p139 = scmp.eq.s32.totalorder %s19, 7
      %p140 = por %p138, %p139
      %p142 = scmp.ne.s32.totalorder %s125, %s141
      %p143 = scmp.eq.s32.totalorder %s19, 0
      %p144 = por %p142, %p143
      %s146 = sadd.s32 %s145, 1
      %p149 = scmp.eq.s32.totalorder %s13, 7
      %p150 = scmp.ne.s32.totalorder %s145, %s147
      %p151 = scmp.eq.s32.totalorder %s13, 0
      %p152 = por %p150, %p151
      %p153 = scmp.ne.s32.totalorder %s145, %s147
      %p154 = scmp.eq.s32.totalorder %s18, 7
      %p155 = por %p153, %p154
      %p156 = scmp.ne.s32.totalorder %s147, %s148
      %p157 = scmp.eq.s32.totalorder %s18, 0
      %p158 = por %p156, %p157
      %p159 = scmp.ne.s32.totalorder %s147, %s148
      %p160 = scmp.eq.s32.totalorder %s19, 7
      %p161 = por %p159, %p160
      %p163 = scmp.ne.s32.totalorder %s148, %s162
      %p164 = scmp.eq.s32.totalorder %s19, 0
      %p165 = por %p163, %p164
      %s166 = ssub.s32 %s20, %s46
      %s167 = ssub.s32 %s21, %s42
      %s168 = sor.u32 %s166, %s167
      %p169 = scmp.eq.s32.totalorder %s168, 0
      %s171 = sadd.s32 %s170, 1
      %s172 = scalar_select %p169, %s170, %s171
      %p175 = pneg %p169
      %p176 = scmp.eq.s32.totalorder %s13, 7
      %p177 = por %p175, %p176
      %p178 = scmp.ne.s32.totalorder %s170, %s173
      %p179 = scmp.eq.s32.totalorder %s13, 0
      %p180 = por %p178, %p179
      %p181 = scmp.ne.s32.totalorder %s170, %s173
      %p182 = scmp.eq.s32.totalorder %s18, 7
      %p183 = por %p181, %p182
      %p184 = scmp.ne.s32.totalorder %s173, %s174
      %p185 = scmp.eq.s32.totalorder %s18, 0
      %p186 = por %p184, %p185
      %p187 = scmp.ne.s32.totalorder %s173, %s174
      %p188 = scmp.eq.s32.totalorder %s19, 7
      %p189 = por %p187, %p188
      %p191 = scmp.ne.s32.totalorder %s174, %s190
      %p192 = scmp.eq.s32.totalorder %s19, 0
      %p193 = por %p191, %p192
      %p194 = scmp.le.s32.totalorder 1, %s13
      %p195 = scmp.lt.s32.totalorder %s13, 9
      %p196 = pnand %p194, %p195
      %p197 = pneg %p196
      // Predicated region
      $region9: #{self_attention_forward.3} parent=5 // pred_check
        _
      $region10: #{self_attention_forward.3} parent=5 // pred_check_branch
        %199 = sbr.rel (%p196) target = $region12
      $region11: #{self_attention_forward.3} parent=5 // pred_region
        %s200 = ssub.s32 %s13, 1
        // Predicated region
        $region13: #{self_attention_forward.3} parent=11 // pred_check
          %p201 = pneg %p158
        $region14: #{self_attention_forward.3} parent=11 // pred_check_branch
          %203 = sbr.rel (%p201) target = $region16
        $region15: #{self_attention_forward.3} parent=11 // pred_region
          _
        $region16: #{self_attention_forward.3} parent=11 // pred_fallthru
          _
      $region12: #{self_attention_forward.3} parent=5 // pred_fallthru
        _
      %p204 = scmp.lt.s32.totalorder %s13, 8
      // Predicated region
      $region17: #{self_attention_forward.3} parent=5 // pred_check
        %p205 = pneg %p204
      $region18: #{self_attention_forward.3} parent=5 // pred_check_branch
        %207 = sbr.rel (%p205) target = $region20
      $region19: #{self_attention_forward.3} parent=5 // pred_region
        // Predicated region
        $region21: #{self_attention_forward.3} parent=19 // pred_check
          %p208 = pneg %p63
        $region22: #{self_attention_forward.3} parent=19 // pred_check_branch
          %210 = sbr.rel (%p208) target = $region24
        $region23: #{self_attention_forward.3} parent=19 // pred_region
          %s211 = smul.u32 8, %s21
          %p212 = scmp.lt.s32.totalorder %s20, 1
          %s213 = scalar_select %p212, %s20, 1
          %p214 = scmp.lt.s32.totalorder %s22, 3
          %s215 = scalar_select %p214, %s22, 3
          %p216 = scmp.lt.s32.totalorder %s211, 7
          %s217 = scalar_select %p216, %s211, 7
          %s218 = smul.addr %s215, 8
          %s219 = sadd.s32 %s217, %s218
          %s220 = smul.addr %s213, 32
          %s221 = sadd.s32 %s219, %s220
          %s222 = smul.addr %s221, 4
          %s223 = scalar_lea.vmem %s0, %s222
          %s224 = smul.u32 8, %s21
        $region24: #{self_attention_forward.3} parent=19 // pred_fallthru
          _
        // Predicated region
        $region25: #{self_attention_forward.3} parent=19 // pred_check
          %p225 = pneg %p97
        $region26: #{self_attention_forward.3} parent=19 // pred_check_branch
          %227 = sbr.rel (%p225) target = $region28
        $region27: #{self_attention_forward.3} parent=19 // pred_region
          %p228 = scmp.lt.s32.totalorder %s23, %s21
          %s229 = scalar_select %p228, %s23, %s21
          %s230 = smul.u32 8, %s229
          %p231 = scmp.lt.s32.totalorder %s20, 1
          %s232 = scalar_select %p231, %s20, 1
          %p233 = scmp.lt.s32.totalorder %s22, 3
          %s234 = scalar_select %p233, %s22, 3
          %p235 = scmp.lt.s32.totalorder %s230, 7
          %s236 = scalar_select %p235, %s230, 7
          %s237 = smul.addr %s234, 8
          %s238 = sadd.s32 %s236, %s237
          %s239 = smul.addr %s232, 32
          %s240 = sadd.s32 %s238, %s239
          %s241 = smul.addr %s240, 4
          %s242 = scalar_lea.vmem %s1, %s241
          %p243 = scmp.lt.s32.totalorder %s23, %s21
          %s244 = scalar_select %p243, %s23, %s21
          %s245 = smul.u32 8, %s244
        $region28: #{self_attention_forward.3} parent=19 // pred_fallthru
          _
        // Predicated region
        $region29: #{self_attention_forward.3} parent=19 // pred_check
          %p246 = pneg %p131
        $region30: #{self_attention_forward.3} parent=19 // pred_check_branch
          %248 = sbr.rel (%p246) target = $region32
        $region31: #{self_attention_forward.3} parent=19 // pred_region
          %p249 = scmp.lt.s32.totalorder %s23, %s21
          %s250 = scalar_select %p249, %s23, %s21
          %s251 = smul.u32 8, %s250
          %p252 = scmp.lt.s32.totalorder %s20, 1
          %s253 = scalar_select %p252, %s20, 1
          %p254 = scmp.lt.s32.totalorder %s22, 3
          %s255 = scalar_select %p254, %s22, 3
          %p256 = scmp.lt.s32.totalorder %s251, 7
          %s257 = scalar_select %p256, %s251, 7
          %s258 = smul.addr %s255, 8
          %s259 = sadd.s32 %s257, %s258
          %s260 = smul.addr %s253, 32
          %s261 = sadd.s32 %s259, %s260
          %s262 = smul.addr %s261, 4
          %s263 = scalar_lea.vmem %s2, %s262
          %p264 = scmp.lt.s32.totalorder %s23, %s21
          %s265 = scalar_select %p264, %s23, %s21
          %s266 = smul.u32 8, %s265
        $region32: #{self_attention_forward.3} parent=19 // pred_fallthru
          _
      $region20: #{self_attention_forward.3} parent=5 // pred_fallthru
        _
      %p267 = scmp.le.s32.totalorder 1, %s13
      %p268 = scmp.lt.s32.totalorder %s13, 9
      %p269 = pnand %p267, %p268
      %p270 = pneg %p269
      // Predicated region
      $region33: #{self_attention_forward.3} parent=5 // pred_check
        _
      $region34: #{self_attention_forward.3} parent=5 // pred_check_branch
        %272 = sbr.rel (%p269) target = $region36
      $region35: #{self_attention_forward.3} parent=5 // pred_region
        %s273 = ssub.s32 %s13, 1
        %s274 = smul.u32 8, %s25
        %p275 = scmp.lt.s32.totalorder %s24, 1
        %s276 = scalar_select %p275, %s24, 1
        %p277 = scmp.lt.s32.totalorder %s26, 3
        %s278 = scalar_select %p277, %s26, 3
        %p279 = scmp.lt.s32.totalorder %s274, 7
        %s280 = scalar_select %p279, %s274, 7
        %s281 = smul.addr %s278, 8
        %s282 = sadd.s32 %s280, %s281
        %s283 = smul.addr %s276, 32
        %s284 = sadd.s32 %s282, %s283
        %s285 = smul.addr %s284, 4
        %s286 = scalar_lea.vmem %s0, %s285
        %p287 = pneg %p69
        %p288 = pneg %p66
        %p289 = scmp.lt.s32.totalorder %s27, %s25
        %s290 = scalar_select %p289, %s27, %s25
        %s291 = smul.u32 8, %s290
        %p292 = scmp.lt.s32.totalorder %s24, 1
        %s293 = scalar_select %p292, %s24, 1
        %p294 = scmp.lt.s32.totalorder %s26, 3
        %s295 = scalar_select %p294, %s26, 3
        %p296 = scmp.lt.s32.totalorder %s291, 7
        %s297 = scalar_select %p296, %s291, 7
        %s298 = smul.addr %s295, 8
        %s299 = sadd.s32 %s297, %s298
        %s300 = smul.addr %s293, 32
        %s301 = sadd.s32 %s299, %s300
        %s302 = smul.addr %s301, 4
        %s303 = scalar_lea.vmem %s1, %s302
        %p304 = pneg %p103
        %p305 = pneg %p100
        %p306 = scmp.lt.s32.totalorder %s27, %s25
        %s307 = scalar_select %p306, %s27, %s25
        %s308 = smul.u32 8, %s307
        %p309 = scmp.lt.s32.totalorder %s24, 1
        %s310 = scalar_select %p309, %s24, 1
        %p311 = scmp.lt.s32.totalorder %s26, 3
        %s312 = scalar_select %p311, %s26, 3
        %p313 = scmp.lt.s32.totalorder %s308, 7
        %s314 = scalar_select %p313, %s308, 7
        %s315 = smul.addr %s312, 8
        %s316 = sadd.s32 %s314, %s315
        %s317 = smul.addr %s310, 32
        %s318 = sadd.s32 %s316, %s317
        %s319 = smul.addr %s318, 4
        %s320 = scalar_lea.vmem %s2, %s319
        %p321 = pneg %p137
        %p322 = pneg %p134
        %p323 = pneg %p158
        %p324 = pneg %p155
        %p325 = pneg %p186
        %p326 = pneg %p183
        %s327 = sand.u32 %s173, 1
        %s328 = scalar_lea.sflag [#allocation7], %s327
        %s329 = sand.u32 %s173, 1
        %s330 = smul.addr %s329, 64
        %s331 = scalar_lea.vmem [#allocation6], %s330
        %s332 = smul.u32 8, %s25
        %p333 = scmp.lt.s32.totalorder %s24, 1
        %s334 = scalar_select %p333, %s24, 1
        %p335 = scmp.lt.s32.totalorder %s26, 3
        %s336 = scalar_select %p335, %s26, 3
        %p337 = scmp.lt.s32.totalorder %s332, 7
        %s338 = scalar_select %p337, %s332, 7
        %s339 = smul.addr %s336, 8
        %s340 = sadd.s32 %s338, %s339
        %s341 = smul.addr %s334, 32
        %s342 = sadd.s32 %s340, %s341
        %s343 = smul.addr %s342, 4
        %s344 = scalar_lea.vmem %s0, %s343
        %s345 = smul.u32 8, %s25
        %p346 = scmp.lt.s32.totalorder %s27, %s25
        %s347 = scalar_select %p346, %s27, %s25
        %s348 = smul.u32 8, %s347
        %p349 = scmp.lt.s32.totalorder %s24, 1
        %s350 = scalar_select %p349, %s24, 1
        %p351 = scmp.lt.s32.totalorder %s26, 3
        %s352 = scalar_select %p351, %s26, 3
        %p353 = scmp.lt.s32.totalorder %s348, 7
        %s354 = scalar_select %p353, %s348, 7
        %s355 = smul.addr %s352, 8
        %s356 = sadd.s32 %s354, %s355
        %s357 = smul.addr %s350, 32
        %s358 = sadd.s32 %s356, %s357
        %s359 = smul.addr %s358, 4
        %s360 = scalar_lea.vmem %s1, %s359
        %p361 = scmp.lt.s32.totalorder %s27, %s25
        %s362 = scalar_select %p361, %s27, %s25
        %s363 = smul.u32 8, %s362
        %p364 = scmp.lt.s32.totalorder %s27, %s25
        %s365 = scalar_select %p364, %s27, %s25
        %s366 = smul.u32 8, %s365
        %p367 = scmp.lt.s32.totalorder %s24, 1
        %s368 = scalar_select %p367, %s24, 1
        %p369 = scmp.lt.s32.totalorder %s26, 3
        %s370 = scalar_select %p369, %s26, 3
        %p371 = scmp.lt.s32.totalorder %s366, 7
        %s372 = scalar_select %p371, %s366, 7
        %s373 = smul.addr %s370, 8
        %s374 = sadd.s32 %s372, %s373
        %s375 = smul.addr %s368, 32
        %s376 = sadd.s32 %s374, %s375
        %s377 = smul.addr %s376, 4
        %s378 = scalar_lea.vmem %s2, %s377
        %p379 = scmp.lt.s32.totalorder %s27, %s25
        %s380 = scalar_select %p379, %s27, %s25
        %s381 = smul.u32 8, %s380
        %s382 = smul.u32 8, %s25
        %p384 = scmp.eq.s32.totalorder %s26, 0
        %p385 = scmp.eq.s32.totalorder %s27, 0
        %p386 = pnand %p384, %p385
        %p387 = pneg %p386
        // Predicated region
        $region37: #{self_attention_forward.3} parent=35 // pred_check
          _
        $region38: #{self_attention_forward.3} parent=35 // pred_check_branch
          %389 = sbr.rel (%p386) target = $region40
        $region39: #{self_attention_forward.3} parent=35 // pred_region
          %390 = vst [vmem:[#allocation5] sm:$0xff] 0.0
          %391 = vst [vmem:[#allocation5 + $0x8] sm:$0xff] 0.0
          %392 = vst [vmem:[#allocation5 + $0x10] sm:$0xff] 0.0
          %393 = vst [vmem:[#allocation5 + $0x18] sm:$0xff] 0.0
          %394 = vst [vmem:[#allocation5 + $0x20] sm:$0xff] 0.0
          %395 = vst [vmem:[#allocation5 + $0x28] sm:$0xff] 0.0
          %396 = vst [vmem:[#allocation5 + $0x30] sm:$0xff] 0.0
          %397 = vst [vmem:[#allocation5 + $0x38] sm:$0xff] 0.0
        $region40: #{self_attention_forward.3} parent=35 // pred_fallthru
          _
        // Predicated region
        $region41: #{self_attention_forward.3} parent=35 // pred_check
          %p398 = pneg %p385
        $region42: #{self_attention_forward.3} parent=35 // pred_check_branch
          %400 = sbr.rel (%p398) target = $region44
        $region43: #{self_attention_forward.3} parent=35 // pred_region
          %vm401 = vcmask 7168
          %402 = vst.msk [vmem:[#allocation2] sm:$0xff] %vm401, -inf
          %403 = vst.msk [vmem:[#allocation2 + $0x8] sm:$0xff] %vm401, -inf
          %404 = vst.msk [vmem:[#allocation2 + $0x10] sm:$0xff] %vm401, -inf
          %405 = vst.msk [vmem:[#allocation2 + $0x18] sm:$0xff] %vm401, -inf
          %406 = vst.msk [vmem:[#allocation2 + $0x20] sm:$0xff] %vm401, -inf
          %407 = vst.msk [vmem:[#allocation2 + $0x28] sm:$0xff] %vm401, -inf
          %408 = vst.msk [vmem:[#allocation2 + $0x30] sm:$0xff] %vm401, -inf
          %409 = vst.msk [vmem:[#allocation2 + $0x38] sm:$0xff] %vm401, -inf
          %410 = vst.msk [vmem:[#allocation3] sm:$0xff] %vm401, 0.0
          %411 = vst.msk [vmem:[#allocation3 + $0x8] sm:$0xff] %vm401, 0.0
          %412 = vst.msk [vmem:[#allocation3 + $0x10] sm:$0xff] %vm401, 0.0
          %413 = vst.msk [vmem:[#allocation3 + $0x18] sm:$0xff] %vm401, 0.0
          %414 = vst.msk [vmem:[#allocation3 + $0x20] sm:$0xff] %vm401, 0.0
          %415 = vst.msk [vmem:[#allocation3 + $0x28] sm:$0xff] %vm401, 0.0
          %416 = vst.msk [vmem:[#allocation3 + $0x30] sm:$0xff] %vm401, 0.0
          %417 = vst.msk [vmem:[#allocation3 + $0x38] sm:$0xff] %vm401, 0.0
          %vm418 = vcmask 261120
          %419 = vst.msk [vmem:[#allocation4] sm:$0xff] %vm418, 0.0
          %420 = vst.msk [vmem:[#allocation4 + $0x8] sm:$0xff] %vm418, 0.0
          %421 = vst.msk [vmem:[#allocation4 + $0x10] sm:$0xff] %vm418, 0.0
          %422 = vst.msk [vmem:[#allocation4 + $0x18] sm:$0xff] %vm418, 0.0
          %423 = vst.msk [vmem:[#allocation4 + $0x20] sm:$0xff] %vm418, 0.0
          %424 = vst.msk [vmem:[#allocation4 + $0x28] sm:$0xff] %vm418, 0.0
          %425 = vst.msk [vmem:[#allocation4 + $0x30] sm:$0xff] %vm418, 0.0
          %426 = vst.msk [vmem:[#allocation4 + $0x38] sm:$0xff] %vm418, 0.0
        $region44: #{self_attention_forward.3} parent=35 // pred_fallthru
          _
        %p427 = scmp.le.s32.totalorder %s27, %s25
        // Predicated region
        $region45: #{self_attention_forward.3} parent=35 // pred_check
          %p428 = pneg %p427
        $region46: #{self_attention_forward.3} parent=35 // pred_check_branch
          %430 = sbr.rel (%p428) target = $region48
        $region47: #{self_attention_forward.3} parent=35 // pred_region
          %v431 = vld [vmem:[%s344] sm:$0xf]
          %v432 = vld [vmem:[%s344 + $0x4] sm:$0xf]
          %v433 = vld [vmem:[%s344 + $0x8] sm:$0xf]
          %v434 = vld [vmem:[%s344 + $0xc] sm:$0xf]
          %v435 = vld [vmem:[%s344 + $0x10] sm:$0xf]
          %v436 = vld [vmem:[%s344 + $0x14] sm:$0xf]
          %v437 = vld [vmem:[%s344 + $0x18] sm:$0xf]
          %v438 = vld [vmem:[%s344 + $0x1c] sm:$0xf]
          %v439 = vld [vmem:[%s360] sm:$0xf]
          %v440 = vld [vmem:[%s360 + $0x4] sm:$0xf]
          %v441 = vld [vmem:[%s360 + $0x8] sm:$0xf]
          %v442 = vld [vmem:[%s360 + $0xc] sm:$0xf]
          %v443 = vld [vmem:[%s360 + $0x10] sm:$0xf]
          %v444 = vld [vmem:[%s360 + $0x14] sm:$0xf]
          %v445 = vld [vmem:[%s360 + $0x18] sm:$0xf]
          %v446 = vld [vmem:[%s360 + $0x1c] sm:$0xf]
          %v455 = vunpack.c.l.b16 %v431
          %v456 = vunpack.c.l.b16 %v432
          %v457 = vunpack.c.l.b16 %v433
          %v458 = vunpack.c.l.b16 %v434
          %v459 = vunpack.c.l.b16 %v435
          %v460 = vunpack.c.l.b16 %v436
          %v461 = vunpack.c.l.b16 %v437
          %v462 = vunpack.c.l.b16 %v438
          %v463 = vpack.c.b16 %v456, %v455
          %v464 = vpack.c.b16 %v458, %v457
          %v465 = vpack.c.b16 %v460, %v459
          %v466 = vpack.c.b16 %v462, %v461
          %v475 = vunpack.c.l.b16 %v439
          %v476 = vunpack.c.l.b16 %v440
          %v477 = vunpack.c.l.b16 %v441
          %v478 = vunpack.c.l.b16 %v442
          %v479 = vunpack.c.l.b16 %v443
          %v480 = vunpack.c.l.b16 %v444
          %v481 = vunpack.c.l.b16 %v445
          %v482 = vunpack.c.l.b16 %v446
          %v483 = vpack.c.b16 %v476, %v475
          %v484 = vpack.c.b16 %v478, %v477
          %v485 = vpack.c.b16 %v480, %v479
          %v486 = vpack.c.b16 %v482, %v481
          %vm487 = vcmask 261120
          %v489 = vsel %vm487, %v463, 0
          %v492 = vsel %vm487, %v464, 0
          %v495 = vsel %vm487, %v465, 0
          %v498 = vsel %vm487, %v466, 0
          %v501 = vsel %vm487, %v483, 0
          %v504 = vsel %vm487, %v484, 0
          %v507 = vsel %vm487, %v485, 0
          %v510 = vsel %vm487, %v486, 0
          %512 = vmatpush.bf16.xpose.msra.mxu0 0
          %513 = vmatpush.bf16.xpose.msra.mxu0 0
          %514 = vmatpush.bf16.xpose.msra.mxu0 0
          %515 = vmatpush.bf16.xpose.msra.mxu0 0
          %516 = vmatpush.bf16.xpose.msra.mxu0 %v510
          %517 = vmatpush.bf16.xpose.msra.mxu0 %v507
          %518 = vmatpush.bf16.xpose.msra.mxu0 %v504
          %519 = vmatpush.bf16.xpose.msra.mxu0 %v501
          %520 = vmatmul.bf16.gmra.mxu0 %v489
          %v521 = vpop.f32.mrf.mxu0
          %v522 = vadd.f32 0.0, %v521
          %v523 = vpop.f32.mrf.mxu0
          %v524 = vadd.f32 0.0, %v523
          %525 = vmatmul.bf16.gmra.mxu0 %v492
          %v526 = vpop.f32.mrf.mxu0
          %v527 = vadd.f32 0.0, %v526
          %v528 = vpop.f32.mrf.mxu0
          %v529 = vadd.f32 0.0, %v528
          %530 = vmatmul.bf16.gmra.mxu0 %v495
          %v531 = vpop.f32.mrf.mxu0
          %v532 = vadd.f32 0.0, %v531
          %v533 = vpop.f32.mrf.mxu0
          %v534 = vadd.f32 0.0, %v533
          %535 = vmatmul.bf16.gmra.mxu0 %v498
          %v536 = vpop.f32.mrf.mxu0
          %v537 = vadd.f32 0.0, %v536
          %v538 = vpop.f32.mrf.mxu0
          %v539 = vadd.f32 0.0, %v538
          %540 = vdwg.mxu0
          %p541 = scmp.eq.s32.totalorder %s27, %s25
          // Predicated region
          $region49: #{self_attention_forward.3} parent=47 // pred_check
            %p542 = pneg %p541
          $region50: #{self_attention_forward.3} parent=47 // pred_check_branch
            %544 = sbr.rel (%p542) target = $region52
          $region51: #{self_attention_forward.3} parent=47 // pred_region
            %v545 = vlaneseq
            %v546 = vshrl.u32 %v545, 7
            %v547 = vadd.s32 %v546, 8
            %v548 = vadd.s32 %v546, 16
            %v549 = vadd.s32 %v546, 24
            %v550 = vadd.s32 %v546, 32
            %v551 = vadd.s32 %v546, 40
            %v552 = vadd.s32 %v546, 48
            %v553 = vadd.s32 %v546, 56
            %v554 = vlaneseq
            %v555 = vand.u32 %v554, 127
            %vm556 = vcmp.ge.s32.totalorder %v546, %v555
            %vm557 = vcmp.ge.s32.totalorder %v547, %v555
            %vm558 = vcmp.ge.s32.totalorder %v548, %v555
            %vm559 = vcmp.ge.s32.totalorder %v549, %v555
            %vm560 = vcmp.ge.s32.totalorder %v550, %v555
            %vm561 = vcmp.ge.s32.totalorder %v551, %v555
            %vm562 = vcmp.ge.s32.totalorder %v552, %v555
            %vm563 = vcmp.ge.s32.totalorder %v553, %v555
            %v564 = vsel %vm556, %v522, -1e+30
            %v565 = vsel %vm557, %v524, -1e+30
            %v566 = vsel %vm558, %v527, -1e+30
            %v567 = vsel %vm559, %v529, -1e+30
            %v568 = vsel %vm560, %v532, -1e+30
            %v569 = vsel %vm561, %v534, -1e+30
            %v570 = vsel %vm562, %v537, -1e+30
            %v571 = vsel %vm563, %v539, -1e+30
          $region52: #{self_attention_forward.3} parent=47 // pred_fallthru
            %v572 = vphi 0, %v564
            %v573 = vphi 0, %v565
            %v574 = vphi 0, %v566
            %v575 = vphi 0, %v567
            %v576 = vphi 0, %v568
            %v577 = vphi 0, %v569
            %v578 = vphi 0, %v570
            %v579 = vphi 0, %v571
          %p580 = pneg %p541
          // Predicated region
          $region53: #{self_attention_forward.3} parent=47 // pred_check
            _
          $region54: #{self_attention_forward.3} parent=47 // pred_check_branch
            %582 = sbr.rel (%p541) target = $region56
          $region55: #{self_attention_forward.3} parent=47 // pred_region
            _
          $region56: #{self_attention_forward.3} parent=47 // pred_fallthru
            %v583 = vphi %v572, %v522
            %v584 = vphi %v573, %v524
            %v585 = vphi %v574, %v527
            %v586 = vphi %v575, %v529
            %v587 = vphi %v576, %v532
            %v588 = vphi %v577, %v534
            %v589 = vphi %v578, %v537
            %v590 = vphi %v579, %v539
          %v591 = vld [vmem:[#allocation2] sm:$0xff]
          %v592 = vld [vmem:[#allocation2 + $0x8] sm:$0xff]
          %v593 = vld [vmem:[#allocation2 + $0x10] sm:$0xff]
          %v594 = vld [vmem:[#allocation2 + $0x18] sm:$0xff]
          %v595 = vld [vmem:[#allocation2 + $0x20] sm:$0xff]
          %v596 = vld [vmem:[#allocation2 + $0x28] sm:$0xff]
          %v597 = vld [vmem:[#allocation2 + $0x30] sm:$0xff]
          %v598 = vld [vmem:[#allocation2 + $0x38] sm:$0xff]
          %vm599 = vcmask 523264
          %v600 = vsel %vm599, %v583, -inf
          %601 = vmax.xlane.f32.xlu0 %v600
          %v602 = vpop.xlane.xlu0 %601
          %v603 = vsel %vm599, %v584, -inf
          %604 = vmax.xlane.f32.xlu0 %v603
          %v605 = vpop.xlane.xlu0 %604
          %v606 = vsel %vm599, %v585, -inf
          %607 = vmax.xlane.f32.xlu0 %v606
          %v608 = vpop.xlane.xlu0 %607
          %v609 = vsel %vm599, %v586, -inf
          %610 = vmax.xlane.f32.xlu0 %v609
          %v611 = vpop.xlane.xlu0 %610
          %v612 = vsel %vm599, %v587, -inf
          %613 = vmax.xlane.f32.xlu0 %v612
          %v614 = vpop.xlane.xlu0 %613
          %v615 = vsel %vm599, %v588, -inf
          %616 = vmax.xlane.f32.xlu0 %v615
          %v617 = vpop.xlane.xlu0 %616
          %v618 = vsel %vm599, %v589, -inf
          %619 = vmax.xlane.f32.xlu0 %v618
          %v620 = vpop.xlane.xlu0 %619
          %v621 = vsel %vm599, %v590, -inf
          %622 = vmax.xlane.f32.xlu0 %v621
          %v623 = vpop.xlane.xlu0 %622
          %v624 = vmax.f32 %v591, %v602
          %v625 = vmax.f32 %v592, %v605
          %v626 = vmax.f32 %v593, %v608
          %v627 = vmax.f32 %v594, %v611
          %v628 = vmax.f32 %v595, %v614
          %v629 = vmax.f32 %v596, %v617
          %v630 = vmax.f32 %v597, %v620
          %v631 = vmax.f32 %v598, %v623
          %v632 = vsub.f32 %v591, %v624
          %v633 = vsub.f32 %v592, %v625
          %v634 = vsub.f32 %v593, %v626
          %v635 = vsub.f32 %v594, %v627
          %v636 = vsub.f32 %v595, %v628
          %v637 = vsub.f32 %v596, %v629
          %v638 = vsub.f32 %v597, %v630
          %v639 = vsub.f32 %v598, %v631
          %v640 = vmul.f32 %v632, 1.442695
          %v641 = vpow.pop %v640
          %v642 = vmul.f32 %v633, 1.442695
          %v643 = vpow.pop %v642
          %v644 = vmul.f32 %v634, 1.442695
          %v645 = vpow.pop %v644
          %v646 = vmul.f32 %v635, 1.442695
          %v647 = vpow.pop %v646
          %v648 = vmul.f32 %v636, 1.442695
          %v649 = vpow.pop %v648
          %v650 = vmul.f32 %v637, 1.442695
          %v651 = vpow.pop %v650
          %v652 = vmul.f32 %v638, 1.442695
          %v653 = vpow.pop %v652
          %v654 = vmul.f32 %v639, 1.442695
          %v655 = vpow.pop %v654
          %657 = vset.pattern.permute.xlu0 0
          %658 = vperm.xlu0 %657, %v624
          %v659 = vpop.permute.xlu0 %658
          %662 = vset.pattern.permute.xlu0 0
          %663 = vperm.xlu0 %662, %v625
          %v664 = vpop.permute.xlu0 %663
          %667 = vset.pattern.permute.xlu0 0
          %668 = vperm.xlu0 %667, %v626
          %v669 = vpop.permute.xlu0 %668
          %672 = vset.pattern.permute.xlu0 0
          %673 = vperm.xlu0 %672, %v627
          %v674 = vpop.permute.xlu0 %673
          %677 = vset.pattern.permute.xlu0 0
          %678 = vperm.xlu0 %677, %v628
          %v679 = vpop.permute.xlu0 %678
          %682 = vset.pattern.permute.xlu0 0
          %683 = vperm.xlu0 %682, %v629
          %v684 = vpop.permute.xlu0 %683
          %687 = vset.pattern.permute.xlu0 0
          %688 = vperm.xlu0 %687, %v630
          %v689 = vpop.permute.xlu0 %688
          %692 = vset.pattern.permute.xlu0 0
          %693 = vperm.xlu0 %692, %v631
          %v694 = vpop.permute.xlu0 %693
          %v696 = vsub.f32 %v583, %v659
          %v697 = vsub.f32 %v584, %v664
          %v698 = vsub.f32 %v585, %v669
          %v699 = vsub.f32 %v586, %v674
          %v700 = vsub.f32 %v587, %v679
          %v701 = vsub.f32 %v588, %v684
          %v702 = vsub.f32 %v589, %v689
          %v703 = vsub.f32 %v590, %v694
          %v704 = vmul.f32 %v696, 1.442695
          %v705 = vpow.pop %v704
          %v706 = vmul.f32 %v697, 1.442695
          %v707 = vpow.pop %v706
          %v708 = vmul.f32 %v698, 1.442695
          %v709 = vpow.pop %v708
          %v710 = vmul.f32 %v699, 1.442695
          %v711 = vpow.pop %v710
          %v712 = vmul.f32 %v700, 1.442695
          %v713 = vpow.pop %v712
          %v714 = vmul.f32 %v701, 1.442695
          %v715 = vpow.pop %v714
          %v716 = vmul.f32 %v702, 1.442695
          %v717 = vpow.pop %v716
          %v718 = vmul.f32 %v703, 1.442695
          %v719 = vpow.pop %v718
          %v720 = vld [vmem:[#allocation3] sm:$0xff]
          %v721 = vld [vmem:[#allocation3 + $0x8] sm:$0xff]
          %v722 = vld [vmem:[#allocation3 + $0x10] sm:$0xff]
          %v723 = vld [vmem:[#allocation3 + $0x18] sm:$0xff]
          %v724 = vld [vmem:[#allocation3 + $0x20] sm:$0xff]
          %v725 = vld [vmem:[#allocation3 + $0x28] sm:$0xff]
          %v726 = vld [vmem:[#allocation3 + $0x30] sm:$0xff]
          %v727 = vld [vmem:[#allocation3 + $0x38] sm:$0xff]
          %v728 = vmul.f32 %v641, %v720
          %v729 = vmul.f32 %v643, %v721
          %v730 = vmul.f32 %v645, %v722
          %v731 = vmul.f32 %v647, %v723
          %v732 = vmul.f32 %v649, %v724
          %v733 = vmul.f32 %v651, %v725
          %v734 = vmul.f32 %v653, %v726
          %v735 = vmul.f32 %v655, %v727
          %v736 = vsel %vm599, %v705, 0.0
          %737 = vadd.xlane.f32.xlu0 %v736
          %v738 = vpop.xlane.xlu0 %737
          %v739 = vsel %vm599, %v707, 0.0
          %740 = vadd.xlane.f32.xlu0 %v739
          %v741 = vpop.xlane.xlu0 %740
          %v742 = vsel %vm599, %v709, 0.0
          %743 = vadd.xlane.f32.xlu0 %v742
          %v744 = vpop.xlane.xlu0 %743
          %v745 = vsel %vm599, %v711, 0.0
          %746 = vadd.xlane.f32.xlu0 %v745
          %v747 = vpop.xlane.xlu0 %746
          %v748 = vsel %vm599, %v713, 0.0
          %749 = vadd.xlane.f32.xlu0 %v748
          %v750 = vpop.xlane.xlu0 %749
          %v751 = vsel %vm599, %v715, 0.0
          %752 = vadd.xlane.f32.xlu0 %v751
          %v753 = vpop.xlane.xlu0 %752
          %v754 = vsel %vm599, %v717, 0.0
          %755 = vadd.xlane.f32.xlu0 %v754
          %v756 = vpop.xlane.xlu0 %755
          %v757 = vsel %vm599, %v719, 0.0
          %758 = vadd.xlane.f32.xlu0 %v757
          %v759 = vpop.xlane.xlu0 %758
          %v760 = vadd.f32 %v728, %v738
          %v761 = vadd.f32 %v729, %v741
          %v762 = vadd.f32 %v730, %v744
          %v763 = vadd.f32 %v731, %v747
          %v764 = vadd.f32 %v732, %v750
          %v765 = vadd.f32 %v733, %v753
          %v766 = vadd.f32 %v734, %v756
          %v767 = vadd.f32 %v735, %v759
          %vm768 = vcmask 7168
          %769 = vst.msk [vmem:[#allocation3] sm:$0xff] %vm768, %v760
          %770 = vst.msk [vmem:[#allocation3 + $0x8] sm:$0xff] %vm768, %v761
          %771 = vst.msk [vmem:[#allocation3 + $0x10] sm:$0xff] %vm768, %v762
          %772 = vst.msk [vmem:[#allocation3 + $0x18] sm:$0xff] %vm768, %v763
          %773 = vst.msk [vmem:[#allocation3 + $0x20] sm:$0xff] %vm768, %v764
          %774 = vst.msk [vmem:[#allocation3 + $0x28] sm:$0xff] %vm768, %v765
          %775 = vst.msk [vmem:[#allocation3 + $0x30] sm:$0xff] %vm768, %v766
          %776 = vst.msk [vmem:[#allocation3 + $0x38] sm:$0xff] %vm768, %v767
          %v777 = vld [vmem:[#allocation4] sm:$0xff]
          %v778 = vld [vmem:[#allocation4 + $0x8] sm:$0xff]
          %v779 = vld [vmem:[#allocation4 + $0x10] sm:$0xff]
          %v780 = vld [vmem:[#allocation4 + $0x18] sm:$0xff]
          %v781 = vld [vmem:[#allocation4 + $0x20] sm:$0xff]
          %v782 = vld [vmem:[#allocation4 + $0x28] sm:$0xff]
          %v783 = vld [vmem:[#allocation4 + $0x30] sm:$0xff]
          %v784 = vld [vmem:[#allocation4 + $0x38] sm:$0xff]
          %786 = vset.pattern.permute.xlu0 0
          %787 = vperm.xlu0 %786, %v641
          %v788 = vpop.permute.xlu0 %787
          %791 = vset.pattern.permute.xlu0 0
          %792 = vperm.xlu0 %791, %v643
          %v793 = vpop.permute.xlu0 %792
          %796 = vset.pattern.permute.xlu0 0
          %797 = vperm.xlu0 %796, %v645
          %v798 = vpop.permute.xlu0 %797
          %801 = vset.pattern.permute.xlu0 0
          %802 = vperm.xlu0 %801, %v647
          %v803 = vpop.permute.xlu0 %802
          %806 = vset.pattern.permute.xlu0 0
          %807 = vperm.xlu0 %806, %v649
          %v808 = vpop.permute.xlu0 %807
          %811 = vset.pattern.permute.xlu0 0
          %812 = vperm.xlu0 %811, %v651
          %v813 = vpop.permute.xlu0 %812
          %816 = vset.pattern.permute.xlu0 0
          %817 = vperm.xlu0 %816, %v653
          %v818 = vpop.permute.xlu0 %817
          %821 = vset.pattern.permute.xlu0 0
          %822 = vperm.xlu0 %821, %v655
          %v823 = vpop.permute.xlu0 %822
          %v825 = vmul.f32 %v788, %v777
          %v826 = vmul.f32 %v793, %v778
          %v827 = vmul.f32 %v798, %v779
          %v828 = vmul.f32 %v803, %v780
          %v829 = vmul.f32 %v808, %v781
          %v830 = vmul.f32 %v813, %v782
          %v831 = vmul.f32 %v818, %v783
          %v832 = vmul.f32 %v823, %v784
          %v833 = vpack.c.bf16 %v707, %v705
          %v834 = vpack.c.bf16 %v711, %v709
          %v835 = vpack.c.bf16 %v715, %v713
          %v836 = vpack.c.bf16 %v719, %v717
          %v837 = vld [vmem:[%s378] sm:$0xf]
          %v838 = vld [vmem:[%s378 + $0x4] sm:$0xf]
          %v839 = vld [vmem:[%s378 + $0x8] sm:$0xf]
          %v840 = vld [vmem:[%s378 + $0xc] sm:$0xf]
          %v841 = vld [vmem:[%s378 + $0x10] sm:$0xf]
          %v842 = vld [vmem:[%s378 + $0x14] sm:$0xf]
          %v843 = vld [vmem:[%s378 + $0x18] sm:$0xf]
          %v844 = vld [vmem:[%s378 + $0x1c] sm:$0xf]
          %v853 = vunpack.c.l.b16 %v837
          %v854 = vunpack.c.l.b16 %v838
          %v855 = vunpack.c.l.b16 %v839
          %v856 = vunpack.c.l.b16 %v840
          %v857 = vunpack.c.l.b16 %v841
          %v858 = vunpack.c.l.b16 %v842
          %v859 = vunpack.c.l.b16 %v843
          %v860 = vunpack.c.l.b16 %v844
          %v861 = vpack.c.b16 %v854, %v853
          %v862 = vpack.c.b16 %v856, %v855
          %v863 = vpack.c.b16 %v858, %v857
          %v864 = vpack.c.b16 %v860, %v859
          %v870 = vsel %vm599, %v833, 0
          %v873 = vsel %vm599, %v834, 0
          %v876 = vsel %vm599, %v835, 0
          %v879 = vsel %vm599, %v836, 0
          %881 = vmatpush.bf16.msra.mxu0 0
          %882 = vmatpush.bf16.msra.mxu0 0
          %883 = vmatpush.bf16.msra.mxu0 0
          %884 = vmatpush.bf16.msra.mxu0 0
          %885 = vmatpush.bf16.msra.mxu0 %v864
          %886 = vmatpush.bf16.msra.mxu0 %v863
          %887 = vmatpush.bf16.msra.mxu0 %v862
          %888 = vmatpush.bf16.msra.mxu0 %v861
          %889 = vmatmul.bf16.gmra.mxu0 %v870
          %v890 = vpop.f32.mrf.mxu0
          %v891 = vadd.f32 0.0, %v890
          %v892 = vpop.f32.mrf.mxu0
          %v893 = vadd.f32 0.0, %v892
          %894 = vmatmul.bf16.gmra.mxu0 %v873
          %v895 = vpop.f32.mrf.mxu0
          %v896 = vadd.f32 0.0, %v895
          %v897 = vpop.f32.mrf.mxu0
          %v898 = vadd.f32 0.0, %v897
          %899 = vmatmul.bf16.gmra.mxu0 %v876
          %v900 = vpop.f32.mrf.mxu0
          %v901 = vadd.f32 0.0, %v900
          %v902 = vpop.f32.mrf.mxu0
          %v903 = vadd.f32 0.0, %v902
          %904 = vmatmul.bf16.gmra.mxu0 %v879
          %v905 = vpop.f32.mrf.mxu0
          %v906 = vadd.f32 0.0, %v905
          %v907 = vpop.f32.mrf.mxu0
          %v908 = vadd.f32 0.0, %v907
          %909 = vdwg.mxu0
          %v910 = vadd.f32 %v825, %v891
          %v911 = vadd.f32 %v826, %v893
          %v912 = vadd.f32 %v827, %v896
          %v913 = vadd.f32 %v828, %v898
          %v914 = vadd.f32 %v829, %v901
          %v915 = vadd.f32 %v830, %v903
          %v916 = vadd.f32 %v831, %v906
          %v917 = vadd.f32 %v832, %v908
          %918 = vst.msk [vmem:[#allocation4] sm:$0xff] %vm487, %v910
          %919 = vst.msk [vmem:[#allocation4 + $0x8] sm:$0xff] %vm487, %v911
          %920 = vst.msk [vmem:[#allocation4 + $0x10] sm:$0xff] %vm487, %v912
          %921 = vst.msk [vmem:[#allocation4 + $0x18] sm:$0xff] %vm487, %v913
          %922 = vst.msk [vmem:[#allocation4 + $0x20] sm:$0xff] %vm487, %v914
          %923 = vst.msk [vmem:[#allocation4 + $0x28] sm:$0xff] %vm487, %v915
          %924 = vst.msk [vmem:[#allocation4 + $0x30] sm:$0xff] %vm487, %v916
          %925 = vst.msk [vmem:[#allocation4 + $0x38] sm:$0xff] %vm487, %v917
          %926 = vst.msk [vmem:[#allocation2] sm:$0xff] %vm768, %v624
          %927 = vst.msk [vmem:[#allocation2 + $0x8] sm:$0xff] %vm768, %v625
          %928 = vst.msk [vmem:[#allocation2 + $0x10] sm:$0xff] %vm768, %v626
          %929 = vst.msk [vmem:[#allocation2 + $0x18] sm:$0xff] %vm768, %v627
          %930 = vst.msk [vmem:[#allocation2 + $0x20] sm:$0xff] %vm768, %v628
          %931 = vst.msk [vmem:[#allocation2 + $0x28] sm:$0xff] %vm768, %v629
          %932 = vst.msk [vmem:[#allocation2 + $0x30] sm:$0xff] %vm768, %v630
          %933 = vst.msk [vmem:[#allocation2 + $0x38] sm:$0xff] %vm768, %v631
        $region48: #{self_attention_forward.3} parent=35 // pred_fallthru
          _
        // Predicated region
        $region57: #{self_attention_forward.3} parent=35 // pred_check
          %p934 = pneg %p385
        $region58: #{self_attention_forward.3} parent=35 // pred_check_branch
          %936 = sbr.rel (%p934) target = $region60
        $region59: #{self_attention_forward.3} parent=35 // pred_region
          %v937 = vld [vmem:[#allocation4] sm:$0xff]
          %v938 = vld [vmem:[#allocation4 + $0x8] sm:$0xff]
          %v939 = vld [vmem:[#allocation4 + $0x10] sm:$0xff]
          %v940 = vld [vmem:[#allocation4 + $0x18] sm:$0xff]
          %v941 = vld [vmem:[#allocation4 + $0x20] sm:$0xff]
          %v942 = vld [vmem:[#allocation4 + $0x28] sm:$0xff]
          %v943 = vld [vmem:[#allocation4 + $0x30] sm:$0xff]
          %v944 = vld [vmem:[#allocation4 + $0x38] sm:$0xff]
          %v945 = vld [vmem:[#allocation3] sm:$0xff]
          %v946 = vld [vmem:[#allocation3 + $0x8] sm:$0xff]
          %v947 = vld [vmem:[#allocation3 + $0x10] sm:$0xff]
          %v948 = vld [vmem:[#allocation3 + $0x18] sm:$0xff]
          %v949 = vld [vmem:[#allocation3 + $0x20] sm:$0xff]
          %v950 = vld [vmem:[#allocation3 + $0x28] sm:$0xff]
          %v951 = vld [vmem:[#allocation3 + $0x30] sm:$0xff]
          %v952 = vld [vmem:[#allocation3 + $0x38] sm:$0xff]
          %v953 = vrcp.pop %v945
          %v954 = vrcp.pop %v946
          %v955 = vrcp.pop %v947
          %v956 = vrcp.pop %v948
          %v957 = vrcp.pop %v949
          %v958 = vrcp.pop %v950
          %v959 = vrcp.pop %v951
          %v960 = vrcp.pop %v952
          %962 = vset.pattern.permute.xlu0 0
          %963 = vperm.xlu0 %962, %v953
          %v964 = vpop.permute.xlu0 %963
          %967 = vset.pattern.permute.xlu0 0
          %968 = vperm.xlu0 %967, %v954
          %v969 = vpop.permute.xlu0 %968
          %972 = vset.pattern.permute.xlu0 0
          %973 = vperm.xlu0 %972, %v955
          %v974 = vpop.permute.xlu0 %973
          %977 = vset.pattern.permute.xlu0 0
          %978 = vperm.xlu0 %977, %v956
          %v979 = vpop.permute.xlu0 %978
          %982 = vset.pattern.permute.xlu0 0
          %983 = vperm.xlu0 %982, %v957
          %v984 = vpop.permute.xlu0 %983
          %987 = vset.pattern.permute.xlu0 0
          %988 = vperm.xlu0 %987, %v958
          %v989 = vpop.permute.xlu0 %988
          %992 = vset.pattern.permute.xlu0 0
          %993 = vperm.xlu0 %992, %v959
          %v994 = vpop.permute.xlu0 %993
          %997 = vset.pattern.permute.xlu0 0
          %998 = vperm.xlu0 %997, %v960
          %v999 = vpop.permute.xlu0 %998
          %v1001 = vmul.f32 %v937, %v964
          %v1002 = vmul.f32 %v938, %v969
          %v1003 = vmul.f32 %v939, %v974
          %v1004 = vmul.f32 %v940, %v979
          %v1005 = vmul.f32 %v941, %v984
          %v1006 = vmul.f32 %v942, %v989
          %v1007 = vmul.f32 %v943, %v994
          %v1008 = vmul.f32 %v944, %v999
          %v1009 = vpack.c.bf16 %v1002, %v1001
          %v1010 = vpack.c.bf16 %v1004, %v1003
          %v1011 = vpack.c.bf16 %v1006, %v1005
          %v1012 = vpack.c.bf16 %v1008, %v1007
          %v1013 = vld [vmem:[#allocation5] sm:$0xff]
          %v1014 = vld [vmem:[#allocation5 + $0x8] sm:$0xff]
          %v1015 = vld [vmem:[#allocation5 + $0x10] sm:$0xff]
          %v1016 = vld [vmem:[#allocation5 + $0x18] sm:$0xff]
          %v1017 = vld [vmem:[#allocation5 + $0x20] sm:$0xff]
          %v1018 = vld [vmem:[#allocation5 + $0x28] sm:$0xff]
          %v1019 = vld [vmem:[#allocation5 + $0x30] sm:$0xff]
          %v1020 = vld [vmem:[#allocation5 + $0x38] sm:$0xff]
          %s1021 = smul.u32 %s26, 4
          %s1022 = smul.addr %s1021, 4
          %s1023 = scalar_lea.vmem %s3, %s1022
          %v1024 = vld [vmem:[%s1023] sm:$0xf]
          %v1025 = vld [vmem:[%s1023 + $0x4] sm:$0xf]
          %v1026 = vld [vmem:[%s1023 + $0x8] sm:$0xf]
          %v1027 = vld [vmem:[%s1023 + $0xc] sm:$0xf]
          %v1032 = vunpack.c.l.b16 %v1024
          %v1033 = vunpack.c.l.b16 %v1025
          %v1034 = vunpack.c.l.b16 %v1026
          %v1035 = vunpack.c.l.b16 %v1027
          %v1036 = vpack.c.b16 %v1033, %v1032
          %v1037 = vpack.c.b16 %v1035, %v1034
          %vm1040 = vcmask 261120
          %v1042 = vsel %vm1040, %v1009, 0
          %v1045 = vsel %vm1040, %v1010, 0
          %v1048 = vsel %vm1040, %v1011, 0
          %v1051 = vsel %vm1040, %v1012, 0
          %1053 = vmatpush.bf16.msra.mxu0 0
          %1054 = vmatpush.bf16.msra.mxu0 0
          %1055 = vmatpush.bf16.msra.mxu0 0
          %1056 = vmatpush.bf16.msra.mxu0 0
          %1057 = vmatpush.bf16.msra.mxu0 0
          %1058 = vmatpush.bf16.msra.mxu0 0
          %1059 = vmatpush.bf16.msra.mxu0 %v1037
          %1060 = vmatpush.bf16.msra.mxu0 %v1036
          %1061 = vmatmul.bf16.gmra.mxu0 %v1042
          %v1062 = vpop.f32.mrf.mxu0
          %v1063 = vadd.f32 0.0, %v1062
          %v1064 = vpop.f32.mrf.mxu0
          %v1065 = vadd.f32 0.0, %v1064
          %1066 = vmatmul.bf16.gmra.mxu0 %v1045
          %v1067 = vpop.f32.mrf.mxu0
          %v1068 = vadd.f32 0.0, %v1067
          %v1069 = vpop.f32.mrf.mxu0
          %v1070 = vadd.f32 0.0, %v1069
          %1071 = vmatmul.bf16.gmra.mxu0 %v1048
          %v1072 = vpop.f32.mrf.mxu0
          %v1073 = vadd.f32 0.0, %v1072
          %v1074 = vpop.f32.mrf.mxu0
          %v1075 = vadd.f32 0.0, %v1074
          %1076 = vmatmul.bf16.gmra.mxu0 %v1051
          %v1077 = vpop.f32.mrf.mxu0
          %v1078 = vadd.f32 0.0, %v1077
          %v1079 = vpop.f32.mrf.mxu0
          %v1080 = vadd.f32 0.0, %v1079
          %1081 = vdwg.mxu0
          %v1082 = vadd.f32 %v1013, %v1063
          %v1083 = vadd.f32 %v1014, %v1065
          %v1084 = vadd.f32 %v1015, %v1068
          %v1085 = vadd.f32 %v1016, %v1070
          %v1086 = vadd.f32 %v1017, %v1073
          %v1087 = vadd.f32 %v1018, %v1075
          %v1088 = vadd.f32 %v1019, %v1078
          %v1089 = vadd.f32 %v1020, %v1080
          %1090 = vst [vmem:[#allocation5] sm:$0xff] %v1082
          %1091 = vst [vmem:[#allocation5 + $0x8] sm:$0xff] %v1083
          %1092 = vst [vmem:[#allocation5 + $0x10] sm:$0xff] %v1084
          %1093 = vst [vmem:[#allocation5 + $0x18] sm:$0xff] %v1085
          %1094 = vst [vmem:[#allocation5 + $0x20] sm:$0xff] %v1086
          %1095 = vst [vmem:[#allocation5 + $0x28] sm:$0xff] %v1087
          %1096 = vst [vmem:[#allocation5 + $0x30] sm:$0xff] %v1088
          %1097 = vst [vmem:[#allocation5 + $0x38] sm:$0xff] %v1089
        $region60: #{self_attention_forward.3} parent=35 // pred_fallthru
          _
        %p1098 = scmp.eq.s32.totalorder %s26, 3
        %p1099 = pnand %p1098, %p385
        %p1100 = pneg %p1099
        // Predicated region
        $region61: #{self_attention_forward.3} parent=35 // pred_check
          _
        $region62: #{self_attention_forward.3} parent=35 // pred_check_branch
          %1102 = sbr.rel (%p1099) target = $region64
        $region63: #{self_attention_forward.3} parent=35 // pred_region
          %v1103 = vld [vmem:[#allocation5] sm:$0xff]
          %v1104 = vld [vmem:[#allocation5 + $0x8] sm:$0xff]
          %v1105 = vld [vmem:[#allocation5 + $0x10] sm:$0xff]
          %v1106 = vld [vmem:[#allocation5 + $0x18] sm:$0xff]
          %v1107 = vld [vmem:[#allocation5 + $0x20] sm:$0xff]
          %v1108 = vld [vmem:[#allocation5 + $0x28] sm:$0xff]
          %v1109 = vld [vmem:[#allocation5 + $0x30] sm:$0xff]
          %v1110 = vld [vmem:[#allocation5 + $0x38] sm:$0xff]
          %1111 = vst [vmem:[%s331] sm:$0xff] %v1103
          %1112 = vst [vmem:[%s331 + $0x8] sm:$0xff] %v1104
          %1113 = vst [vmem:[%s331 + $0x10] sm:$0xff] %v1105
          %1114 = vst [vmem:[%s331 + $0x18] sm:$0xff] %v1106
          %1115 = vst [vmem:[%s331 + $0x20] sm:$0xff] %v1107
          %1116 = vst [vmem:[%s331 + $0x28] sm:$0xff] %v1108
          %1117 = vst [vmem:[%s331 + $0x30] sm:$0xff] %v1109
          %1118 = vst [vmem:[%s331 + $0x38] sm:$0xff] %v1110
        $region64: #{self_attention_forward.3} parent=35 // pred_fallthru
          _
        %s1119 = sand.u32 %s173, 1
        %s1120 = scalar_lea.sflag [#allocation7], %s1119
        %s1121 = sand.u32 %s173, 1
        %s1122 = smul.addr %s1121, 64
        %s1123 = scalar_lea.vmem [#allocation6], %s1122
        // Predicated region
        $region65: #{self_attention_forward.3} parent=35 // pred_check
          %p1124 = pneg %p183
        $region66: #{self_attention_forward.3} parent=35 // pred_check_branch
          %1126 = sbr.rel (%p1124) target = $region68
        $region67: #{self_attention_forward.3} parent=35 // pred_region
          %s1127 = smul.u32 8, %s25
          %1129 = vsyncadd %s1120, 0
          %s1130 = smul.addr %s24, 8
          %s1131 = sadd.s32 %s1127, %s1130
          %s1132 = smul.addr %s1131, 8
          %s1133 = scalar_lea.hbm %s4, %s1132
          %s1134 = sshll.u32 %s1123, 4
          %s1135 = int_to_ptr.vmem [resolvable:$true] %s1134
          %s1136 = sshll.u32 %s1133, 4
          %s1137 = int_to_ptr.hbm [resolvable:$true] %s1136
          %1142 = dma.vmem_to_hbm [thread:$0]  %s1135, 1024, %s1137, %s1120, 128, 128, 8
        $region68: #{self_attention_forward.3} parent=35 // pred_fallthru
          _
      $region36: #{self_attention_forward.3} parent=5 // pred_fallthru
        _
      %p1143 = scmp.le.s32.totalorder 2, %s13
      // Predicated region
      $region69: #{self_attention_forward.3} parent=5 // pred_check
        %p1144 = pneg %p1143
      $region70: #{self_attention_forward.3} parent=5 // pred_check_branch
        %1146 = sbr.rel (%p1144) target = $region72
      $region71: #{self_attention_forward.3} parent=5 // pred_region
        %s1147 = ssub.s32 %s13, 2
        // Predicated region
        $region73: #{self_attention_forward.3} parent=71 // pred_check
          %p1148 = pneg %p189
        $region74: #{self_attention_forward.3} parent=71 // pred_check_branch
          %1150 = sbr.rel (%p1148) target = $region76
        $region75: #{self_attention_forward.3} parent=71 // pred_region
          %s1151 = sand.u32 %s174, 1
          %s1152 = scalar_lea.sflag [#allocation7], %s1151
          %s1153 = sand.u32 %s174, 1
          %s1154 = smul.addr %s1153, 64
          %s1155 = scalar_lea.vmem [#allocation6], %s1154
          %1157 = dma.done %s1152, 1024
        $region76: #{self_attention_forward.3} parent=71 // pred_fallthru
          _
      $region72: #{self_attention_forward.3} parent=5 // pred_fallthru
        _
    $region6: #{self_attention_forward.3} parent=1 // loop_footer
      %s17 = sadd.s32 1, %s13
    $region7: #{self_attention_forward.3} parent=1 // loop_footer_branch
      %12 = sbr.rel target = $region3
    $region8: #{self_attention_forward.3} parent=1 // loop_exit
      _
    %1158 = vsyncpa [#allocation7], 1
    %s1159 = scalar_lea.sflag [#allocation7], 1
    %1160 = vsyncpa %s1159, 1

// kernel: self_attention_forward.2
$region0: #{self_attention_forward.2}
  #allocation0 [shape = 'u32[]', space=smem, size = 0x4, offset = 0x4, fixed_abs, tag = 'smem constant byte address 0x4 - core index']
  #allocation1 [shape = 'u32[72,128]{1,0:T(1,128)}', space=vmem, size = 0x9000, scoped, tag = 'internal scratch']
  %s0 = inlined_call_operand.vmem [shape: f32[2,64,128], index: 0, kind: input, shape index: {}]
  %s1 = inlined_call_operand.vmem [shape: f32[1,128], index: 1, kind: input, shape index: {}]
  %s2 = inlined_call_operand.vmem [shape: f32[1,128], index: 2, kind: input, shape index: {}]
  %s3 = inlined_call_operand.vmem [shape: bf16[128,640], index: 3, kind: input, shape index: {}]
  %s4 = inlined_call_operand.vmem [shape: bf16[64,128], index: 4, kind: input, shape index: {}]
  %s5 = inlined_call_operand.vmem [shape: bf16[64,128], index: 5, kind: input, shape index: {}]
  %s6 = inlined_call_operand.vmem [shape: bf16[2,4,64,32], index: 6, kind: output, shape index: {0}]
  %s7 = inlined_call_operand.vmem [shape: bf16[2,4,64,32], index: 7, kind: output, shape index: {1}]
  %s8 = inlined_call_operand.vmem [shape: bf16[2,4,64,32], index: 8, kind: output, shape index: {2}]
  %9 = xla_tuple %s6, %s7, %s8
  %s10 = sld [smem:[#allocation0]]
  $region73: #{self_attention_forward.2} parent=0
    _
  %s12 = ssub.s32 1, %s10
  %s13 = scalar_select 0, %s12, %s10
  loop: start=0, step=1, limit=4
  $region2: #{self_attention_forward.2} parent=0 // loop_pre_header
    _
  $region3: #{self_attention_forward.2} parent=0 // loop_header
    %s15 = sphi 0, %s19
    %p16 = scmp.ge.s32.totalorder %s15, 4
    %s22 = sphi 0, %s34
    %s23 = sphi 0, %s30
    %s24 = sphi 0, %s22
    %s25 = sphi 0, %s23
    %s26 = sphi 0, %s24
    %s27 = sphi 0, %s25
    %s39 = sphi 0, %s41
    %s42 = sphi 0, %s39
    %s43 = sphi 0, %s42
    %s59 = sphi 0, %s43
    %s63 = sphi 0, %s63
    %s65 = sphi 0, %s63
    %s66 = sphi 0, %s65
    %s80 = sphi 0, %s66
    %s84 = sphi 0, %s84
    %s86 = sphi 0, %s84
    %s87 = sphi 0, %s86
    %s101 = sphi 0, %s87
    %s105 = sphi 0, %s105
    %s107 = sphi 0, %s105
    %s108 = sphi 0, %s107
    %s122 = sphi 0, %s108
    %s128 = sphi 0, %s130
    %s131 = sphi 0, %s128
    %s132 = sphi 0, %s131
    %s148 = sphi 0, %s132
    %s154 = sphi 0, %s156
    %s157 = sphi 0, %s154
    %s158 = sphi 0, %s157
    %s174 = sphi 0, %s158
    %s182 = sphi 0, %s184
    %s185 = sphi 0, %s182
    %s186 = sphi 0, %s185
    %s202 = sphi 0, %s186
    %s210 = sphi 0, %s212
    %s213 = sphi 0, %s210
    %s214 = sphi 0, %s213
    %s230 = sphi 0, %s214
    %s238 = sphi 0, %s240
    %s241 = sphi 0, %s238
    %s242 = sphi 0, %s241
    %s258 = sphi 0, %s242
  $region4: #{self_attention_forward.2} parent=0 // loop_header_branch
    %18 = sbr.rel (%p16) target = $region8
  $region5: #{self_attention_forward.2} parent=0 // loop_body
    %s20 = ssub.s32 %s15, 1
    %s21 = ssub.s32 %s15, 2
    %s28 = sadd.s32 1, %s23
    %p29 = scmp.ge.s32.totalorder %s28, 1
    %s30 = scalar_select %p29, 0, %s28
    %s31 = sadd.s32 1, %s22
    %s32 = scalar_select %p29, %s31, %s22
    %p33 = scmp.ge.s32.totalorder %s32, 2
    %s34 = scalar_select %p33, 0, %s32
    %s35 = ssub.s32 %s22, %s34
    %s36 = ssub.s32 %s23, %s30
    %s37 = sor.u32 %s35, %s36
    %p38 = scmp.eq.s32.totalorder %s37, 0
    %s40 = sadd.s32 %s39, 1
    %s41 = scalar_select %p38, %s39, %s40
    %p44 = pneg %p38
    %p45 = scmp.eq.s32.totalorder %s15, 1
    %p46 = por %p44, %p45
    %p47 = scmp.ne.s32.totalorder %s39, %s42
    %p48 = scmp.eq.s32.totalorder %s15, 0
    %p49 = por %p47, %p48
    %p50 = scmp.ne.s32.totalorder %s39, %s42
    %p51 = scmp.eq.s32.totalorder %s20, 1
    %p52 = por %p50, %p51
    %p53 = scmp.ne.s32.totalorder %s42, %s43
    %p54 = scmp.eq.s32.totalorder %s20, 0
    %p55 = por %p53, %p54
    %p56 = scmp.ne.s32.totalorder %s42, %s43
    %p57 = scmp.eq.s32.totalorder %s21, 1
    %p58 = por %p56, %p57
    %p60 = scmp.ne.s32.totalorder %s43, %s59
    %p61 = scmp.eq.s32.totalorder %s21, 0
    %p62 = por %p60, %p61
    %s64 = sadd.s32 %s63, 1
    %p67 = scmp.eq.s32.totalorder %s15, 1
    %p68 = scmp.ne.s32.totalorder %s63, %s65
    %p69 = scmp.eq.s32.totalorder %s15, 0
    %p70 = por %p68, %p69
    %p71 = scmp.ne.s32.totalorder %s63, %s65
    %p72 = scmp.eq.s32.totalorder %s20, 1
    %p73 = por %p71, %p72
    %p74 = scmp.ne.s32.totalorder %s65, %s66
    %p75 = scmp.eq.s32.totalorder %s20, 0
    %p76 = por %p74, %p75
    %p77 = scmp.ne.s32.totalorder %s65, %s66
    %p78 = scmp.eq.s32.totalorder %s21, 1
    %p79 = por %p77, %p78
    %p81 = scmp.ne.s32.totalorder %s66, %s80
    %p82 = scmp.eq.s32.totalorder %s21, 0
    %p83 = por %p81, %p82
    %s85 = sadd.s32 %s84, 1
    %p88 = scmp.eq.s32.totalorder %s15, 1
    %p89 = scmp.ne.s32.totalorder %s84, %s86
    %p90 = scmp.eq.s32.totalorder %s15, 0
    %p91 = por %p89, %p90
    %p92 = scmp.ne.s32.totalorder %s84, %s86
    %p93 = scmp.eq.s32.totalorder %s20, 1
    %p94 = por %p92, %p93
    %p95 = scmp.ne.s32.totalorder %s86, %s87
    %p96 = scmp.eq.s32.totalorder %s20, 0
    %p97 = por %p95, %p96
    %p98 = scmp.ne.s32.totalorder %s86, %s87
    %p99 = scmp.eq.s32.totalorder %s21, 1
    %p100 = por %p98, %p99
    %p102 = scmp.ne.s32.totalorder %s87, %s101
    %p103 = scmp.eq.s32.totalorder %s21, 0
    %p104 = por %p102, %p103
    %s106 = sadd.s32 %s105, 1
    %p109 = scmp.eq.s32.totalorder %s15, 1
    %p110 = scmp.ne.s32.totalorder %s105, %s107
    %p111 = scmp.eq.s32.totalorder %s15, 0
    %p112 = por %p110, %p111
    %p113 = scmp.ne.s32.totalorder %s105, %s107
    %p114 = scmp.eq.s32.totalorder %s20, 1
    %p115 = por %p113, %p114
    %p116 = scmp.ne.s32.totalorder %s107, %s108
    %p117 = scmp.eq.s32.totalorder %s20, 0
    %p118 = por %p116, %p117
    %p119 = scmp.ne.s32.totalorder %s107, %s108
    %p120 = scmp.eq.s32.totalorder %s21, 1
    %p121 = por %p119, %p120
    %p123 = scmp.ne.s32.totalorder %s108, %s122
    %p124 = scmp.eq.s32.totalorder %s21, 0
    %p125 = por %p123, %p124
    %s126 = ssub.s32 %s23, %s30
    %p127 = scmp.eq.s32.totalorder %s126, 0
    %s129 = sadd.s32 %s128, 1
    %s130 = scalar_select %p127, %s128, %s129
    %p133 = pneg %p127
    %p134 = scmp.eq.s32.totalorder %s15, 1
    %p135 = por %p133, %p134
    %p136 = scmp.ne.s32.totalorder %s128, %s131
    %p137 = scmp.eq.s32.totalorder %s15, 0
    %p138 = por %p136, %p137
    %p139 = scmp.ne.s32.totalorder %s128, %s131
    %p140 = scmp.eq.s32.totalorder %s20, 1
    %p141 = por %p139, %p140
    %p142 = scmp.ne.s32.totalorder %s131, %s132
    %p143 = scmp.eq.s32.totalorder %s20, 0
    %p144 = por %p142, %p143
    %p145 = scmp.ne.s32.totalorder %s131, %s132
    %p146 = scmp.eq.s32.totalorder %s21, 1
    %p147 = por %p145, %p146
    %p149 = scmp.ne.s32.totalorder %s132, %s148
    %p150 = scmp.eq.s32.totalorder %s21, 0
    %p151 = por %p149, %p150
    %s152 = ssub.s32 %s23, %s30
    %p153 = scmp.eq.s32.totalorder %s152, 0
    %s155 = sadd.s32 %s154, 1
    %s156 = scalar_select %p153, %s154, %s155
    %p159 = pneg %p153
    %p160 = scmp.eq.s32.totalorder %s15, 1
    %p161 = por %p159, %p160
    %p162 = scmp.ne.s32.totalorder %s154, %s157
    %p163 = scmp.eq.s32.totalorder %s15, 0
    %p164 = por %p162, %p163
    %p165 = scmp.ne.s32.totalorder %s154, %s157
    %p166 = scmp.eq.s32.totalorder %s20, 1
    %p167 = por %p165, %p166
    %p168 = scmp.ne.s32.totalorder %s157, %s158
    %p169 = scmp.eq.s32.totalorder %s20, 0
    %p170 = por %p168, %p169
    %p171 = scmp.ne.s32.totalorder %s157, %s158
    %p172 = scmp.eq.s32.totalorder %s21, 1
    %p173 = por %p171, %p172
    %p175 = scmp.ne.s32.totalorder %s158, %s174
    %p176 = scmp.eq.s32.totalorder %s21, 0
    %p177 = por %p175, %p176
    %s178 = ssub.s32 %s22, %s34
    %s179 = ssub.s32 %s23, %s30
    %s180 = sor.u32 %s178, %s179
    %p181 = scmp.eq.s32.totalorder %s180, 0
    %s183 = sadd.s32 %s182, 1
    %s184 = scalar_select %p181, %s182, %s183
    %p187 = pneg %p181
    %p188 = scmp.eq.s32.totalorder %s15, 1
    %p189 = por %p187, %p188
    %p190 = scmp.ne.s32.totalorder %s182, %s185
    %p191 = scmp.eq.s32.totalorder %s15, 0
    %p192 = por %p190, %p191
    %p193 = scmp.ne.s32.totalorder %s182, %s185
    %p194 = scmp.eq.s32.totalorder %s20, 1
    %p195 = por %p193, %p194
    %p196 = scmp.ne.s32.totalorder %s185, %s186
    %p197 = scmp.eq.s32.totalorder %s20, 0
    %p198 = por %p196, %p197
    %p199 = scmp.ne.s32.totalorder %s185, %s186
    %p200 = scmp.eq.s32.totalorder %s21, 1
    %p201 = por %p199, %p200
    %p203 = scmp.ne.s32.totalorder %s186, %s202
    %p204 = scmp.eq.s32.totalorder %s21, 0
    %p205 = por %p203, %p204
    %s206 = ssub.s32 %s22, %s34
    %s207 = ssub.s32 %s23, %s30
    %s208 = sor.u32 %s206, %s207
    %p209 = scmp.eq.s32.totalorder %s208, 0
    %s211 = sadd.s32 %s210, 1
    %s212 = scalar_select %p209, %s210, %s211
    %p215 = pneg %p209
    %p216 = scmp.eq.s32.totalorder %s15, 1
    %p217 = por %p215, %p216
    %p218 = scmp.ne.s32.totalorder %s210, %s213
    %p219 = scmp.eq.s32.totalorder %s15, 0
    %p220 = por %p218, %p219
    %p221 = scmp.ne.s32.totalorder %s210, %s213
    %p222 = scmp.eq.s32.totalorder %s20, 1
    %p223 = por %p221, %p222
    %p224 = scmp.ne.s32.totalorder %s213, %s214
    %p225 = scmp.eq.s32.totalorder %s20, 0
    %p226 = por %p224, %p225
    %p227 = scmp.ne.s32.totalorder %s213, %s214
    %p228 = scmp.eq.s32.totalorder %s21, 1
    %p229 = por %p227, %p228
    %p231 = scmp.ne.s32.totalorder %s214, %s230
    %p232 = scmp.eq.s32.totalorder %s21, 0
    %p233 = por %p231, %p232
    %s234 = ssub.s32 %s22, %s34
    %s235 = ssub.s32 %s23, %s30
    %s236 = sor.u32 %s234, %s235
    %p237 = scmp.eq.s32.totalorder %s236, 0
    %s239 = sadd.s32 %s238, 1
    %s240 = scalar_select %p237, %s238, %s239
    %p243 = pneg %p237
    %p244 = scmp.eq.s32.totalorder %s15, 1
    %p245 = por %p243, %p244
    %p246 = scmp.ne.s32.totalorder %s238, %s241
    %p247 = scmp.eq.s32.totalorder %s15, 0
    %p248 = por %p246, %p247
    %p249 = scmp.ne.s32.totalorder %s238, %s241
    %p250 = scmp.eq.s32.totalorder %s20, 1
    %p251 = por %p249, %p250
    %p252 = scmp.ne.s32.totalorder %s241, %s242
    %p253 = scmp.eq.s32.totalorder %s20, 0
    %p254 = por %p252, %p253
    %p255 = scmp.ne.s32.totalorder %s241, %s242
    %p256 = scmp.eq.s32.totalorder %s21, 1
    %p257 = por %p255, %p256
    %p259 = scmp.ne.s32.totalorder %s242, %s258
    %p260 = scmp.eq.s32.totalorder %s21, 0
    %p261 = por %p259, %p260
    %p262 = scmp.le.s32.totalorder 1, %s15
    %p263 = scmp.lt.s32.totalorder %s15, 3
    %p264 = pnand %p262, %p263
    %p265 = pneg %p264
    // Predicated region
    $region9: #{self_attention_forward.2} parent=5 // pred_check
      _
    $region10: #{self_attention_forward.2} parent=5 // pred_check_branch
      %267 = sbr.rel (%p264) target = $region12
    $region11: #{self_attention_forward.2} parent=5 // pred_region
      %s268 = ssub.s32 %s15, 1
      // Predicated region
      $region13: #{self_attention_forward.2} parent=11 // pred_check
        %p269 = pneg %p76
      $region14: #{self_attention_forward.2} parent=11 // pred_check_branch
        %271 = sbr.rel (%p269) target = $region16
      $region15: #{self_attention_forward.2} parent=11 // pred_region
        _
      $region16: #{self_attention_forward.2} parent=11 // pred_fallthru
        _
      // Predicated region
      $region17: #{self_attention_forward.2} parent=11 // pred_check
        %p272 = pneg %p97
      $region18: #{self_attention_forward.2} parent=11 // pred_check_branch
        %274 = sbr.rel (%p272) target = $region20
      $region19: #{self_attention_forward.2} parent=11 // pred_region
        _
      $region20: #{self_attention_forward.2} parent=11 // pred_fallthru
        _
      // Predicated region
      $region21: #{self_attention_forward.2} parent=11 // pred_check
        %p275 = pneg %p118
      $region22: #{self_attention_forward.2} parent=11 // pred_check_branch
        %277 = sbr.rel (%p275) target = $region24
      $region23: #{self_attention_forward.2} parent=11 // pred_region
        _
      $region24: #{self_attention_forward.2} parent=11 // pred_fallthru
        _
      // Predicated region
      $region25: #{self_attention_forward.2} parent=11 // pred_check
        %p278 = pneg %p144
      $region26: #{self_attention_forward.2} parent=11 // pred_check_branch
        %280 = sbr.rel (%p278) target = $region28
      $region27: #{self_attention_forward.2} parent=11 // pred_region
        %s281 = smul.u32 8, %s25
        %p282 = scmp.lt.s32.totalorder %s281, 7
        %s283 = scalar_select %p282, %s281, 7
        %s284 = smul.addr %s283, 4
        %s285 = scalar_lea.vmem %s4, %s284
        %s286 = smul.u32 8, %s25
      $region28: #{self_attention_forward.2} parent=11 // pred_fallthru
        _
      // Predicated region
      $region29: #{self_attention_forward.2} parent=11 // pred_check
        %p287 = pneg %p170
      $region30: #{self_attention_forward.2} parent=11 // pred_check_branch
        %289 = sbr.rel (%p287) target = $region32
      $region31: #{self_attention_forward.2} parent=11 // pred_region
        %s290 = smul.u32 8, %s25
        %p291 = scmp.lt.s32.totalorder %s290, 7
        %s292 = scalar_select %p291, %s290, 7
        %s293 = smul.addr %s292, 4
        %s294 = scalar_lea.vmem %s5, %s293
        %s295 = smul.u32 8, %s25
      $region32: #{self_attention_forward.2} parent=11 // pred_fallthru
        _
    $region12: #{self_attention_forward.2} parent=5 // pred_fallthru
      _
    %p296 = scmp.lt.s32.totalorder %s15, 2
    // Predicated region
    $region33: #{self_attention_forward.2} parent=5 // pred_check
      %p297 = pneg %p296
    $region34: #{self_attention_forward.2} parent=5 // pred_check_branch
      %299 = sbr.rel (%p297) target = $region36
    $region35: #{self_attention_forward.2} parent=5 // pred_region
      // Predicated region
      $region37: #{self_attention_forward.2} parent=35 // pred_check
        %p300 = pneg %p49
      $region38: #{self_attention_forward.2} parent=35 // pred_check_branch
        %302 = sbr.rel (%p300) target = $region40
      $region39: #{self_attention_forward.2} parent=35 // pred_region
        %s303 = smul.u32 8, %s23
        %p304 = scmp.lt.s32.totalorder %s22, 1
        %s305 = scalar_select %p304, %s22, 1
        %p306 = scmp.lt.s32.totalorder %s303, 7
        %s307 = scalar_select %p306, %s303, 7
        %s308 = smul.addr %s305, 8
        %s309 = sadd.s32 %s307, %s308
        %s310 = smul.addr %s309, 8
        %s311 = scalar_lea.vmem %s0, %s310
        %s312 = smul.u32 8, %s23
      $region40: #{self_attention_forward.2} parent=35 // pred_fallthru
        _
    $region36: #{self_attention_forward.2} parent=5 // pred_fallthru
      _
    %p313 = scmp.le.s32.totalorder 1, %s15
    %p314 = scmp.lt.s32.totalorder %s15, 3
    %p315 = pnand %p313, %p314
    %p316 = pneg %p315
    // Predicated region
    $region41: #{self_attention_forward.2} parent=5 // pred_check
      _
    $region42: #{self_attention_forward.2} parent=5 // pred_check_branch
      %318 = sbr.rel (%p315) target = $region44
    $region43: #{self_attention_forward.2} parent=5 // pred_region
      %s319 = ssub.s32 %s15, 1
      %s320 = smul.u32 8, %s25
      %p321 = scmp.lt.s32.totalorder %s24, 1
      %s322 = scalar_select %p321, %s24, 1
      %p323 = scmp.lt.s32.totalorder %s320, 7
      %s324 = scalar_select %p323, %s320, 7
      %s325 = smul.addr %s322, 8
      %s326 = sadd.s32 %s324, %s325
      %s327 = smul.addr %s326, 8
      %s328 = scalar_lea.vmem %s0, %s327
      %p329 = pneg %p55
      %p330 = pneg %p52
      %p331 = pneg %p76
      %p332 = pneg %p73
      %p333 = pneg %p97
      %p334 = pneg %p94
      %p335 = pneg %p118
      %p336 = pneg %p115
      %s337 = smul.u32 8, %s25
      %p338 = scmp.lt.s32.totalorder %s337, 7
      %s339 = scalar_select %p338, %s337, 7
      %s340 = smul.addr %s339, 4
      %s341 = scalar_lea.vmem %s4, %s340
      %p342 = pneg %p144
      %p343 = pneg %p141
      %s344 = smul.u32 8, %s25
      %p345 = scmp.lt.s32.totalorder %s344, 7
      %s346 = scalar_select %p345, %s344, 7
      %s347 = smul.addr %s346, 4
      %s348 = scalar_lea.vmem %s5, %s347
      %p349 = pneg %p170
      %p350 = pneg %p167
      %p351 = pneg %p198
      %p352 = pneg %p195
      %s353 = smul.u32 8, %s25
      %p354 = scmp.lt.s32.totalorder %s24, 1
      %s355 = scalar_select %p354, %s24, 1
      %p356 = scmp.lt.s32.totalorder %s353, 7
      %s357 = scalar_select %p356, %s353, 7
      %s358 = smul.addr %s355, 32
      %s359 = sadd.s32 %s357, %s358
      %s360 = smul.addr %s359, 4
      %s361 = scalar_lea.vmem %s6, %s360
      %p362 = pneg %p226
      %p363 = pneg %p223
      %s364 = smul.u32 8, %s25
      %p365 = scmp.lt.s32.totalorder %s24, 1
      %s366 = scalar_select %p365, %s24, 1
      %p367 = scmp.lt.s32.totalorder %s364, 7
      %s368 = scalar_select %p367, %s364, 7
      %s369 = smul.addr %s366, 32
      %s370 = sadd.s32 %s368, %s369
      %s371 = smul.addr %s370, 4
      %s372 = scalar_lea.vmem %s7, %s371
      %p373 = pneg %p254
      %p374 = pneg %p251
      %s375 = smul.u32 8, %s25
      %p376 = scmp.lt.s32.totalorder %s24, 1
      %s377 = scalar_select %p376, %s24, 1
      %p378 = scmp.lt.s32.totalorder %s375, 7
      %s379 = scalar_select %p378, %s375, 7
      %s380 = smul.addr %s377, 32
      %s381 = sadd.s32 %s379, %s380
      %s382 = smul.addr %s381, 4
      %s383 = scalar_lea.vmem %s8, %s382
      %s384 = smul.u32 8, %s25
      %p385 = scmp.lt.s32.totalorder %s24, 1
      %s386 = scalar_select %p385, %s24, 1
      %p387 = scmp.lt.s32.totalorder %s384, 7
      %s388 = scalar_select %p387, %s384, 7
      %s389 = smul.addr %s386, 8
      %s390 = sadd.s32 %s388, %s389
      %s391 = smul.addr %s390, 8
      %s392 = scalar_lea.vmem %s0, %s391
      %s393 = smul.u32 8, %s25
      %s394 = smul.u32 8, %s25
      %p395 = scmp.lt.s32.totalorder %s394, 7
      %s396 = scalar_select %p395, %s394, 7
      %s397 = smul.addr %s396, 4
      %s398 = scalar_lea.vmem %s4, %s397
      %s399 = smul.u32 8, %s25
      %s400 = smul.u32 8, %s25
      %p401 = scmp.lt.s32.totalorder %s400, 7
      %s402 = scalar_select %p401, %s400, 7
      %s403 = smul.addr %s402, 4
      %s404 = scalar_lea.vmem %s5, %s403
      %s405 = smul.u32 8, %s25
      %s406 = smul.u32 8, %s25
      %p407 = scmp.lt.s32.totalorder %s24, 1
      %s408 = scalar_select %p407, %s24, 1
      %p409 = scmp.lt.s32.totalorder %s406, 7
      %s410 = scalar_select %p409, %s406, 7
      %s411 = smul.addr %s408, 32
      %s412 = sadd.s32 %s410, %s411
      %s413 = smul.addr %s412, 4
      %s414 = scalar_lea.vmem %s6, %s413
      %s415 = smul.u32 8, %s25
      %s416 = smul.u32 8, %s25
      %p417 = scmp.lt.s32.totalorder %s24, 1
      %s418 = scalar_select %p417, %s24, 1
      %p419 = scmp.lt.s32.totalorder %s416, 7
      %s420 = scalar_select %p419, %s416, 7
      %s421 = smul.addr %s418, 32
      %s422 = sadd.s32 %s420, %s421
      %s423 = smul.addr %s422, 4
      %s424 = scalar_lea.vmem %s7, %s423
      %s425 = smul.u32 8, %s25
      %s426 = smul.u32 8, %s25
      %p427 = scmp.lt.s32.totalorder %s24, 1
      %s428 = scalar_select %p427, %s24, 1
      %p429 = scmp.lt.s32.totalorder %s426, 7
      %s430 = scalar_select %p429, %s426, 7
      %s431 = smul.addr %s428, 32
      %s432 = sadd.s32 %s430, %s431
      %s433 = smul.addr %s432, 4
      %s434 = scalar_lea.vmem %s8, %s433
      %s435 = smul.u32 8, %s25
      %v436 = vld [vmem:[%s392] sm:$0xff]
      %v437 = vld [vmem:[%s392 + $0x8] sm:$0xff]
      %v438 = vld [vmem:[%s392 + $0x10] sm:$0xff]
      %v439 = vld [vmem:[%s392 + $0x18] sm:$0xff]
      %v440 = vld [vmem:[%s392 + $0x20] sm:$0xff]
      %v441 = vld [vmem:[%s392 + $0x28] sm:$0xff]
      %v442 = vld [vmem:[%s392 + $0x30] sm:$0xff]
      %v443 = vld [vmem:[%s392 + $0x38] sm:$0xff]
      %444 = vadd.xlane.f32.xlu0 %v436
      %v445 = vpop.xlane.xlu0 %444
      %446 = vadd.xlane.f32.xlu0 %v437
      %v447 = vpop.xlane.xlu0 %446
      %448 = vadd.xlane.f32.xlu0 %v438
      %v449 = vpop.xlane.xlu0 %448
      %450 = vadd.xlane.f32.xlu0 %v439
      %v451 = vpop.xlane.xlu0 %450
      %452 = vadd.xlane.f32.xlu0 %v440
      %v453 = vpop.xlane.xlu0 %452
      %454 = vadd.xlane.f32.xlu0 %v441
      %v455 = vpop.xlane.xlu0 %454
      %456 = vadd.xlane.f32.xlu0 %v442
      %v457 = vpop.xlane.xlu0 %456
      %458 = vadd.xlane.f32.xlu0 %v443
      %v459 = vpop.xlane.xlu0 %458
      %v460 = vrcp.pop 128.0
      %v461 = vmul.f32 128.0, %v460
      %v462 = vsub.f32 1.0, %v461
      %v463 = vmul.f32 %v460, %v462
      %v464 = vadd.f32 %v460, %v463
      %vm465 = vweird.f32 %v460
      %v466 = vsel %vm465, %v460, %v464
      %v467 = vmul.f32 %v445, %v466
      %v468 = vmul.f32 %v447, %v466
      %v469 = vmul.f32 %v449, %v466
      %v470 = vmul.f32 %v451, %v466
      %v471 = vmul.f32 %v453, %v466
      %v472 = vmul.f32 %v455, %v466
      %v473 = vmul.f32 %v457, %v466
      %v474 = vmul.f32 %v459, %v466
      %v475 = vsub.f32 %v436, %v467
      %v476 = vsub.f32 %v437, %v468
      %v477 = vsub.f32 %v438, %v469
      %v478 = vsub.f32 %v439, %v470
      %v479 = vsub.f32 %v440, %v471
      %v480 = vsub.f32 %v441, %v472
      %v481 = vsub.f32 %v442, %v473
      %v482 = vsub.f32 %v443, %v474
      %v483 = vmul.f32 %v475, %v475
      %v484 = vmul.f32 %v476, %v476
      %v485 = vmul.f32 %v477, %v477
      %v486 = vmul.f32 %v478, %v478
      %v487 = vmul.f32 %v479, %v479
      %v488 = vmul.f32 %v480, %v480
      %v489 = vmul.f32 %v481, %v481
      %v490 = vmul.f32 %v482, %v482
      %491 = vadd.xlane.f32.xlu0 %v483
      %v492 = vpop.xlane.xlu0 %491
      %493 = vadd.xlane.f32.xlu0 %v484
      %v494 = vpop.xlane.xlu0 %493
      %495 = vadd.xlane.f32.xlu0 %v485
      %v496 = vpop.xlane.xlu0 %495
      %497 = vadd.xlane.f32.xlu0 %v486
      %v498 = vpop.xlane.xlu0 %497
      %499 = vadd.xlane.f32.xlu0 %v487
      %v500 = vpop.xlane.xlu0 %499
      %501 = vadd.xlane.f32.xlu0 %v488
      %v502 = vpop.xlane.xlu0 %501
      %503 = vadd.xlane.f32.xlu0 %v489
      %v504 = vpop.xlane.xlu0 %503
      %505 = vadd.xlane.f32.xlu0 %v490
      %v506 = vpop.xlane.xlu0 %505
      %v507 = vmul.f32 %v492, %v466
      %v508 = vmul.f32 %v494, %v466
      %v509 = vmul.f32 %v496, %v466
      %v510 = vmul.f32 %v498, %v466
      %v511 = vmul.f32 %v500, %v466
      %v512 = vmul.f32 %v502, %v466
      %v513 = vmul.f32 %v504, %v466
      %v514 = vmul.f32 %v506, %v466
      %v515 = vadd.f32 %v507, 1e-05
      %v516 = vadd.f32 %v508, 1e-05
      %v517 = vadd.f32 %v509, 1e-05
      %v518 = vadd.f32 %v510, 1e-05
      %v519 = vadd.f32 %v511, 1e-05
      %v520 = vadd.f32 %v512, 1e-05
      %v521 = vadd.f32 %v513, 1e-05
      %v522 = vadd.f32 %v514, 1e-05
      %v523 = vrsqrt.pop %v515
      %v524 = vmul.f32 %v523, %v515
      %v525 = vmul.f32 %v524, %v523
      %v526 = vmul.f32 0.5, %v525
      %v527 = vsub.f32 1.5, %v526
      %v528 = vmul.f32 %v523, %v527
      %vm529 = vweird.f32 %v515
      %vm530 = vweird.f32 %v523
      %vm531 = vmor %vm529, %vm530
      %v532 = vsel %vm531, %v523, %v528
      %v533 = vrsqrt.pop %v516
      %v534 = vmul.f32 %v533, %v516
      %v535 = vmul.f32 %v534, %v533
      %v536 = vmul.f32 0.5, %v535
      %v537 = vsub.f32 1.5, %v536
      %v538 = vmul.f32 %v533, %v537
      %vm539 = vweird.f32 %v516
      %vm540 = vweird.f32 %v533
      %vm541 = vmor %vm539, %vm540
      %v542 = vsel %vm541, %v533, %v538
      %v543 = vrsqrt.pop %v517
      %v544 = vmul.f32 %v543, %v517
      %v545 = vmul.f32 %v544, %v543
      %v546 = vmul.f32 0.5, %v545
      %v547 = vsub.f32 1.5, %v546
      %v548 = vmul.f32 %v543, %v547
      %vm549 = vweird.f32 %v517
      %vm550 = vweird.f32 %v543
      %vm551 = vmor %vm549, %vm550
      %v552 = vsel %vm551, %v543, %v548
      %v553 = vrsqrt.pop %v518
      %v554 = vmul.f32 %v553, %v518
      %v555 = vmul.f32 %v554, %v553
      %v556 = vmul.f32 0.5, %v555
      %v557 = vsub.f32 1.5, %v556
      %v558 = vmul.f32 %v553, %v557
      %vm559 = vweird.f32 %v518
      %vm560 = vweird.f32 %v553
      %vm561 = vmor %vm559, %vm560
      %v562 = vsel %vm561, %v553, %v558
      %v563 = vrsqrt.pop %v519
      %v564 = vmul.f32 %v563, %v519
      %v565 = vmul.f32 %v564, %v563
      %v566 = vmul.f32 0.5, %v565
      %v567 = vsub.f32 1.5, %v566
      %v568 = vmul.f32 %v563, %v567
      %vm569 = vweird.f32 %v519
      %vm570 = vweird.f32 %v563
      %vm571 = vmor %vm569, %vm570
      %v572 = vsel %vm571, %v563, %v568
      %v573 = vrsqrt.pop %v520
      %v574 = vmul.f32 %v573, %v520
      %v575 = vmul.f32 %v574, %v573
      %v576 = vmul.f32 0.5, %v575
      %v577 = vsub.f32 1.5, %v576
      %v578 = vmul.f32 %v573, %v577
      %vm579 = vweird.f32 %v520
      %vm580 = vweird.f32 %v573
      %vm581 = vmor %vm579, %vm580
      %v582 = vsel %vm581, %v573, %v578
      %v583 = vrsqrt.pop %v521
      %v584 = vmul.f32 %v583, %v521
      %v585 = vmul.f32 %v584, %v583
      %v586 = vmul.f32 0.5, %v585
      %v587 = vsub.f32 1.5, %v586
      %v588 = vmul.f32 %v583, %v587
      %vm589 = vweird.f32 %v521
      %vm590 = vweird.f32 %v583
      %vm591 = vmor %vm589, %vm590
      %v592 = vsel %vm591, %v583, %v588
      %v593 = vrsqrt.pop %v522
      %v594 = vmul.f32 %v593, %v522
      %v595 = vmul.f32 %v594, %v593
      %v596 = vmul.f32 0.5, %v595
      %v597 = vsub.f32 1.5, %v596
      %v598 = vmul.f32 %v593, %v597
      %vm599 = vweird.f32 %v522
      %vm600 = vweird.f32 %v593
      %vm601 = vmor %vm599, %vm600
      %v602 = vsel %vm601, %v593, %v598
      %v603 = vmul.f32 %v475, %v532
      %v604 = vmul.f32 %v476, %v542
      %v605 = vmul.f32 %v477, %v552
      %v606 = vmul.f32 %v478, %v562
      %v607 = vmul.f32 %v479, %v572
      %v608 = vmul.f32 %v480, %v582
      %v609 = vmul.f32 %v481, %v592
      %v610 = vmul.f32 %v482, %v602
      %v611 = vld [vmem:[%s1] sm:$0x1]
      %v613 = vperm.slane %v611, 0
      %v615 = vmul.f32 %v603, %v613
      %v616 = vmul.f32 %v604, %v613
      %v617 = vmul.f32 %v605, %v613
      %v618 = vmul.f32 %v606, %v613
      %v619 = vmul.f32 %v607, %v613
      %v620 = vmul.f32 %v608, %v613
      %v621 = vmul.f32 %v609, %v613
      %v622 = vmul.f32 %v610, %v613
      %v623 = vld [vmem:[%s2] sm:$0x1]
      %v625 = vperm.slane %v623, 0
      %v627 = vadd.f32 %v615, %v625
      %v628 = vadd.f32 %v616, %v625
      %v629 = vadd.f32 %v617, %v625
      %v630 = vadd.f32 %v618, %v625
      %v631 = vadd.f32 %v619, %v625
      %v632 = vadd.f32 %v620, %v625
      %v633 = vadd.f32 %v621, %v625
      %v634 = vadd.f32 %v622, %v625
      %v635 = vpack.c.bf16 %v628, %v627
      %v636 = vpack.c.bf16 %v630, %v629
      %v637 = vpack.c.bf16 %v632, %v631
      %v638 = vpack.c.bf16 %v634, %v633
      %v639 = vld [vmem:[%s3] sm:$0xff]
      %v640 = vld [vmem:[%s3 + $0x8] sm:$0xff]
      %v641 = vld [vmem:[%s3 + $0x10] sm:$0xf]
      %v642 = vld [vmem:[%s3 + $0x14] sm:$0xff]
      %v643 = vld [vmem:[%s3 + $0x1c] sm:$0xff]
      %v644 = vld [vmem:[%s3 + $0x24] sm:$0xf]
      %v645 = vld [vmem:[%s3 + $0x28] sm:$0xff]
      %v646 = vld [vmem:[%s3 + $0x30] sm:$0xff]
      %v647 = vld [vmem:[%s3 + $0x38] sm:$0xf]
      %v648 = vld [vmem:[%s3 + $0x3c] sm:$0xff]
      %v649 = vld [vmem:[%s3 + $0x44] sm:$0xff]
      %v650 = vld [vmem:[%s3 + $0x4c] sm:$0xf]
      %v651 = vld [vmem:[%s3 + $0x50] sm:$0xff]
      %v652 = vld [vmem:[%s3 + $0x58] sm:$0xff]
      %v653 = vld [vmem:[%s3 + $0x60] sm:$0xf]
      %v654 = vld [vmem:[%s3 + $0x64] sm:$0xff]
      %v655 = vld [vmem:[%s3 + $0x6c] sm:$0xff]
      %v656 = vld [vmem:[%s3 + $0x74] sm:$0xf]
      %v657 = vld [vmem:[%s3 + $0x78] sm:$0xff]
      %v658 = vld [vmem:[%s3 + $0x80] sm:$0xff]
      %v659 = vld [vmem:[%s3 + $0x88] sm:$0xf]
      %v660 = vld [vmem:[%s3 + $0x8c] sm:$0xff]
      %v661 = vld [vmem:[%s3 + $0x94] sm:$0xff]
      %v662 = vld [vmem:[%s3 + $0x9c] sm:$0xf]
      %v663 = vld [vmem:[%s3 + $0xa0] sm:$0xff]
      %v664 = vld [vmem:[%s3 + $0xa8] sm:$0xff]
      %v665 = vld [vmem:[%s3 + $0xb0] sm:$0xf]
      %v666 = vld [vmem:[%s3 + $0xb4] sm:$0xff]
      %v667 = vld [vmem:[%s3 + $0xbc] sm:$0xff]
      %v668 = vld [vmem:[%s3 + $0xc4] sm:$0xf]
      %v669 = vld [vmem:[%s3 + $0xc8] sm:$0xff]
      %v670 = vld [vmem:[%s3 + $0xd0] sm:$0xff]
      %v671 = vld [vmem:[%s3 + $0xd8] sm:$0xf]
      %v672 = vld [vmem:[%s3 + $0xdc] sm:$0xff]
      %v673 = vld [vmem:[%s3 + $0xe4] sm:$0xff]
      %v674 = vld [vmem:[%s3 + $0xec] sm:$0xf]
      %v675 = vld [vmem:[%s3 + $0xf0] sm:$0xff]
      %v676 = vld [vmem:[%s3 + $0xf8] sm:$0xff]
      %v677 = vld [vmem:[%s3 + $0x100] sm:$0xf]
      %v678 = vld [vmem:[%s3 + $0x104] sm:$0xff]
      %v679 = vld [vmem:[%s3 + $0x10c] sm:$0xff]
      %v680 = vld [vmem:[%s3 + $0x114] sm:$0xf]
      %v681 = vld [vmem:[%s3 + $0x118] sm:$0xff]
      %v682 = vld [vmem:[%s3 + $0x120] sm:$0xff]
      %v683 = vld [vmem:[%s3 + $0x128] sm:$0xf]
      %v684 = vld [vmem:[%s3 + $0x12c] sm:$0xff]
      %v685 = vld [vmem:[%s3 + $0x134] sm:$0xff]
      %v686 = vld [vmem:[%s3 + $0x13c] sm:$0xf]
      %v735 = vunpack.c.l.b16 %v639
      %v736 = vunpack.c.h.b16 %v639
      %v737 = vunpack.c.l.b16 %v640
      %v738 = vunpack.c.h.b16 %v640
      %v739 = vunpack.c.l.b16 %v641
      %v740 = vunpack.c.l.b16 %v642
      %v741 = vunpack.c.h.b16 %v642
      %v742 = vunpack.c.l.b16 %v643
      %v743 = vunpack.c.h.b16 %v643
      %v744 = vunpack.c.l.b16 %v644
      %v745 = vunpack.c.l.b16 %v645
      %v746 = vunpack.c.h.b16 %v645
      %v747 = vunpack.c.l.b16 %v646
      %v748 = vunpack.c.h.b16 %v646
      %v749 = vunpack.c.l.b16 %v647
      %v750 = vunpack.c.l.b16 %v648
      %v751 = vunpack.c.h.b16 %v648
      %v752 = vunpack.c.l.b16 %v649
      %v753 = vunpack.c.h.b16 %v649
      %v754 = vunpack.c.l.b16 %v650
      %v755 = vunpack.c.l.b16 %v651
      %v756 = vunpack.c.h.b16 %v651
      %v757 = vunpack.c.l.b16 %v652
      %v758 = vunpack.c.h.b16 %v652
      %v759 = vunpack.c.l.b16 %v653
      %v760 = vunpack.c.l.b16 %v654
      %v761 = vunpack.c.h.b16 %v654
      %v762 = vunpack.c.l.b16 %v655
      %v763 = vunpack.c.h.b16 %v655
      %v764 = vunpack.c.l.b16 %v656
      %v765 = vunpack.c.l.b16 %v657
      %v766 = vunpack.c.h.b16 %v657
      %v767 = vunpack.c.l.b16 %v658
      %v768 = vunpack.c.h.b16 %v658
      %v769 = vunpack.c.l.b16 %v659
      %v770 = vunpack.c.l.b16 %v660
      %v771 = vunpack.c.h.b16 %v660
      %v772 = vunpack.c.l.b16 %v661
      %v773 = vunpack.c.h.b16 %v661
      %v774 = vunpack.c.l.b16 %v662
      %v775 = vunpack.c.l.b16 %v663
      %v776 = vunpack.c.h.b16 %v663
      %v777 = vunpack.c.l.b16 %v664
      %v778 = vunpack.c.h.b16 %v664
      %v779 = vunpack.c.l.b16 %v665
      %v780 = vunpack.c.l.b16 %v666
      %v781 = vunpack.c.h.b16 %v666
      %v782 = vunpack.c.l.b16 %v667
      %v783 = vunpack.c.h.b16 %v667
      %v784 = vunpack.c.l.b16 %v668
      %v785 = vunpack.c.l.b16 %v669
      %v786 = vunpack.c.h.b16 %v669
      %v787 = vunpack.c.l.b16 %v670
      %v788 = vunpack.c.h.b16 %v670
      %v789 = vunpack.c.l.b16 %v671
      %v790 = vunpack.c.l.b16 %v672
      %v791 = vunpack.c.h.b16 %v672
      %v792 = vunpack.c.l.b16 %v673
      %v793 = vunpack.c.h.b16 %v673
      %v794 = vunpack.c.l.b16 %v674
      %v795 = vunpack.c.l.b16 %v675
      %v796 = vunpack.c.h.b16 %v675
      %v797 = vunpack.c.l.b16 %v676
      %v798 = vunpack.c.h.b16 %v676
      %v799 = vunpack.c.l.b16 %v677
      %v800 = vunpack.c.l.b16 %v678
      %v801 = vunpack.c.h.b16 %v678
      %v802 = vunpack.c.l.b16 %v679
      %v803 = vunpack.c.h.b16 %v679
      %v804 = vunpack.c.l.b16 %v680
      %v805 = vunpack.c.l.b16 %v681
      %v806 = vunpack.c.h.b16 %v681
      %v807 = vunpack.c.l.b16 %v682
      %v808 = vunpack.c.h.b16 %v682
      %v809 = vunpack.c.l.b16 %v683
      %v810 = vunpack.c.l.b16 %v684
      %v811 = vunpack.c.h.b16 %v684
      %v812 = vunpack.c.l.b16 %v685
      %v813 = vunpack.c.h.b16 %v685
      %v814 = vunpack.c.l.b16 %v686
      %v815 = vpack.c.b16 %v740, %v735
      %v816 = vpack.c.b16 %v741, %v736
      %v817 = vpack.c.b16 %v742, %v737
      %v818 = vpack.c.b16 %v743, %v738
      %v819 = vpack.c.b16 %v744, %v739
      %v820 = vpack.c.b16 %v750, %v745
      %v821 = vpack.c.b16 %v751, %v746
      %v822 = vpack.c.b16 %v752, %v747
      %v823 = vpack.c.b16 %v753, %v748
      %v824 = vpack.c.b16 %v754, %v749
      %v825 = vpack.c.b16 %v760, %v755
      %v826 = vpack.c.b16 %v761, %v756
      %v827 = vpack.c.b16 %v762, %v757
      %v828 = vpack.c.b16 %v763, %v758
      %v829 = vpack.c.b16 %v764, %v759
      %v830 = vpack.c.b16 %v770, %v765
      %v831 = vpack.c.b16 %v771, %v766
      %v832 = vpack.c.b16 %v772, %v767
      %v833 = vpack.c.b16 %v773, %v768
      %v834 = vpack.c.b16 %v774, %v769
      %v835 = vpack.c.b16 %v780, %v775
      %v836 = vpack.c.b16 %v781, %v776
      %v837 = vpack.c.b16 %v782, %v777
      %v838 = vpack.c.b16 %v783, %v778
      %v839 = vpack.c.b16 %v784, %v779
      %v840 = vpack.c.b16 %v790, %v785
      %v841 = vpack.c.b16 %v791, %v786
      %v842 = vpack.c.b16 %v792, %v787
      %v843 = vpack.c.b16 %v793, %v788
      %v844 = vpack.c.b16 %v794, %v789
      %v845 = vpack.c.b16 %v800, %v795
      %v846 = vpack.c.b16 %v801, %v796
      %v847 = vpack.c.b16 %v802, %v797
      %v848 = vpack.c.b16 %v803, %v798
      %v849 = vpack.c.b16 %v804, %v799
      %v850 = vpack.c.b16 %v810, %v805
      %v851 = vpack.c.b16 %v811, %v806
      %v852 = vpack.c.b16 %v812, %v807
      %v853 = vpack.c.b16 %v813, %v808
      %v854 = vpack.c.b16 %v814, %v809
      %895 = vmatpush.bf16.msra.mxu0 %v850
      %896 = vmatpush.bf16.msra.mxu0 %v845
      %897 = vmatpush.bf16.msra.mxu0 %v840
      %898 = vmatpush.bf16.msra.mxu0 %v835
      %899 = vmatpush.bf16.msra.mxu0 %v830
      %900 = vmatpush.bf16.msra.mxu0 %v825
      %901 = vmatpush.bf16.msra.mxu0 %v820
      %902 = vmatpush.bf16.msra.mxu0 %v815
      %903 = vmatmul.bf16.gmra.mxu0 %v635
      %v904 = vpop.f32.mrf.mxu0
      %v905 = vadd.f32 0.0, %v904
      %v906 = vpop.f32.mrf.mxu0
      %v907 = vadd.f32 0.0, %v906
      %908 = vmatmul.bf16.gmra.mxu0 %v636
      %v909 = vpop.f32.mrf.mxu0
      %v910 = vadd.f32 0.0, %v909
      %v911 = vpop.f32.mrf.mxu0
      %v912 = vadd.f32 0.0, %v911
      %913 = vmatmul.bf16.gmra.mxu0 %v637
      %v914 = vpop.f32.mrf.mxu0
      %v915 = vadd.f32 0.0, %v914
      %v916 = vpop.f32.mrf.mxu0
      %v917 = vadd.f32 0.0, %v916
      %918 = vmatmul.bf16.gmra.mxu0 %v638
      %v919 = vpop.f32.mrf.mxu0
      %v920 = vadd.f32 0.0, %v919
      %v921 = vpop.f32.mrf.mxu0
      %v922 = vadd.f32 0.0, %v921
      %923 = vdwg.mxu0
      %924 = vmatpush.bf16.msra.mxu0 %v851
      %925 = vmatpush.bf16.msra.mxu0 %v846
      %926 = vmatpush.bf16.msra.mxu0 %v841
      %927 = vmatpush.bf16.msra.mxu0 %v836
      %928 = vmatpush.bf16.msra.mxu0 %v831
      %929 = vmatpush.bf16.msra.mxu0 %v826
      %930 = vmatpush.bf16.msra.mxu0 %v821
      %931 = vmatpush.bf16.msra.mxu0 %v816
      %932 = vmatmul.bf16.gmra.mxu0 %v635
      %v933 = vpop.f32.mrf.mxu0
      %v934 = vadd.f32 0.0, %v933
      %v935 = vpop.f32.mrf.mxu0
      %v936 = vadd.f32 0.0, %v935
      %937 = vmatmul.bf16.gmra.mxu0 %v636
      %v938 = vpop.f32.mrf.mxu0
      %v939 = vadd.f32 0.0, %v938
      %v940 = vpop.f32.mrf.mxu0
      %v941 = vadd.f32 0.0, %v940
      %942 = vmatmul.bf16.gmra.mxu0 %v637
      %v943 = vpop.f32.mrf.mxu0
      %v944 = vadd.f32 0.0, %v943
      %v945 = vpop.f32.mrf.mxu0
      %v946 = vadd.f32 0.0, %v945
      %947 = vmatmul.bf16.gmra.mxu0 %v638
      %v948 = vpop.f32.mrf.mxu0
      %v949 = vadd.f32 0.0, %v948
      %v950 = vpop.f32.mrf.mxu0
      %v951 = vadd.f32 0.0, %v950
      %952 = vdwg.mxu0
      %953 = vmatpush.bf16.msra.mxu0 %v852
      %954 = vmatpush.bf16.msra.mxu0 %v847
      %955 = vmatpush.bf16.msra.mxu0 %v842
      %956 = vmatpush.bf16.msra.mxu0 %v837
      %957 = vmatpush.bf16.msra.mxu0 %v832
      %958 = vmatpush.bf16.msra.mxu0 %v827
      %959 = vmatpush.bf16.msra.mxu0 %v822
      %960 = vmatpush.bf16.msra.mxu0 %v817
      %961 = vmatmul.bf16.gmra.mxu0 %v635
      %v962 = vpop.f32.mrf.mxu0
      %v963 = vadd.f32 0.0, %v962
      %v964 = vpop.f32.mrf.mxu0
      %v965 = vadd.f32 0.0, %v964
      %966 = vmatmul.bf16.gmra.mxu0 %v636
      %v967 = vpop.f32.mrf.mxu0
      %v968 = vadd.f32 0.0, %v967
      %v969 = vpop.f32.mrf.mxu0
      %v970 = vadd.f32 0.0, %v969
      %971 = vmatmul.bf16.gmra.mxu0 %v637
      %v972 = vpop.f32.mrf.mxu0
      %v973 = vadd.f32 0.0, %v972
      %v974 = vpop.f32.mrf.mxu0
      %v975 = vadd.f32 0.0, %v974
      %976 = vmatmul.bf16.gmra.mxu0 %v638
      %v977 = vpop.f32.mrf.mxu0
      %v978 = vadd.f32 0.0, %v977
      %v979 = vpop.f32.mrf.mxu0
      %v980 = vadd.f32 0.0, %v979
      %981 = vdwg.mxu0
      %982 = vmatpush.bf16.msra.mxu0 %v853
      %983 = vmatpush.bf16.msra.mxu0 %v848
      %984 = vmatpush.bf16.msra.mxu0 %v843
      %985 = vmatpush.bf16.msra.mxu0 %v838
      %986 = vmatpush.bf16.msra.mxu0 %v833
      %987 = vmatpush.bf16.msra.mxu0 %v828
      %988 = vmatpush.bf16.msra.mxu0 %v823
      %989 = vmatpush.bf16.msra.mxu0 %v818
      %990 = vmatmul.bf16.gmra.mxu0 %v635
      %v991 = vpop.f32.mrf.mxu0
      %v992 = vadd.f32 0.0, %v991
      %v993 = vpop.f32.mrf.mxu0
      %v994 = vadd.f32 0.0, %v993
      %995 = vmatmul.bf16.gmra.mxu0 %v636
      %v996 = vpop.f32.mrf.mxu0
      %v997 = vadd.f32 0.0, %v996
      %v998 = vpop.f32.mrf.mxu0
      %v999 = vadd.f32 0.0, %v998
      %1000 = vmatmul.bf16.gmra.mxu0 %v637
      %v1001 = vpop.f32.mrf.mxu0
      %v1002 = vadd.f32 0.0, %v1001
      %v1003 = vpop.f32.mrf.mxu0
      %v1004 = vadd.f32 0.0, %v1003
      %1005 = vmatmul.bf16.gmra.mxu0 %v638
      %v1006 = vpop.f32.mrf.mxu0
      %v1007 = vadd.f32 0.0, %v1006
      %v1008 = vpop.f32.mrf.mxu0
      %v1009 = vadd.f32 0.0, %v1008
      %1010 = vdwg.mxu0
      %1011 = vmatpush.bf16.msra.mxu0 %v854
      %1012 = vmatpush.bf16.msra.mxu0 %v849
      %1013 = vmatpush.bf16.msra.mxu0 %v844
      %1014 = vmatpush.bf16.msra.mxu0 %v839
      %1015 = vmatpush.bf16.msra.mxu0 %v834
      %1016 = vmatpush.bf16.msra.mxu0 %v829
      %1017 = vmatpush.bf16.msra.mxu0 %v824
      %1018 = vmatpush.bf16.msra.mxu0 %v819
      %1019 = vmatmul.bf16.gmra.mxu0 %v635
      %v1020 = vpop.f32.mrf.mxu0
      %v1021 = vadd.f32 0.0, %v1020
      %v1022 = vpop.f32.mrf.mxu0
      %v1023 = vadd.f32 0.0, %v1022
      %1024 = vmatmul.bf16.gmra.mxu0 %v636
      %v1025 = vpop.f32.mrf.mxu0
      %v1026 = vadd.f32 0.0, %v1025
      %v1027 = vpop.f32.mrf.mxu0
      %v1028 = vadd.f32 0.0, %v1027
      %1029 = vmatmul.bf16.gmra.mxu0 %v637
      %v1030 = vpop.f32.mrf.mxu0
      %v1031 = vadd.f32 0.0, %v1030
      %v1032 = vpop.f32.mrf.mxu0
      %v1033 = vadd.f32 0.0, %v1032
      %1034 = vmatmul.bf16.gmra.mxu0 %v638
      %v1035 = vpop.f32.mrf.mxu0
      %v1036 = vadd.f32 0.0, %v1035
      %v1037 = vpop.f32.mrf.mxu0
      %v1038 = vadd.f32 0.0, %v1037
      %1039 = vdwg.mxu0
      %v1040 = vld [vmem:[%s398] sm:$0xf]
      %v1041 = vld [vmem:[%s398 + $0x4] sm:$0xf]
      %v1042 = vld [vmem:[%s398 + $0x8] sm:$0xf]
      %v1043 = vld [vmem:[%s398 + $0xc] sm:$0xf]
      %v1044 = vld [vmem:[%s398 + $0x10] sm:$0xf]
      %v1045 = vld [vmem:[%s398 + $0x14] sm:$0xf]
      %v1046 = vld [vmem:[%s398 + $0x18] sm:$0xf]
      %v1047 = vld [vmem:[%s398 + $0x1c] sm:$0xf]
      %v1048 = vunpack.c.l.bf16 %v1040
      %v1049 = vunpack.c.l.bf16 %v1041
      %v1050 = vunpack.c.l.bf16 %v1042
      %v1051 = vunpack.c.l.bf16 %v1043
      %v1052 = vunpack.c.l.bf16 %v1044
      %v1053 = vunpack.c.l.bf16 %v1045
      %v1054 = vunpack.c.l.bf16 %v1046
      %v1055 = vunpack.c.l.bf16 %v1047
      %v1056 = vld [vmem:[%s404] sm:$0xf]
      %v1057 = vld [vmem:[%s404 + $0x4] sm:$0xf]
      %v1058 = vld [vmem:[%s404 + $0x8] sm:$0xf]
      %v1059 = vld [vmem:[%s404 + $0xc] sm:$0xf]
      %v1060 = vld [vmem:[%s404 + $0x10] sm:$0xf]
      %v1061 = vld [vmem:[%s404 + $0x14] sm:$0xf]
      %v1062 = vld [vmem:[%s404 + $0x18] sm:$0xf]
      %v1063 = vld [vmem:[%s404 + $0x1c] sm:$0xf]
      %v1064 = vunpack.c.l.bf16 %v1056
      %v1065 = vunpack.c.l.bf16 %v1057
      %v1066 = vunpack.c.l.bf16 %v1058
      %v1067 = vunpack.c.l.bf16 %v1059
      %v1068 = vunpack.c.l.bf16 %v1060
      %v1069 = vunpack.c.l.bf16 %v1061
      %v1070 = vunpack.c.l.bf16 %v1062
      %v1071 = vunpack.c.l.bf16 %v1063
      %v1072 = vmul.f32 %v905, %v1048
      %v1073 = vmul.f32 %v907, %v1049
      %v1074 = vmul.f32 %v910, %v1050
      %v1075 = vmul.f32 %v912, %v1051
      %v1076 = vmul.f32 %v915, %v1052
      %v1077 = vmul.f32 %v917, %v1053
      %v1078 = vmul.f32 %v920, %v1054
      %v1079 = vmul.f32 %v922, %v1055
      %v1080 = vmul.f32 %v934, %v1064
      %v1081 = vmul.f32 %v936, %v1065
      %v1082 = vmul.f32 %v939, %v1066
      %v1083 = vmul.f32 %v941, %v1067
      %v1084 = vmul.f32 %v944, %v1068
      %v1085 = vmul.f32 %v946, %v1069
      %v1086 = vmul.f32 %v949, %v1070
      %v1087 = vmul.f32 %v951, %v1071
      %v1088 = vadd.f32 %v1072, %v1080
      %v1089 = vadd.f32 %v1073, %v1081
      %v1090 = vadd.f32 %v1074, %v1082
      %v1091 = vadd.f32 %v1075, %v1083
      %v1092 = vadd.f32 %v1076, %v1084
      %v1093 = vadd.f32 %v1077, %v1085
      %v1094 = vadd.f32 %v1078, %v1086
      %v1095 = vadd.f32 %v1079, %v1087
      %v1096 = vpack.c.bf16 %v1088, %v1088
      %v1097 = vpack.c.bf16 %v1089, %v1089
      %v1098 = vpack.c.bf16 %v1090, %v1090
      %v1099 = vpack.c.bf16 %v1091, %v1091
      %v1100 = vpack.c.bf16 %v1092, %v1092
      %v1101 = vpack.c.bf16 %v1093, %v1093
      %v1102 = vpack.c.bf16 %v1094, %v1094
      %v1103 = vpack.c.bf16 %v1095, %v1095
      %v1104 = vmul.f32 %v963, %v1048
      %v1105 = vmul.f32 %v965, %v1049
      %v1106 = vmul.f32 %v968, %v1050
      %v1107 = vmul.f32 %v970, %v1051
      %v1108 = vmul.f32 %v973, %v1052
      %v1109 = vmul.f32 %v975, %v1053
      %v1110 = vmul.f32 %v978, %v1054
      %v1111 = vmul.f32 %v980, %v1055
      %v1112 = vmul.f32 %v992, %v1064
      %v1113 = vmul.f32 %v994, %v1065
      %v1114 = vmul.f32 %v997, %v1066
      %v1115 = vmul.f32 %v999, %v1067
      %v1116 = vmul.f32 %v1002, %v1068
      %v1117 = vmul.f32 %v1004, %v1069
      %v1118 = vmul.f32 %v1007, %v1070
      %v1119 = vmul.f32 %v1009, %v1071
      %v1120 = vadd.f32 %v1104, %v1112
      %v1121 = vadd.f32 %v1105, %v1113
      %v1122 = vadd.f32 %v1106, %v1114
      %v1123 = vadd.f32 %v1107, %v1115
      %v1124 = vadd.f32 %v1108, %v1116
      %v1125 = vadd.f32 %v1109, %v1117
      %v1126 = vadd.f32 %v1110, %v1118
      %v1127 = vadd.f32 %v1111, %v1119
      %v1128 = vpack.c.bf16 %v1120, %v1120
      %v1129 = vpack.c.bf16 %v1121, %v1121
      %v1130 = vpack.c.bf16 %v1122, %v1122
      %v1131 = vpack.c.bf16 %v1123, %v1123
      %v1132 = vpack.c.bf16 %v1124, %v1124
      %v1133 = vpack.c.bf16 %v1125, %v1125
      %v1134 = vpack.c.bf16 %v1126, %v1126
      %v1135 = vpack.c.bf16 %v1127, %v1127
      %v1136 = vpack.c.bf16 %v1021, %v1021
      %v1137 = vpack.c.bf16 %v1023, %v1023
      %v1138 = vpack.c.bf16 %v1026, %v1026
      %v1139 = vpack.c.bf16 %v1028, %v1028
      %v1140 = vpack.c.bf16 %v1031, %v1031
      %v1141 = vpack.c.bf16 %v1033, %v1033
      %v1142 = vpack.c.bf16 %v1036, %v1036
      %v1143 = vpack.c.bf16 %v1038, %v1038
      %vm1144 = vcmask 257024
      %1145 = vst.msk [vmem:[%s414] sm:$0xf] %vm1144, %v1096
      %1146 = vst.msk [vmem:[%s414 + $0x4] sm:$0xf] %vm1144, %v1097
      %1147 = vst.msk [vmem:[%s414 + $0x8] sm:$0xf] %vm1144, %v1098
      %1148 = vst.msk [vmem:[%s414 + $0xc] sm:$0xf] %vm1144, %v1099
      %1149 = vst.msk [vmem:[%s414 + $0x10] sm:$0xf] %vm1144, %v1100
      %1150 = vst.msk [vmem:[%s414 + $0x14] sm:$0xf] %vm1144, %v1101
      %1151 = vst.msk [vmem:[%s414 + $0x18] sm:$0xf] %vm1144, %v1102
      %1152 = vst.msk [vmem:[%s414 + $0x1c] sm:$0xf] %vm1144, %v1103
      %1153 = vst.msk [vmem:[%s424] sm:$0xf] %vm1144, %v1128
      %1154 = vst.msk [vmem:[%s424 + $0x4] sm:$0xf] %vm1144, %v1129
      %1155 = vst.msk [vmem:[%s424 + $0x8] sm:$0xf] %vm1144, %v1130
      %1156 = vst.msk [vmem:[%s424 + $0xc] sm:$0xf] %vm1144, %v1131
      %1157 = vst.msk [vmem:[%s424 + $0x10] sm:$0xf] %vm1144, %v1132
      %1158 = vst.msk [vmem:[%s424 + $0x14] sm:$0xf] %vm1144, %v1133
      %1159 = vst.msk [vmem:[%s424 + $0x18] sm:$0xf] %vm1144, %v1134
      %1160 = vst.msk [vmem:[%s424 + $0x1c] sm:$0xf] %vm1144, %v1135
      %1161 = vst.msk [vmem:[%s434] sm:$0xf] %vm1144, %v1136
      %1162 = vst.msk [vmem:[%s434 + $0x4] sm:$0xf] %vm1144, %v1137
      %1163 = vst.msk [vmem:[%s434 + $0x8] sm:$0xf] %vm1144, %v1138
      %1164 = vst.msk [vmem:[%s434 + $0xc] sm:$0xf] %vm1144, %v1139
      %1165 = vst.msk [vmem:[%s434 + $0x10] sm:$0xf] %vm1144, %v1140
      %1166 = vst.msk [vmem:[%s434 + $0x14] sm:$0xf] %vm1144, %v1141
      %1167 = vst.msk [vmem:[%s434 + $0x18] sm:$0xf] %vm1144, %v1142
      %1168 = vst.msk [vmem:[%s434 + $0x1c] sm:$0xf] %vm1144, %v1143
      %1177 = vrot.lane.b32.xlu0 %v1096, 96
      %v1178 = vpop.permute.xlu0 %1177
      %1179 = vrot.lane.b32.xlu0 %v1097, 96
      %v1180 = vpop.permute.xlu0 %1179
      %1181 = vrot.lane.b32.xlu0 %v1098, 96
      %v1182 = vpop.permute.xlu0 %1181
      %1183 = vrot.lane.b32.xlu0 %v1099, 96
      %v1184 = vpop.permute.xlu0 %1183
      %1185 = vrot.lane.b32.xlu0 %v1100, 96
      %v1186 = vpop.permute.xlu0 %1185
      %1187 = vrot.lane.b32.xlu0 %v1101, 96
      %v1188 = vpop.permute.xlu0 %1187
      %1189 = vrot.lane.b32.xlu0 %v1102, 96
      %v1190 = vpop.permute.xlu0 %1189
      %1191 = vrot.lane.b32.xlu0 %v1103, 96
      %v1192 = vpop.permute.xlu0 %1191
      %s1201 = scalar_lea.vmem %s414, 32
      %1202 = vst.msk [vmem:[%s1201] sm:$0xf] %vm1144, %v1178
      %1203 = vst.msk [vmem:[%s1201 + $0x4] sm:$0xf] %vm1144, %v1180
      %1204 = vst.msk [vmem:[%s1201 + $0x8] sm:$0xf] %vm1144, %v1182
      %1205 = vst.msk [vmem:[%s1201 + $0xc] sm:$0xf] %vm1144, %v1184
      %1206 = vst.msk [vmem:[%s1201 + $0x10] sm:$0xf] %vm1144, %v1186
      %1207 = vst.msk [vmem:[%s1201 + $0x14] sm:$0xf] %vm1144, %v1188
      %1208 = vst.msk [vmem:[%s1201 + $0x18] sm:$0xf] %vm1144, %v1190
      %1209 = vst.msk [vmem:[%s1201 + $0x1c] sm:$0xf] %vm1144, %v1192
      %1218 = vrot.lane.b32.xlu0 %v1128, 96
      %v1219 = vpop.permute.xlu0 %1218
      %1220 = vrot.lane.b32.xlu0 %v1129, 96
      %v1221 = vpop.permute.xlu0 %1220
      %1222 = vrot.lane.b32.xlu0 %v1130, 96
      %v1223 = vpop.permute.xlu0 %1222
      %1224 = vrot.lane.b32.xlu0 %v1131, 96
      %v1225 = vpop.permute.xlu0 %1224
      %1226 = vrot.lane.b32.xlu0 %v1132, 96
      %v1227 = vpop.permute.xlu0 %1226
      %1228 = vrot.lane.b32.xlu0 %v1133, 96
      %v1229 = vpop.permute.xlu0 %1228
      %1230 = vrot.lane.b32.xlu0 %v1134, 96
      %v1231 = vpop.permute.xlu0 %1230
      %1232 = vrot.lane.b32.xlu0 %v1135, 96
      %v1233 = vpop.permute.xlu0 %1232
      %s1242 = scalar_lea.vmem %s424, 32
      %1243 = vst.msk [vmem:[%s1242] sm:$0xf] %vm1144, %v1219
      %1244 = vst.msk [vmem:[%s1242 + $0x4] sm:$0xf] %vm1144, %v1221
      %1245 = vst.msk [vmem:[%s1242 + $0x8] sm:$0xf] %vm1144, %v1223
      %1246 = vst.msk [vmem:[%s1242 + $0xc] sm:$0xf] %vm1144, %v1225
      %1247 = vst.msk [vmem:[%s1242 + $0x10] sm:$0xf] %vm1144, %v1227
      %1248 = vst.msk [vmem:[%s1242 + $0x14] sm:$0xf] %vm1144, %v1229
      %1249 = vst.msk [vmem:[%s1242 + $0x18] sm:$0xf] %vm1144, %v1231
      %1250 = vst.msk [vmem:[%s1242 + $0x1c] sm:$0xf] %vm1144, %v1233
      %1259 = vrot.lane.b32.xlu0 %v1136, 96
      %v1260 = vpop.permute.xlu0 %1259
      %1261 = vrot.lane.b32.xlu0 %v1137, 96
      %v1262 = vpop.permute.xlu0 %1261
      %1263 = vrot.lane.b32.xlu0 %v1138, 96
      %v1264 = vpop.permute.xlu0 %1263
      %1265 = vrot.lane.b32.xlu0 %v1139, 96
      %v1266 = vpop.permute.xlu0 %1265
      %1267 = vrot.lane.b32.xlu0 %v1140, 96
      %v1268 = vpop.permute.xlu0 %1267
      %1269 = vrot.lane.b32.xlu0 %v1141, 96
      %v1270 = vpop.permute.xlu0 %1269
      %1271 = vrot.lane.b32.xlu0 %v1142, 96
      %v1272 = vpop.permute.xlu0 %1271
      %1273 = vrot.lane.b32.xlu0 %v1143, 96
      %v1274 = vpop.permute.xlu0 %1273
      %s1283 = scalar_lea.vmem %s434, 32
      %1284 = vst.msk [vmem:[%s1283] sm:$0xf] %vm1144, %v1260
      %1285 = vst.msk [vmem:[%s1283 + $0x4] sm:$0xf] %vm1144, %v1262
      %1286 = vst.msk [vmem:[%s1283 + $0x8] sm:$0xf] %vm1144, %v1264
      %1287 = vst.msk [vmem:[%s1283 + $0xc] sm:$0xf] %vm1144, %v1266
      %1288 = vst.msk [vmem:[%s1283 + $0x10] sm:$0xf] %vm1144, %v1268
      %1289 = vst.msk [vmem:[%s1283 + $0x14] sm:$0xf] %vm1144, %v1270
      %1290 = vst.msk [vmem:[%s1283 + $0x18] sm:$0xf] %vm1144, %v1272
      %1291 = vst.msk [vmem:[%s1283 + $0x1c] sm:$0xf] %vm1144, %v1274
      %1292 = vrot.lane.b32.xlu0 %v1096, 64
      %v1293 = vpop.permute.xlu0 %1292
      %1294 = vrot.lane.b32.xlu0 %v1097, 64
      %v1295 = vpop.permute.xlu0 %1294
      %1296 = vrot.lane.b32.xlu0 %v1098, 64
      %v1297 = vpop.permute.xlu0 %1296
      %1298 = vrot.lane.b32.xlu0 %v1099, 64
      %v1299 = vpop.permute.xlu0 %1298
      %1300 = vrot.lane.b32.xlu0 %v1100, 64
      %v1301 = vpop.permute.xlu0 %1300
      %1302 = vrot.lane.b32.xlu0 %v1101, 64
      %v1303 = vpop.permute.xlu0 %1302
      %1304 = vrot.lane.b32.xlu0 %v1102, 64
      %v1305 = vpop.permute.xlu0 %1304
      %1306 = vrot.lane.b32.xlu0 %v1103, 64
      %v1307 = vpop.permute.xlu0 %1306
      %s1316 = scalar_lea.vmem %s414, 64
      %1317 = vst.msk [vmem:[%s1316] sm:$0xf] %vm1144, %v1293
      %1318 = vst.msk [vmem:[%s1316 + $0x4] sm:$0xf] %vm1144, %v1295
      %1319 = vst.msk [vmem:[%s1316 + $0x8] sm:$0xf] %vm1144, %v1297
      %1320 = vst.msk [vmem:[%s1316 + $0xc] sm:$0xf] %vm1144, %v1299
      %1321 = vst.msk [vmem:[%s1316 + $0x10] sm:$0xf] %vm1144, %v1301
      %1322 = vst.msk [vmem:[%s1316 + $0x14] sm:$0xf] %vm1144, %v1303
      %1323 = vst.msk [vmem:[%s1316 + $0x18] sm:$0xf] %vm1144, %v1305
      %1324 = vst.msk [vmem:[%s1316 + $0x1c] sm:$0xf] %vm1144, %v1307
      %1325 = vrot.lane.b32.xlu0 %v1128, 64
      %v1326 = vpop.permute.xlu0 %1325
      %1327 = vrot.lane.b32.xlu0 %v1129, 64
      %v1328 = vpop.permute.xlu0 %1327
      %1329 = vrot.lane.b32.xlu0 %v1130, 64
      %v1330 = vpop.permute.xlu0 %1329
      %1331 = vrot.lane.b32.xlu0 %v1131, 64
      %v1332 = vpop.permute.xlu0 %1331
      %1333 = vrot.lane.b32.xlu0 %v1132, 64
      %v1334 = vpop.permute.xlu0 %1333
      %1335 = vrot.lane.b32.xlu0 %v1133, 64
      %v1336 = vpop.permute.xlu0 %1335
      %1337 = vrot.lane.b32.xlu0 %v1134, 64
      %v1338 = vpop.permute.xlu0 %1337
      %1339 = vrot.lane.b32.xlu0 %v1135, 64
      %v1340 = vpop.permute.xlu0 %1339
      %s1349 = scalar_lea.vmem %s424, 64
      %1350 = vst.msk [vmem:[%s1349] sm:$0xf] %vm1144, %v1326
      %1351 = vst.msk [vmem:[%s1349 + $0x4] sm:$0xf] %vm1144, %v1328
      %1352 = vst.msk [vmem:[%s1349 + $0x8] sm:$0xf] %vm1144, %v1330
      %1353 = vst.msk [vmem:[%s1349 + $0xc] sm:$0xf] %vm1144, %v1332
      %1354 = vst.msk [vmem:[%s1349 + $0x10] sm:$0xf] %vm1144, %v1334
      %1355 = vst.msk [vmem:[%s1349 + $0x14] sm:$0xf] %vm1144, %v1336
      %1356 = vst.msk [vmem:[%s1349 + $0x18] sm:$0xf] %vm1144, %v1338
      %1357 = vst.msk [vmem:[%s1349 + $0x1c] sm:$0xf] %vm1144, %v1340
      %1358 = vrot.lane.b32.xlu0 %v1136, 64
      %v1359 = vpop.permute.xlu0 %1358
      %1360 = vrot.lane.b32.xlu0 %v1137, 64
      %v1361 = vpop.permute.xlu0 %1360
      %1362 = vrot.lane.b32.xlu0 %v1138, 64
      %v1363 = vpop.permute.xlu0 %1362
      %1364 = vrot.lane.b32.xlu0 %v1139, 64
      %v1365 = vpop.permute.xlu0 %1364
      %1366 = vrot.lane.b32.xlu0 %v1140, 64
      %v1367 = vpop.permute.xlu0 %1366
      %1368 = vrot.lane.b32.xlu0 %v1141, 64
      %v1369 = vpop.permute.xlu0 %1368
      %1370 = vrot.lane.b32.xlu0 %v1142, 64
      %v1371 = vpop.permute.xlu0 %1370
      %1372 = vrot.lane.b32.xlu0 %v1143, 64
      %v1373 = vpop.permute.xlu0 %1372
      %s1382 = scalar_lea.vmem %s434, 64
      %1383 = vst.msk [vmem:[%s1382] sm:$0xf] %vm1144, %v1359
      %1384 = vst.msk [vmem:[%s1382 + $0x4] sm:$0xf] %vm1144, %v1361
      %1385 = vst.msk [vmem:[%s1382 + $0x8] sm:$0xf] %vm1144, %v1363
      %1386 = vst.msk [vmem:[%s1382 + $0xc] sm:$0xf] %vm1144, %v1365
      %1387 = vst.msk [vmem:[%s1382 + $0x10] sm:$0xf] %vm1144, %v1367
      %1388 = vst.msk [vmem:[%s1382 + $0x14] sm:$0xf] %vm1144, %v1369
      %1389 = vst.msk [vmem:[%s1382 + $0x18] sm:$0xf] %vm1144, %v1371
      %1390 = vst.msk [vmem:[%s1382 + $0x1c] sm:$0xf] %vm1144, %v1373
      %1391 = vrot.lane.b32.xlu0 %v1096, 32
      %v1392 = vpop.permute.xlu0 %1391
      %1393 = vrot.lane.b32.xlu0 %v1097, 32
      %v1394 = vpop.permute.xlu0 %1393
      %1395 = vrot.lane.b32.xlu0 %v1098, 32
      %v1396 = vpop.permute.xlu0 %1395
      %1397 = vrot.lane.b32.xlu0 %v1099, 32
      %v1398 = vpop.permute.xlu0 %1397
      %1399 = vrot.lane.b32.xlu0 %v1100, 32
      %v1400 = vpop.permute.xlu0 %1399
      %1401 = vrot.lane.b32.xlu0 %v1101, 32
      %v1402 = vpop.permute.xlu0 %1401
      %1403 = vrot.lane.b32.xlu0 %v1102, 32
      %v1404 = vpop.permute.xlu0 %1403
      %1405 = vrot.lane.b32.xlu0 %v1103, 32
      %v1406 = vpop.permute.xlu0 %1405
      %s1415 = scalar_lea.vmem %s414, 96
      %1416 = vst.msk [vmem:[%s1415] sm:$0xf] %vm1144, %v1392
      %1417 = vst.msk [vmem:[%s1415 + $0x4] sm:$0xf] %vm1144, %v1394
      %1418 = vst.msk [vmem:[%s1415 + $0x8] sm:$0xf] %vm1144, %v1396
      %1419 = vst.msk [vmem:[%s1415 + $0xc] sm:$0xf] %vm1144, %v1398
      %1420 = vst.msk [vmem:[%s1415 + $0x10] sm:$0xf] %vm1144, %v1400
      %1421 = vst.msk [vmem:[%s1415 + $0x14] sm:$0xf] %vm1144, %v1402
      %1422 = vst.msk [vmem:[%s1415 + $0x18] sm:$0xf] %vm1144, %v1404
      %1423 = vst.msk [vmem:[%s1415 + $0x1c] sm:$0xf] %vm1144, %v1406
      %1424 = vrot.lane.b32.xlu0 %v1128, 32
      %v1425 = vpop.permute.xlu0 %1424
      %1426 = vrot.lane.b32.xlu0 %v1129, 32
      %v1427 = vpop.permute.xlu0 %1426
      %1428 = vrot.lane.b32.xlu0 %v1130, 32
      %v1429 = vpop.permute.xlu0 %1428
      %1430 = vrot.lane.b32.xlu0 %v1131, 32
      %v1431 = vpop.permute.xlu0 %1430
      %1432 = vrot.lane.b32.xlu0 %v1132, 32
      %v1433 = vpop.permute.xlu0 %1432
      %1434 = vrot.lane.b32.xlu0 %v1133, 32
      %v1435 = vpop.permute.xlu0 %1434
      %1436 = vrot.lane.b32.xlu0 %v1134, 32
      %v1437 = vpop.permute.xlu0 %1436
      %1438 = vrot.lane.b32.xlu0 %v1135, 32
      %v1439 = vpop.permute.xlu0 %1438
      %s1448 = scalar_lea.vmem %s424, 96
      %1449 = vst.msk [vmem:[%s1448] sm:$0xf] %vm1144, %v1425
      %1450 = vst.msk [vmem:[%s1448 + $0x4] sm:$0xf] %vm1144, %v1427
      %1451 = vst.msk [vmem:[%s1448 + $0x8] sm:$0xf] %vm1144, %v1429
      %1452 = vst.msk [vmem:[%s1448 + $0xc] sm:$0xf] %vm1144, %v1431
      %1453 = vst.msk [vmem:[%s1448 + $0x10] sm:$0xf] %vm1144, %v1433
      %1454 = vst.msk [vmem:[%s1448 + $0x14] sm:$0xf] %vm1144, %v1435
      %1455 = vst.msk [vmem:[%s1448 + $0x18] sm:$0xf] %vm1144, %v1437
      %1456 = vst.msk [vmem:[%s1448 + $0x1c] sm:$0xf] %vm1144, %v1439
      %1457 = vrot.lane.b32.xlu0 %v1136, 32
      %v1458 = vpop.permute.xlu0 %1457
      %1459 = vrot.lane.b32.xlu0 %v1137, 32
      %v1460 = vpop.permute.xlu0 %1459
      %1461 = vrot.lane.b32.xlu0 %v1138, 32
      %v1462 = vpop.permute.xlu0 %1461
      %1463 = vrot.lane.b32.xlu0 %v1139, 32
      %v1464 = vpop.permute.xlu0 %1463
      %1465 = vrot.lane.b32.xlu0 %v1140, 32
      %v1466 = vpop.permute.xlu0 %1465
      %1467 = vrot.lane.b32.xlu0 %v1141, 32
      %v1468 = vpop.permute.xlu0 %1467
      %1469 = vrot.lane.b32.xlu0 %v1142, 32
      %v1470 = vpop.permute.xlu0 %1469
      %1471 = vrot.lane.b32.xlu0 %v1143, 32
      %v1472 = vpop.permute.xlu0 %1471
      %s1481 = scalar_lea.vmem %s434, 96
      %1482 = vst.msk [vmem:[%s1481] sm:$0xf] %vm1144, %v1458
      %1483 = vst.msk [vmem:[%s1481 + $0x4] sm:$0xf] %vm1144, %v1460
      %1484 = vst.msk [vmem:[%s1481 + $0x8] sm:$0xf] %vm1144, %v1462
      %1485 = vst.msk [vmem:[%s1481 + $0xc] sm:$0xf] %vm1144, %v1464
      %1486 = vst.msk [vmem:[%s1481 + $0x10] sm:$0xf] %vm1144, %v1466
      %1487 = vst.msk [vmem:[%s1481 + $0x14] sm:$0xf] %vm1144, %v1468
      %1488 = vst.msk [vmem:[%s1481 + $0x18] sm:$0xf] %vm1144, %v1470
      %1489 = vst.msk [vmem:[%s1481 + $0x1c] sm:$0xf] %vm1144, %v1472
      %s1490 = smul.u32 8, %s25
      %p1491 = scmp.lt.s32.totalorder %s24, 1
      %s1492 = scalar_select %p1491, %s24, 1
      %p1493 = scmp.lt.s32.totalorder %s1490, 7
      %s1494 = scalar_select %p1493, %s1490, 7
      %s1495 = smul.addr %s1492, 32
      %s1496 = sadd.s32 %s1494, %s1495
      %s1497 = smul.addr %s1496, 4
      %s1498 = scalar_lea.vmem %s6, %s1497
      %s1499 = smul.u32 8, %s25
      %p1500 = scmp.lt.s32.totalorder %s24, 1
      %s1501 = scalar_select %p1500, %s24, 1
      %p1502 = scmp.lt.s32.totalorder %s1499, 7
      %s1503 = scalar_select %p1502, %s1499, 7
      %s1504 = smul.addr %s1501, 32
      %s1505 = sadd.s32 %s1503, %s1504
      %s1506 = smul.addr %s1505, 4
      %s1507 = scalar_lea.vmem %s7, %s1506
      %s1508 = smul.u32 8, %s25
      %p1509 = scmp.lt.s32.totalorder %s24, 1
      %s1510 = scalar_select %p1509, %s24, 1
      %p1511 = scmp.lt.s32.totalorder %s1508, 7
      %s1512 = scalar_select %p1511, %s1508, 7
      %s1513 = smul.addr %s1510, 32
      %s1514 = sadd.s32 %s1512, %s1513
      %s1515 = smul.addr %s1514, 4
      %s1516 = scalar_lea.vmem %s8, %s1515
      // Predicated region
      $region45: #{self_attention_forward.2} parent=43 // pred_check
        %p1517 = pneg %p195
      $region46: #{self_attention_forward.2} parent=43 // pred_check_branch
        %1519 = sbr.rel (%p1517) target = $region48
      $region47: #{self_attention_forward.2} parent=43 // pred_region
        %s1520 = smul.u32 8, %s25
      $region48: #{self_attention_forward.2} parent=43 // pred_fallthru
        _
      // Predicated region
      $region49: #{self_attention_forward.2} parent=43 // pred_check
        %p1521 = pneg %p223
      $region50: #{self_attention_forward.2} parent=43 // pred_check_branch
        %1523 = sbr.rel (%p1521) target = $region52
      $region51: #{self_attention_forward.2} parent=43 // pred_region
        %s1524 = smul.u32 8, %s25
      $region52: #{self_attention_forward.2} parent=43 // pred_fallthru
        _
      // Predicated region
      $region53: #{self_attention_forward.2} parent=43 // pred_check
        %p1525 = pneg %p251
      $region54: #{self_attention_forward.2} parent=43 // pred_check_branch
        %1527 = sbr.rel (%p1525) target = $region56
      $region55: #{self_attention_forward.2} parent=43 // pred_region
        %s1528 = smul.u32 8, %s25
      $region56: #{self_attention_forward.2} parent=43 // pred_fallthru
        _
    $region44: #{self_attention_forward.2} parent=5 // pred_fallthru
      _
    %p1529 = scmp.le.s32.totalorder 2, %s15
    // Predicated region
    $region57: #{self_attention_forward.2} parent=5 // pred_check
      %p1530 = pneg %p1529
    $region58: #{self_attention_forward.2} parent=5 // pred_check_branch
      %1532 = sbr.rel (%p1530) target = $region60
    $region59: #{self_attention_forward.2} parent=5 // pred_region
      %s1533 = ssub.s32 %s15, 2
      // Predicated region
      $region61: #{self_attention_forward.2} parent=59 // pred_check
        %p1534 = pneg %p201
      $region62: #{self_attention_forward.2} parent=59 // pred_check_branch
        %1536 = sbr.rel (%p1534) target = $region64
      $region63: #{self_attention_forward.2} parent=59 // pred_region
        %s1537 = smul.u32 8, %s27
        %p1538 = scmp.lt.s32.totalorder %s26, 1
        %s1539 = scalar_select %p1538, %s26, 1
        %p1540 = scmp.lt.s32.totalorder %s1537, 7
        %s1541 = scalar_select %p1540, %s1537, 7
        %s1542 = smul.addr %s1539, 32
        %s1543 = sadd.s32 %s1541, %s1542
        %s1544 = smul.addr %s1543, 4
        %s1545 = scalar_lea.vmem %s6, %s1544
      $region64: #{self_attention_forward.2} parent=59 // pred_fallthru
        _
      // Predicated region
      $region65: #{self_attention_forward.2} parent=59 // pred_check
        %p1546 = pneg %p229
      $region66: #{self_attention_forward.2} parent=59 // pred_check_branch
        %1548 = sbr.rel (%p1546) target = $region68
      $region67: #{self_attention_forward.2} parent=59 // pred_region
        %s1549 = smul.u32 8, %s27
        %p1550 = scmp.lt.s32.totalorder %s26, 1
        %s1551 = scalar_select %p1550, %s26, 1
        %p1552 = scmp.lt.s32.totalorder %s1549, 7
        %s1553 = scalar_select %p1552, %s1549, 7
        %s1554 = smul.addr %s1551, 32
        %s1555 = sadd.s32 %s1553, %s1554
        %s1556 = smul.addr %s1555, 4
        %s1557 = scalar_lea.vmem %s7, %s1556
      $region68: #{self_attention_forward.2} parent=59 // pred_fallthru
        _
      // Predicated region
      $region69: #{self_attention_forward.2} parent=59 // pred_check
        %p1558 = pneg %p257
      $region70: #{self_attention_forward.2} parent=59 // pred_check_branch
        %1560 = sbr.rel (%p1558) target = $region72
      $region71: #{self_attention_forward.2} parent=59 // pred_region
        %s1561 = smul.u32 8, %s27
        %p1562 = scmp.lt.s32.totalorder %s26, 1
        %s1563 = scalar_select %p1562, %s26, 1
        %p1564 = scmp.lt.s32.totalorder %s1561, 7
        %s1565 = scalar_select %p1564, %s1561, 7
        %s1566 = smul.addr %s1563, 32
        %s1567 = sadd.s32 %s1565, %s1566
        %s1568 = smul.addr %s1567, 4
        %s1569 = scalar_lea.vmem %s8, %s1568
      $region72: #{self_attention_forward.2} parent=59 // pred_fallthru
        _
    $region60: #{self_attention_forward.2} parent=5 // pred_fallthru
      _
  $region6: #{self_attention_forward.2} parent=0 // loop_footer
    %s19 = sadd.s32 1, %s15
  $region7: #{self_attention_forward.2} parent=0 // loop_footer_branch
    %14 = sbr.rel target = $region3
  $region8: #{self_attention_forward.2} parent=0 // loop_exit
    _

</llo_original>
